<compile_context>
chip_gen: v7x
topology: tpu7x:2x2x1
jax: 0.10.0
libtpu: 0.0.40
codegen_flags: <defaults>
</compile_context>

<pallas_src>
import functools

import jax
import jax.numpy as jnp
from jax.experimental import pallas as pl
from jax.experimental.pallas import tpu as pltpu


# ---------------------------------------------------------------------------
# Helpers
# ---------------------------------------------------------------------------
def _round_up(x, m):
    return ((x + m - 1) // m) * m


def _batch_blocking(batch):
    """Pad batch to sublane multiple; split into <=2 blocks (v7x megacore)."""
    b_pad = _round_up(max(batch, 1), 8)
    if b_pad <= 8:
        return b_pad, b_pad, 1          # (B_pad, B_blk, n_blocks)
    blk = _round_up((b_pad + 1) // 2, 8)
    return 2 * blk, blk, 2


def _pad_gate_matrix(w_t, rows_pad, hidden, hidden_pad, dtype):
    """(rows, 4H) -> (rows_pad, 4*Hp); each gate gets its own lane-aligned block.

    Padded rows/columns are zero, so padded hidden lanes stay exactly zero
    through the recurrence and never pollute the real lanes.
    """
    rows = w_t.shape[0]
    out = jnp.zeros((rows_pad, 4 * hidden_pad), jnp.float32)
    for g in range(4):
        out = out.at[:rows, g * hidden_pad:g * hidden_pad + hidden].set(
            w_t[:, g * hidden:(g + 1) * hidden].astype(jnp.float32))
    return out.astype(dtype)


def _pad_gate_bias(b, hidden, hidden_pad):
    out = jnp.zeros((1, 4 * hidden_pad), jnp.float32)
    for g in range(4):
        out = out.at[0, g * hidden_pad:g * hidden_pad + hidden].set(
            b[g * hidden:(g + 1) * hidden].astype(jnp.float32))
    return out


# ---------------------------------------------------------------------------
# Fused Pallas kernel: all LSTM layers + fc, one batch block per grid step
# ---------------------------------------------------------------------------
def _fused_lstm_fc_kernel(*refs, num_layers, hidden_pad, compute_dtype):
    """refs = [x, (w_ih, w_hh, b) * num_layers, w_fc, b_fc, out].

    x_ref   : (B_blk, T, D0_pad)   compute_dtype
    w_ih    : (D_pad, 4*Hp)        compute_dtype  (pre-transposed, gate-padded)
    w_hh    : (Hp, 4*Hp)           compute_dtype
    b       : (1, 4*Hp)            float32        (b_ih + b_hh, gate-padded)
    w_fc    : (Hp, 1) f32, b_fc : (1, 1) f32
    out_ref : (B_blk, 1) f32
    """
    x_ref = refs[0]
    w_fc_ref = refs[-3]
    b_fc_ref = refs[-2]
    out_ref = refs[-1]

    b_blk, seq_len, d0 = x_ref.shape
    hp = hidden_pad
    cdt = compute_dtype

    # Current layer input sequence as one big 2-D matrix (rows = (b, t) pairs).
    seq = x_ref[...].reshape(b_blk * seq_len, d0).astype(cdt)
    time_major = False
    h = jnp.zeros((b_blk, hp), jnp.float32)

    for layer in range(num_layers):
        w_ih = refs[1 + 3 * layer][...]
        w_hh = refs[2 + 3 * layer][...]
        bias = refs[3 + 3 * layer][...]                      # (1, 4Hp) f32

        # Hoisted input projection: ONE MXU-friendly matmul for all timesteps.
        gx = jnp.dot(seq, w_ih, preferred_element_type=jnp.float32) + bias
        if time_major:
            gx = gx.reshape(seq_len, b_blk, 4 * hp)          # rows were (t, b)
        else:
            gx = gx.reshape(b_blk, seq_len, 4 * hp)          # rows were (b, t)

        h = jnp.zeros((b_blk, hp), jnp.float32)
        c = jnp.zeros((b_blk, hp), jnp.float32)
        hs = []
        for t in range(seq_len):                             # static unroll (T small)
            g_x = gx[t] if time_major else gx[:, t, :]       # (B_blk, 4Hp) f32
            gates = g_x + jnp.dot(h.astype(cdt), w_hh,
                                  preferred_element_type=jnp.float32)
            i_g = jax.nn.sigmoid(gates[:, 0 * hp:1 * hp])
            f_g = jax.nn.sigmoid(gates[:, 1 * hp:2 * hp])
            g_g = jnp.tanh(gates[:, 2 * hp:3 * hp])
            o_g = jax.nn.sigmoid(gates[:, 3 * hp:4 * hp])
            c = f_g * c + i_g * g_g
            h = o_g * jnp.tanh(c)
            if layer < num_layers - 1:
                hs.append(h)

        if layer < num_layers - 1:
            # Full hidden sequence stays in VMEM/vregs for the next layer.
            seq = jnp.stack(hs, axis=0).reshape(seq_len * b_blk, hp).astype(cdt)
            time_major = True

    # Final Linear(hidden, 1) on the last-timestep hidden state (f32).
    out = jnp.dot(h, w_fc_ref[...], preferred_element_type=jnp.float32) + b_fc_ref[...]
    out_ref[...] = out.astype(out_ref.dtype)


# ---------------------------------------------------------------------------
# Parameter packing (done ONCE, outside the forward path)
# ---------------------------------------------------------------------------
def pack_params(params, input_size, hidden_size, compute_dtype=jnp.bfloat16):
    hidden_pad = _round_up(hidden_size, 128)
    packed = {"layers": [], "hidden": hidden_size, "hidden_pad": hidden_pad,
              "compute_dtype": compute_dtype}
    for idx, layer in enumerate(params["lstm"]):
        d_in = input_size if idx == 0 else hidden_size
        d_pad = _round_up(d_in, 128) if idx == 0 else hidden_pad
        w_ih = _pad_gate_matrix(layer["w_ih"].T, d_pad, hidden_size, hidden_pad,
                                compute_dtype)
        w_hh = _pad_gate_matrix(layer["w_hh"].T, hidden_pad, hidden_size,
                                hidden_pad, compute_dtype)
        bias = _pad_gate_bias(layer["b_ih"] + layer["b_hh"], hidden_size,
                              hidden_pad)
        packed["layers"].append((w_ih, w_hh, bias))
    w_fc = jnp.zeros((hidden_pad, 1), jnp.float32).at[:hidden_size, :].set(
        params["fc_w"].T.astype(jnp.float32))
    b_fc = params["fc_b"].reshape(1, 1).astype(jnp.float32)
    packed["fc"] = (w_fc, b_fc)
    packed["d0_pad"] = packed["layers"][0][0].shape[0]
    return packed


# ---------------------------------------------------------------------------
# Forward pass wrapper
# ---------------------------------------------------------------------------
def lstm_forward(x_btd, packed):
    """x_btd: (B, T, input_size), batch_first. Returns (B, 1) float32."""
    batch, seq_len, d_in = x_btd.shape
    hidden_pad = packed["hidden_pad"]
    cdt = packed["compute_dtype"]
    d0_pad = packed["d0_pad"]
    b_pad, b_blk, n_blocks = _batch_blocking(batch)

    # Pad batch (sublanes) and input features (lanes); padded entries are zero.
    x_pad = jnp.zeros((b_pad, seq_len, d0_pad), cdt)
    x_pad = x_pad.at[:batch, :, :d_in].set(x_btd.astype(cdt))

    inputs = [x_pad]
    in_specs = [pl.BlockSpec((b_blk, seq_len, d0_pad), lambda b: (b, 0, 0))]
    for (w_ih, w_hh, bias) in packed["layers"]:
        inputs += [w_ih, w_hh, bias]
        in_specs += [
            pl.BlockSpec(w_ih.shape, lambda b: (0, 0)),
            pl.BlockSpec(w_hh.shape, lambda b: (0, 0)),
            pl.BlockSpec(bias.shape, lambda b: (0, 0)),
        ]
    w_fc, b_fc = packed["fc"]
    inputs += [w_fc, b_fc]
    in_specs += [pl.BlockSpec(w_fc.shape, lambda b: (0, 0)),
                 pl.BlockSpec(b_fc.shape, lambda b: (0, 0))]

    kernel = functools.partial(
        _fused_lstm_fc_kernel,
        num_layers=len(packed["layers"]),
        hidden_pad=hidden_pad,
        compute_dtype=cdt,
    )

    out = pl.pallas_call(
        kernel,
        out_shape=jax.ShapeDtypeStruct((b_pad, 1), jnp.float32),
        grid=(n_blocks,),
        in_specs=in_specs,
        out_specs=pl.BlockSpec((b_blk, 1), lambda b: (b, 0)),
        compiler_params=pltpu.CompilerParams(
            dimension_semantics=("parallel",),          # batch blocks -> 2 TCs on v7x
            vmem_limit_bytes=32 * 1024 * 1024,
        ),
    )(*inputs)
    return out[:batch]


# ---------------------------------------------------------------------------
# Deterministic parameter init (PyTorch nn.LSTM / nn.Linear default scheme)
# ---------------------------------------------------------------------------
def init_params(key, input_size, hidden_size, num_layers):
    params = {"lstm": []}
    bound = 1.0 / jnp.sqrt(hidden_size)
    for layer in range(num_layers):
        d_in = input_size if layer == 0 else hidden_size
        key, k1, k2, k3, k4 = jax.random.split(key, 5)
        params["lstm"].append({
            "w_ih": jax.random.uniform(k1, (4 * hidden_size, d_in),
                                       jnp.float32, -bound, bound),
            "w_hh": jax.random.uniform(k2, (4 * hidden_size, hidden_size),
                                       jnp.float32, -bound, bound),
            "b_ih": jax.random.uniform(k3, (4 * hidden_size,),
                                       jnp.float32, -bound, bound),
            "b_hh": jax.random.uniform(k4, (4 * hidden_size,),
                                       jnp.float32, -bound, bound),
        })
    key, k5, k6 = jax.random.split(key, 3)
    params["fc_w"] = jax.random.uniform(k5, (1, hidden_size),
                                        jnp.float32, -bound, bound)
    params["fc_b"] = jax.random.uniform(k6, (1,),
                                        jnp.float32, -bound, bound)
    return params


# ---------------------------------------------------------------------------
# Pure-JAX reference (same math; compute_dtype controls the matmul-operand cast)
# ---------------------------------------------------------------------------
def lstm_forward_ref(x_btd, params, compute_dtype=jnp.float32):
    x = x_btd
    batch = x.shape[0]
    for layer in params["lstm"]:
        hidden = layer["w_hh"].shape[1]
        wih_t = layer["w_ih"].T.astype(compute_dtype)
        whh_t = layer["w_hh"].T.astype(compute_dtype)
        bias = (layer["b_ih"] + layer["b_hh"]).astype(jnp.float32)

        def step(carry, x_t, wih_t=wih_t, whh_t=whh_t, bias=bias):
            h, c = carry
            gates = (jnp.dot(x_t.astype(compute_dtype), wih_t,
                             preferred_element_type=jnp.float32)
                     + jnp.dot(h.astype(compute_dtype), whh_t,
                               preferred_element_type=jnp.float32)
                     + bias)
            i, f, g, o = jnp.split(gates, 4, axis=-1)
            c = jax.nn.sigmoid(f) * c + jax.nn.sigmoid(i) * jnp.tanh(g)
            h = jax.nn.sigmoid(o) * jnp.tanh(c)
            return (h, c), h

        h0 = jnp.zeros((batch, hidden), jnp.float32)
        c0 = jnp.zeros((batch, hidden), jnp.float32)
        _, hs = jax.lax.scan(step, (h0, c0), jnp.transpose(x, (1, 0, 2)))
        x = jnp.transpose(hs, (1, 0, 2))
    return x[:, -1, :] @ params["fc_w"].T + params["fc_b"]


# ---------------------------------------------------------------------------
if __name__ == "__main__":
    B, T, INPUT_SIZE, HIDDEN, LAYERS = 2, 8, 4, 32, 2

    key = jax.random.PRNGKey(0)
    key, kx = jax.random.split(key)
    x = jax.random.normal(kx, (B, T, INPUT_SIZE), jnp.float32)
    params = init_params(key, INPUT_SIZE, HIDDEN, LAYERS)

    packed = pack_params(params, INPUT_SIZE, HIDDEN, compute_dtype=jnp.bfloat16)

    out = jax.block_until_ready(lstm_forward(x, packed))
    assert out.shape == (B, 1), out.shape

    # Tight check vs. a reference with matching bf16 matmul operands.
    ref_bf16 = jax.block_until_ready(
        lstm_forward_ref(x, params, compute_dtype=jnp.bfloat16))
    assert jnp.allclose(out, ref_bf16, atol=2e-3, rtol=2e-3), (out, ref_bf16)

    # Loose check vs. the full-f32 PyTorch-equivalent reference (bf16 drift only).
    ref_f32 = jax.block_until_ready(
        lstm_forward_ref(x, params, compute_dtype=jnp.float32))
    assert jnp.allclose(out, ref_f32, atol=3e-2, rtol=3e-2), (out, ref_f32)

    print("KERNEL_OK")
</pallas_src>

<mosaic_0001>
module attributes {stable_mosaic.version = 11 : i64} {
  func.func @_fused_lstm_fc_kernel(%arg0: i32, %arg1: memref<8x8x128xbf16, #tpu.memory_space<vmem>>, %arg2: memref<128x512xbf16, #tpu.memory_space<vmem>>, %arg3: memref<128x512xbf16, #tpu.memory_space<vmem>>, %arg4: memref<1x512xf32, #tpu.memory_space<vmem>>, %arg5: memref<128x512xbf16, #tpu.memory_space<vmem>>, %arg6: memref<128x512xbf16, #tpu.memory_space<vmem>>, %arg7: memref<1x512xf32, #tpu.memory_space<vmem>>, %arg8: memref<128x1xf32, #tpu.memory_space<vmem>>, %arg9: memref<1x1xf32, #tpu.memory_space<vmem>>, %arg10: memref<8x1xf32, #tpu.memory_space<vmem>>) attributes {dimension_semantics = [#tpu.dimension_semantics<parallel>], iteration_bounds = array<i64: 1>, scalar_prefetch = 0 : i64, scratch_operands = 0 : i64, tpu.core_type = #tpu.core_type<tc>, window_params = [{transform_indices = @transform_0, window_bounds = array<i64: 8, 8, 128>}, {pipeline_mode = #tpu.pipeline_mode<synchronous>, transform_indices = @transform_1, window_bounds = array<i64: 128, 512>}, {pipeline_mode = #tpu.pipeline_mode<synchronous>, transform_indices = @transform_2, window_bounds = array<i64: 128, 512>}, {pipeline_mode = #tpu.pipeline_mode<synchronous>, transform_indices = @transform_3, window_bounds = array<i64: 1, 512>}, {pipeline_mode = #tpu.pipeline_mode<synchronous>, transform_indices = @transform_4, window_bounds = array<i64: 128, 512>}, {pipeline_mode = #tpu.pipeline_mode<synchronous>, transform_indices = @transform_5, window_bounds = array<i64: 128, 512>}, {pipeline_mode = #tpu.pipeline_mode<synchronous>, transform_indices = @transform_6, window_bounds = array<i64: 1, 512>}, {pipeline_mode = #tpu.pipeline_mode<synchronous>, transform_indices = @transform_7, window_bounds = array<i64: 128, 1>}, {pipeline_mode = #tpu.pipeline_mode<synchronous>, transform_indices = @transform_8, window_bounds = array<i64: 1, 1>}, {transform_indices = @transform_9, window_bounds = array<i64: 8, 1>}]} {
    %c0 = arith.constant 0 : index
    %c0_0 = arith.constant 0 : index
    %c0_1 = arith.constant 0 : index
    %0 = vector.load %arg1[%c0, %c0_0, %c0_1] : memref<8x8x128xbf16, #tpu.memory_space<vmem>>, vector<8x8x128xbf16>
    %1 = vector.shape_cast %0 : vector<8x8x128xbf16> to vector<64x128xbf16>
    %c0_2 = arith.constant 0 : index
    %c0_3 = arith.constant 0 : index
    %2 = vector.load %arg2[%c0_2, %c0_3] : memref<128x512xbf16, #tpu.memory_space<vmem>>, vector<128x512xbf16>
    %c0_4 = arith.constant 0 : index
    %c0_5 = arith.constant 0 : index
    %3 = vector.load %arg3[%c0_4, %c0_5] : memref<128x512xbf16, #tpu.memory_space<vmem>>, vector<128x512xbf16>
    %c0_6 = arith.constant 0 : index
    %c0_7 = arith.constant 0 : index
    %4 = vector.load %arg4[%c0_6, %c0_7] : memref<1x512xf32, #tpu.memory_space<vmem>>, vector<1x512xf32>
    %cst = arith.constant dense<0.000000e+00> : vector<64x512xf32>
    %5 = tpu.matmul %1, %2, %cst {dimension_numbers = #tpu.dot_dimension_numbers<[1], [0], [0], [1], [0, 0, 1, 1], [], []>} : vector<64x128xbf16>, vector<128x512xbf16>, vector<64x512xf32> -> vector<64x512xf32>
    %6 = vector.broadcast %4 : vector<1x512xf32> to vector<64x512xf32>
    %7 = arith.addf %5, %6 : vector<64x512xf32>
    %8 = vector.shape_cast %7 : vector<64x512xf32> to vector<8x8x512xf32>
    %cst_8 = arith.constant 0.000000e+00 : f32
    %9 = vector.broadcast %cst_8 : f32 to vector<8x128xf32>
    %cst_9 = arith.constant 0.000000e+00 : f32
    %10 = vector.broadcast %cst_9 : f32 to vector<8x128xf32>
    %11 = vector.extract_strided_slice %8 {offsets = [0, 0, 0], sizes = [8, 1, 512], strides = [1, 1, 1]} : vector<8x8x512xf32> to vector<8x1x512xf32>
    %12 = vector.shape_cast %11 : vector<8x1x512xf32> to vector<8x512xf32>
    %13 = arith.truncf %9 : vector<8x128xf32> to vector<8x128xbf16>
    %cst_10 = arith.constant dense<0.000000e+00> : vector<8x512xf32>
    %14 = tpu.matmul %13, %3, %cst_10 {dimension_numbers = #tpu.dot_dimension_numbers<[1], [0], [0], [1], [0, 0, 1, 1], [], []>} : vector<8x128xbf16>, vector<128x512xbf16>, vector<8x512xf32> -> vector<8x512xf32>
    %15 = arith.addf %12, %14 : vector<8x512xf32>
    %16 = vector.extract_strided_slice %15 {offsets = [0, 0], sizes = [8, 128], strides = [1, 1]} : vector<8x512xf32> to vector<8x128xf32>
    %17 = arith.negf %16 : vector<8x128xf32>
    %18 = math.exp %17 : vector<8x128xf32>
    %cst_11 = arith.constant 1.000000e+00 : f32
    %19 = vector.broadcast %cst_11 : f32 to vector<8x128xf32>
    %20 = arith.addf %19, %18 : vector<8x128xf32>
    %21 = arith.divf %19, %20 : vector<8x128xf32>
    %22 = vector.extract_strided_slice %15 {offsets = [0, 128], sizes = [8, 128], strides = [1, 1]} : vector<8x512xf32> to vector<8x128xf32>
    %23 = arith.negf %22 : vector<8x128xf32>
    %24 = math.exp %23 : vector<8x128xf32>
    %cst_12 = arith.constant 1.000000e+00 : f32
    %25 = vector.broadcast %cst_12 : f32 to vector<8x128xf32>
    %26 = arith.addf %25, %24 : vector<8x128xf32>
    %27 = arith.divf %25, %26 : vector<8x128xf32>
    %28 = vector.extract_strided_slice %15 {offsets = [0, 256], sizes = [8, 128], strides = [1, 1]} : vector<8x512xf32> to vector<8x128xf32>
    %29 = math.tanh %28 : vector<8x128xf32>
    %30 = vector.extract_strided_slice %15 {offsets = [0, 384], sizes = [8, 128], strides = [1, 1]} : vector<8x512xf32> to vector<8x128xf32>
    %31 = arith.negf %30 : vector<8x128xf32>
    %32 = math.exp %31 : vector<8x128xf32>
    %cst_13 = arith.constant 1.000000e+00 : f32
    %33 = vector.broadcast %cst_13 : f32 to vector<8x128xf32>
    %34 = arith.addf %33, %32 : vector<8x128xf32>
    %35 = arith.divf %33, %34 : vector<8x128xf32>
    %36 = arith.mulf %27, %10 : vector<8x128xf32>
    %37 = arith.mulf %21, %29 : vector<8x128xf32>
    %38 = arith.addf %36, %37 : vector<8x128xf32>
    %39 = math.tanh %38 : vector<8x128xf32>
    %40 = arith.mulf %35, %39 : vector<8x128xf32>
    %41 = vector.extract_strided_slice %8 {offsets = [0, 1, 0], sizes = [8, 1, 512], strides = [1, 1, 1]} : vector<8x8x512xf32> to vector<8x1x512xf32>
    %42 = vector.shape_cast %41 : vector<8x1x512xf32> to vector<8x512xf32>
    %43 = arith.truncf %40 : vector<8x128xf32> to vector<8x128xbf16>
    %cst_14 = arith.constant dense<0.000000e+00> : vector<8x512xf32>
    %44 = tpu.matmul %43, %3, %cst_14 {dimension_numbers = #tpu.dot_dimension_numbers<[1], [0], [0], [1], [0, 0, 1, 1], [], []>} : vector<8x128xbf16>, vector<128x512xbf16>, vector<8x512xf32> -> vector<8x512xf32>
    %45 = arith.addf %42, %44 : vector<8x512xf32>
    %46 = vector.extract_strided_slice %45 {offsets = [0, 0], sizes = [8, 128], strides = [1, 1]} : vector<8x512xf32> to vector<8x128xf32>
    %47 = arith.negf %46 : vector<8x128xf32>
    %48 = math.exp %47 : vector<8x128xf32>
    %cst_15 = arith.constant 1.000000e+00 : f32
    %49 = vector.broadcast %cst_15 : f32 to vector<8x128xf32>
    %50 = arith.addf %49, %48 : vector<8x128xf32>
    %51 = arith.divf %49, %50 : vector<8x128xf32>
    %52 = vector.extract_strided_slice %45 {offsets = [0, 128], sizes = [8, 128], strides = [1, 1]} : vector<8x512xf32> to vector<8x128xf32>
    %53 = arith.negf %52 : vector<8x128xf32>
    %54 = math.exp %53 : vector<8x128xf32>
    %cst_16 = arith.constant 1.000000e+00 : f32
    %55 = vector.broadcast %cst_16 : f32 to vector<8x128xf32>
    %56 = arith.addf %55, %54 : vector<8x128xf32>
    %57 = arith.divf %55, %56 : vector<8x128xf32>
    %58 = vector.extract_strided_slice %45 {offsets = [0, 256], sizes = [8, 128], strides = [1, 1]} : vector<8x512xf32> to vector<8x128xf32>
    %59 = math.tanh %58 : vector<8x128xf32>
    %60 = vector.extract_strided_slice %45 {offsets = [0, 384], sizes = [8, 128], strides = [1, 1]} : vector<8x512xf32> to vector<8x128xf32>
    %61 = arith.negf %60 : vector<8x128xf32>
    %62 = math.exp %61 : vector<8x128xf32>
    %cst_17 = arith.constant 1.000000e+00 : f32
    %63 = vector.broadcast %cst_17 : f32 to vector<8x128xf32>
    %64 = arith.addf %63, %62 : vector<8x128xf32>
    %65 = arith.divf %63, %64 : vector<8x128xf32>
    %66 = arith.mulf %57, %38 : vector<8x128xf32>
    %67 = arith.mulf %51, %59 : vector<8x128xf32>
    %68 = arith.addf %66, %67 : vector<8x128xf32>
    %69 = math.tanh %68 : vector<8x128xf32>
    %70 = arith.mulf %65, %69 : vector<8x128xf32>
    %71 = vector.extract_strided_slice %8 {offsets = [0, 2, 0], sizes = [8, 1, 512], strides = [1, 1, 1]} : vector<8x8x512xf32> to vector<8x1x512xf32>
    %72 = vector.shape_cast %71 : vector<8x1x512xf32> to vector<8x512xf32>
    %73 = arith.truncf %70 : vector<8x128xf32> to vector<8x128xbf16>
    %cst_18 = arith.constant dense<0.000000e+00> : vector<8x512xf32>
    %74 = tpu.matmul %73, %3, %cst_18 {dimension_numbers = #tpu.dot_dimension_numbers<[1], [0], [0], [1], [0, 0, 1, 1], [], []>} : vector<8x128xbf16>, vector<128x512xbf16>, vector<8x512xf32> -> vector<8x512xf32>
    %75 = arith.addf %72, %74 : vector<8x512xf32>
    %76 = vector.extract_strided_slice %75 {offsets = [0, 0], sizes = [8, 128], strides = [1, 1]} : vector<8x512xf32> to vector<8x128xf32>
    %77 = arith.negf %76 : vector<8x128xf32>
    %78 = math.exp %77 : vector<8x128xf32>
    %cst_19 = arith.constant 1.000000e+00 : f32
    %79 = vector.broadcast %cst_19 : f32 to vector<8x128xf32>
    %80 = arith.addf %79, %78 : vector<8x128xf32>
    %81 = arith.divf %79, %80 : vector<8x128xf32>
    %82 = vector.extract_strided_slice %75 {offsets = [0, 128], sizes = [8, 128], strides = [1, 1]} : vector<8x512xf32> to vector<8x128xf32>
    %83 = arith.negf %82 : vector<8x128xf32>
    %84 = math.exp %83 : vector<8x128xf32>
    %cst_20 = arith.constant 1.000000e+00 : f32
    %85 = vector.broadcast %cst_20 : f32 to vector<8x128xf32>
    %86 = arith.addf %85, %84 : vector<8x128xf32>
    %87 = arith.divf %85, %86 : vector<8x128xf32>
    %88 = vector.extract_strided_slice %75 {offsets = [0, 256], sizes = [8, 128], strides = [1, 1]} : vector<8x512xf32> to vector<8x128xf32>
    %89 = math.tanh %88 : vector<8x128xf32>
    %90 = vector.extract_strided_slice %75 {offsets = [0, 384], sizes = [8, 128], strides = [1, 1]} : vector<8x512xf32> to vector<8x128xf32>
    %91 = arith.negf %90 : vector<8x128xf32>
    %92 = math.exp %91 : vector<8x128xf32>
    %cst_21 = arith.constant 1.000000e+00 : f32
    %93 = vector.broadcast %cst_21 : f32 to vector<8x128xf32>
    %94 = arith.addf %93, %92 : vector<8x128xf32>
    %95 = arith.divf %93, %94 : vector<8x128xf32>
    %96 = arith.mulf %87, %68 : vector<8x128xf32>
    %97 = arith.mulf %81, %89 : vector<8x128xf32>
    %98 = arith.addf %96, %97 : vector<8x128xf32>
    %99 = math.tanh %98 : vector<8x128xf32>
    %100 = arith.mulf %95, %99 : vector<8x128xf32>
    %101 = vector.extract_strided_slice %8 {offsets = [0, 3, 0], sizes = [8, 1, 512], strides = [1, 1, 1]} : vector<8x8x512xf32> to vector<8x1x512xf32>
    %102 = vector.shape_cast %101 : vector<8x1x512xf32> to vector<8x512xf32>
    %103 = arith.truncf %100 : vector<8x128xf32> to vector<8x128xbf16>
    %cst_22 = arith.constant dense<0.000000e+00> : vector<8x512xf32>
    %104 = tpu.matmul %103, %3, %cst_22 {dimension_numbers = #tpu.dot_dimension_numbers<[1], [0], [0], [1], [0, 0, 1, 1], [], []>} : vector<8x128xbf16>, vector<128x512xbf16>, vector<8x512xf32> -> vector<8x512xf32>
    %105 = arith.addf %102, %104 : vector<8x512xf32>
    %106 = vector.extract_strided_slice %105 {offsets = [0, 0], sizes = [8, 128], strides = [1, 1]} : vector<8x512xf32> to vector<8x128xf32>
    %107 = arith.negf %106 : vector<8x128xf32>
    %108 = math.exp %107 : vector<8x128xf32>
    %cst_23 = arith.constant 1.000000e+00 : f32
    %109 = vector.broadcast %cst_23 : f32 to vector<8x128xf32>
    %110 = arith.addf %109, %108 : vector<8x128xf32>
    %111 = arith.divf %109, %110 : vector<8x128xf32>
    %112 = vector.extract_strided_slice %105 {offsets = [0, 128], sizes = [8, 128], strides = [1, 1]} : vector<8x512xf32> to vector<8x128xf32>
    %113 = arith.negf %112 : vector<8x128xf32>
    %114 = math.exp %113 : vector<8x128xf32>
    %cst_24 = arith.constant 1.000000e+00 : f32
    %115 = vector.broadcast %cst_24 : f32 to vector<8x128xf32>
    %116 = arith.addf %115, %114 : vector<8x128xf32>
    %117 = arith.divf %115, %116 : vector<8x128xf32>
    %118 = vector.extract_strided_slice %105 {offsets = [0, 256], sizes = [8, 128], strides = [1, 1]} : vector<8x512xf32> to vector<8x128xf32>
    %119 = math.tanh %118 : vector<8x128xf32>
    %120 = vector.extract_strided_slice %105 {offsets = [0, 384], sizes = [8, 128], strides = [1, 1]} : vector<8x512xf32> to vector<8x128xf32>
    %121 = arith.negf %120 : vector<8x128xf32>
    %122 = math.exp %121 : vector<8x128xf32>
    %cst_25 = arith.constant 1.000000e+00 : f32
    %123 = vector.broadcast %cst_25 : f32 to vector<8x128xf32>
    %124 = arith.addf %123, %122 : vector<8x128xf32>
    %125 = arith.divf %123, %124 : vector<8x128xf32>
    %126 = arith.mulf %117, %98 : vector<8x128xf32>
    %127 = arith.mulf %111, %119 : vector<8x128xf32>
    %128 = arith.addf %126, %127 : vector<8x128xf32>
    %129 = math.tanh %128 : vector<8x128xf32>
    %130 = arith.mulf %125, %129 : vector<8x128xf32>
    %131 = vector.extract_strided_slice %8 {offsets = [0, 4, 0], sizes = [8, 1, 512], strides = [1, 1, 1]} : vector<8x8x512xf32> to vector<8x1x512xf32>
    %132 = vector.shape_cast %131 : vector<8x1x512xf32> to vector<8x512xf32>
    %133 = arith.truncf %130 : vector<8x128xf32> to vector<8x128xbf16>
    %cst_26 = arith.constant dense<0.000000e+00> : vector<8x512xf32>
    %134 = tpu.matmul %133, %3, %cst_26 {dimension_numbers = #tpu.dot_dimension_numbers<[1], [0], [0], [1], [0, 0, 1, 1], [], []>} : vector<8x128xbf16>, vector<128x512xbf16>, vector<8x512xf32> -> vector<8x512xf32>
    %135 = arith.addf %132, %134 : vector<8x512xf32>
    %136 = vector.extract_strided_slice %135 {offsets = [0, 0], sizes = [8, 128], strides = [1, 1]} : vector<8x512xf32> to vector<8x128xf32>
    %137 = arith.negf %136 : vector<8x128xf32>
    %138 = math.exp %137 : vector<8x128xf32>
    %cst_27 = arith.constant 1.000000e+00 : f32
    %139 = vector.broadcast %cst_27 : f32 to vector<8x128xf32>
    %140 = arith.addf %139, %138 : vector<8x128xf32>
    %141 = arith.divf %139, %140 : vector<8x128xf32>
    %142 = vector.extract_strided_slice %135 {offsets = [0, 128], sizes = [8, 128], strides = [1, 1]} : vector<8x512xf32> to vector<8x128xf32>
    %143 = arith.negf %142 : vector<8x128xf32>
    %144 = math.exp %143 : vector<8x128xf32>
    %cst_28 = arith.constant 1.000000e+00 : f32
    %145 = vector.broadcast %cst_28 : f32 to vector<8x128xf32>
    %146 = arith.addf %145, %144 : vector<8x128xf32>
    %147 = arith.divf %145, %146 : vector<8x128xf32>
    %148 = vector.extract_strided_slice %135 {offsets = [0, 256], sizes = [8, 128], strides = [1, 1]} : vector<8x512xf32> to vector<8x128xf32>
    %149 = math.tanh %148 : vector<8x128xf32>
    %150 = vector.extract_strided_slice %135 {offsets = [0, 384], sizes = [8, 128], strides = [1, 1]} : vector<8x512xf32> to vector<8x128xf32>
    %151 = arith.negf %150 : vector<8x128xf32>
    %152 = math.exp %151 : vector<8x128xf32>
    %cst_29 = arith.constant 1.000000e+00 : f32
    %153 = vector.broadcast %cst_29 : f32 to vector<8x128xf32>
    %154 = arith.addf %153, %152 : vector<8x128xf32>
    %155 = arith.divf %153, %154 : vector<8x128xf32>
    %156 = arith.mulf %147, %128 : vector<8x128xf32>
    %157 = arith.mulf %141, %149 : vector<8x128xf32>
    %158 = arith.addf %156, %157 : vector<8x128xf32>
    %159 = math.tanh %158 : vector<8x128xf32>
    %160 = arith.mulf %155, %159 : vector<8x128xf32>
    %161 = vector.extract_strided_slice %8 {offsets = [0, 5, 0], sizes = [8, 1, 512], strides = [1, 1, 1]} : vector<8x8x512xf32> to vector<8x1x512xf32>
    %162 = vector.shape_cast %161 : vector<8x1x512xf32> to vector<8x512xf32>
    %163 = arith.truncf %160 : vector<8x128xf32> to vector<8x128xbf16>
    %cst_30 = arith.constant dense<0.000000e+00> : vector<8x512xf32>
    %164 = tpu.matmul %163, %3, %cst_30 {dimension_numbers = #tpu.dot_dimension_numbers<[1], [0], [0], [1], [0, 0, 1, 1], [], []>} : vector<8x128xbf16>, vector<128x512xbf16>, vector<8x512xf32> -> vector<8x512xf32>
    %165 = arith.addf %162, %164 : vector<8x512xf32>
    %166 = vector.extract_strided_slice %165 {offsets = [0, 0], sizes = [8, 128], strides = [1, 1]} : vector<8x512xf32> to vector<8x128xf32>
    %167 = arith.negf %166 : vector<8x128xf32>
    %168 = math.exp %167 : vector<8x128xf32>
    %cst_31 = arith.constant 1.000000e+00 : f32
    %169 = vector.broadcast %cst_31 : f32 to vector<8x128xf32>
    %170 = arith.addf %169, %168 : vector<8x128xf32>
    %171 = arith.divf %169, %170 : vector<8x128xf32>
    %172 = vector.extract_strided_slice %165 {offsets = [0, 128], sizes = [8, 128], strides = [1, 1]} : vector<8x512xf32> to vector<8x128xf32>
    %173 = arith.negf %172 : vector<8x128xf32>
    %174 = math.exp %173 : vector<8x128xf32>
    %cst_32 = arith.constant 1.000000e+00 : f32
    %175 = vector.broadcast %cst_32 : f32 to vector<8x128xf32>
    %176 = arith.addf %175, %174 : vector<8x128xf32>
    %177 = arith.divf %175, %176 : vector<8x128xf32>
    %178 = vector.extract_strided_slice %165 {offsets = [0, 256], sizes = [8, 128], strides = [1, 1]} : vector<8x512xf32> to vector<8x128xf32>
    %179 = math.tanh %178 : vector<8x128xf32>
    %180 = vector.extract_strided_slice %165 {offsets = [0, 384], sizes = [8, 128], strides = [1, 1]} : vector<8x512xf32> to vector<8x128xf32>
    %181 = arith.negf %180 : vector<8x128xf32>
    %182 = math.exp %181 : vector<8x128xf32>
    %cst_33 = arith.constant 1.000000e+00 : f32
    %183 = vector.broadcast %cst_33 : f32 to vector<8x128xf32>
    %184 = arith.addf %183, %182 : vector<8x128xf32>
    %185 = arith.divf %183, %184 : vector<8x128xf32>
    %186 = arith.mulf %177, %158 : vector<8x128xf32>
    %187 = arith.mulf %171, %179 : vector<8x128xf32>
    %188 = arith.addf %186, %187 : vector<8x128xf32>
    %189 = math.tanh %188 : vector<8x128xf32>
    %190 = arith.mulf %185, %189 : vector<8x128xf32>
    %191 = vector.extract_strided_slice %8 {offsets = [0, 6, 0], sizes = [8, 1, 512], strides = [1, 1, 1]} : vector<8x8x512xf32> to vector<8x1x512xf32>
    %192 = vector.shape_cast %191 : vector<8x1x512xf32> to vector<8x512xf32>
    %193 = arith.truncf %190 : vector<8x128xf32> to vector<8x128xbf16>
    %cst_34 = arith.constant dense<0.000000e+00> : vector<8x512xf32>
    %194 = tpu.matmul %193, %3, %cst_34 {dimension_numbers = #tpu.dot_dimension_numbers<[1], [0], [0], [1], [0, 0, 1, 1], [], []>} : vector<8x128xbf16>, vector<128x512xbf16>, vector<8x512xf32> -> vector<8x512xf32>
    %195 = arith.addf %192, %194 : vector<8x512xf32>
    %196 = vector.extract_strided_slice %195 {offsets = [0, 0], sizes = [8, 128], strides = [1, 1]} : vector<8x512xf32> to vector<8x128xf32>
    %197 = arith.negf %196 : vector<8x128xf32>
    %198 = math.exp %197 : vector<8x128xf32>
    %cst_35 = arith.constant 1.000000e+00 : f32
    %199 = vector.broadcast %cst_35 : f32 to vector<8x128xf32>
    %200 = arith.addf %199, %198 : vector<8x128xf32>
    %201 = arith.divf %199, %200 : vector<8x128xf32>
    %202 = vector.extract_strided_slice %195 {offsets = [0, 128], sizes = [8, 128], strides = [1, 1]} : vector<8x512xf32> to vector<8x128xf32>
    %203 = arith.negf %202 : vector<8x128xf32>
    %204 = math.exp %203 : vector<8x128xf32>
    %cst_36 = arith.constant 1.000000e+00 : f32
    %205 = vector.broadcast %cst_36 : f32 to vector<8x128xf32>
    %206 = arith.addf %205, %204 : vector<8x128xf32>
    %207 = arith.divf %205, %206 : vector<8x128xf32>
    %208 = vector.extract_strided_slice %195 {offsets = [0, 256], sizes = [8, 128], strides = [1, 1]} : vector<8x512xf32> to vector<8x128xf32>
    %209 = math.tanh %208 : vector<8x128xf32>
    %210 = vector.extract_strided_slice %195 {offsets = [0, 384], sizes = [8, 128], strides = [1, 1]} : vector<8x512xf32> to vector<8x128xf32>
    %211 = arith.negf %210 : vector<8x128xf32>
    %212 = math.exp %211 : vector<8x128xf32>
    %cst_37 = arith.constant 1.000000e+00 : f32
    %213 = vector.broadcast %cst_37 : f32 to vector<8x128xf32>
    %214 = arith.addf %213, %212 : vector<8x128xf32>
    %215 = arith.divf %213, %214 : vector<8x128xf32>
    %216 = arith.mulf %207, %188 : vector<8x128xf32>
    %217 = arith.mulf %201, %209 : vector<8x128xf32>
    %218 = arith.addf %216, %217 : vector<8x128xf32>
    %219 = math.tanh %218 : vector<8x128xf32>
    %220 = arith.mulf %215, %219 : vector<8x128xf32>
    %221 = vector.extract_strided_slice %8 {offsets = [0, 7, 0], sizes = [8, 1, 512], strides = [1, 1, 1]} : vector<8x8x512xf32> to vector<8x1x512xf32>
    %222 = vector.shape_cast %221 : vector<8x1x512xf32> to vector<8x512xf32>
    %223 = arith.truncf %220 : vector<8x128xf32> to vector<8x128xbf16>
    %cst_38 = arith.constant dense<0.000000e+00> : vector<8x512xf32>
    %224 = tpu.matmul %223, %3, %cst_38 {dimension_numbers = #tpu.dot_dimension_numbers<[1], [0], [0], [1], [0, 0, 1, 1], [], []>} : vector<8x128xbf16>, vector<128x512xbf16>, vector<8x512xf32> -> vector<8x512xf32>
    %225 = arith.addf %222, %224 : vector<8x512xf32>
    %226 = vector.extract_strided_slice %225 {offsets = [0, 0], sizes = [8, 128], strides = [1, 1]} : vector<8x512xf32> to vector<8x128xf32>
    %227 = arith.negf %226 : vector<8x128xf32>
    %228 = math.exp %227 : vector<8x128xf32>
    %cst_39 = arith.constant 1.000000e+00 : f32
    %229 = vector.broadcast %cst_39 : f32 to vector<8x128xf32>
    %230 = arith.addf %229, %228 : vector<8x128xf32>
    %231 = arith.divf %229, %230 : vector<8x128xf32>
    %232 = vector.extract_strided_slice %225 {offsets = [0, 128], sizes = [8, 128], strides = [1, 1]} : vector<8x512xf32> to vector<8x128xf32>
    %233 = arith.negf %232 : vector<8x128xf32>
    %234 = math.exp %233 : vector<8x128xf32>
    %cst_40 = arith.constant 1.000000e+00 : f32
    %235 = vector.broadcast %cst_40 : f32 to vector<8x128xf32>
    %236 = arith.addf %235, %234 : vector<8x128xf32>
    %237 = arith.divf %235, %236 : vector<8x128xf32>
    %238 = vector.extract_strided_slice %225 {offsets = [0, 256], sizes = [8, 128], strides = [1, 1]} : vector<8x512xf32> to vector<8x128xf32>
    %239 = math.tanh %238 : vector<8x128xf32>
    %240 = vector.extract_strided_slice %225 {offsets = [0, 384], sizes = [8, 128], strides = [1, 1]} : vector<8x512xf32> to vector<8x128xf32>
    %241 = arith.negf %240 : vector<8x128xf32>
    %242 = math.exp %241 : vector<8x128xf32>
    %cst_41 = arith.constant 1.000000e+00 : f32
    %243 = vector.broadcast %cst_41 : f32 to vector<8x128xf32>
    %244 = arith.addf %243, %242 : vector<8x128xf32>
    %245 = arith.divf %243, %244 : vector<8x128xf32>
    %246 = arith.mulf %237, %218 : vector<8x128xf32>
    %247 = arith.mulf %231, %239 : vector<8x128xf32>
    %248 = arith.addf %246, %247 : vector<8x128xf32>
    %249 = math.tanh %248 : vector<8x128xf32>
    %250 = arith.mulf %245, %249 : vector<8x128xf32>
    %251 = vector.shape_cast %40 : vector<8x128xf32> to vector<1x8x128xf32>
    %252 = vector.shape_cast %70 : vector<8x128xf32> to vector<1x8x128xf32>
    %253 = vector.shape_cast %100 : vector<8x128xf32> to vector<1x8x128xf32>
    %254 = vector.shape_cast %130 : vector<8x128xf32> to vector<1x8x128xf32>
    %255 = vector.shape_cast %160 : vector<8x128xf32> to vector<1x8x128xf32>
    %256 = vector.shape_cast %190 : vector<8x128xf32> to vector<1x8x128xf32>
    %257 = vector.shape_cast %220 : vector<8x128xf32> to vector<1x8x128xf32>
    %258 = vector.shape_cast %250 : vector<8x128xf32> to vector<1x8x128xf32>
    %259 = tpu.concatenate %251, %252, %253, %254, %255, %256, %257, %258 in 0 : vector<1x8x128xf32>, vector<1x8x128xf32>, vector<1x8x128xf32>, vector<1x8x128xf32>, vector<1x8x128xf32>, vector<1x8x128xf32>, vector<1x8x128xf32>, vector<1x8x128xf32> -> vector<8x8x128xf32>
    %260 = vector.shape_cast %259 : vector<8x8x128xf32> to vector<64x128xf32>
    %261 = arith.truncf %260 : vector<64x128xf32> to vector<64x128xbf16>
    %c0_42 = arith.constant 0 : index
    %c0_43 = arith.constant 0 : index
    %262 = vector.load %arg5[%c0_42, %c0_43] : memref<128x512xbf16, #tpu.memory_space<vmem>>, vector<128x512xbf16>
    %c0_44 = arith.constant 0 : index
    %c0_45 = arith.constant 0 : index
    %263 = vector.load %arg6[%c0_44, %c0_45] : memref<128x512xbf16, #tpu.memory_space<vmem>>, vector<128x512xbf16>
    %c0_46 = arith.constant 0 : index
    %c0_47 = arith.constant 0 : index
    %264 = vector.load %arg7[%c0_46, %c0_47] : memref<1x512xf32, #tpu.memory_space<vmem>>, vector<1x512xf32>
    %cst_48 = arith.constant dense<0.000000e+00> : vector<64x512xf32>
    %265 = tpu.matmul %261, %262, %cst_48 {dimension_numbers = #tpu.dot_dimension_numbers<[1], [0], [0], [1], [0, 0, 1, 1], [], []>} : vector<64x128xbf16>, vector<128x512xbf16>, vector<64x512xf32> -> vector<64x512xf32>
    %266 = vector.broadcast %264 : vector<1x512xf32> to vector<64x512xf32>
    %267 = arith.addf %265, %266 : vector<64x512xf32>
    %268 = vector.shape_cast %267 : vector<64x512xf32> to vector<8x8x512xf32>
    %cst_49 = arith.constant 0.000000e+00 : f32
    %269 = vector.broadcast %cst_49 : f32 to vector<8x128xf32>
    %cst_50 = arith.constant 0.000000e+00 : f32
    %270 = vector.broadcast %cst_50 : f32 to vector<8x128xf32>
    %271 = vector.extract_strided_slice %268 {offsets = [0, 0, 0], sizes = [1, 8, 512], strides = [1, 1, 1]} : vector<8x8x512xf32> to vector<1x8x512xf32>
    %272 = vector.shape_cast %271 : vector<1x8x512xf32> to vector<8x512xf32>
    %273 = arith.truncf %269 : vector<8x128xf32> to vector<8x128xbf16>
    %cst_51 = arith.constant dense<0.000000e+00> : vector<8x512xf32>
    %274 = tpu.matmul %273, %263, %cst_51 {dimension_numbers = #tpu.dot_dimension_numbers<[1], [0], [0], [1], [0, 0, 1, 1], [], []>} : vector<8x128xbf16>, vector<128x512xbf16>, vector<8x512xf32> -> vector<8x512xf32>
    %275 = arith.addf %272, %274 : vector<8x512xf32>
    %276 = vector.extract_strided_slice %275 {offsets = [0, 0], sizes = [8, 128], strides = [1, 1]} : vector<8x512xf32> to vector<8x128xf32>
    %277 = arith.negf %276 : vector<8x128xf32>
    %278 = math.exp %277 : vector<8x128xf32>
    %cst_52 = arith.constant 1.000000e+00 : f32
    %279 = vector.broadcast %cst_52 : f32 to vector<8x128xf32>
    %280 = arith.addf %279, %278 : vector<8x128xf32>
    %281 = arith.divf %279, %280 : vector<8x128xf32>
    %282 = vector.extract_strided_slice %275 {offsets = [0, 128], sizes = [8, 128], strides = [1, 1]} : vector<8x512xf32> to vector<8x128xf32>
    %283 = arith.negf %282 : vector<8x128xf32>
    %284 = math.exp %283 : vector<8x128xf32>
    %cst_53 = arith.constant 1.000000e+00 : f32
    %285 = vector.broadcast %cst_53 : f32 to vector<8x128xf32>
    %286 = arith.addf %285, %284 : vector<8x128xf32>
    %287 = arith.divf %285, %286 : vector<8x128xf32>
    %288 = vector.extract_strided_slice %275 {offsets = [0, 256], sizes = [8, 128], strides = [1, 1]} : vector<8x512xf32> to vector<8x128xf32>
    %289 = math.tanh %288 : vector<8x128xf32>
    %290 = vector.extract_strided_slice %275 {offsets = [0, 384], sizes = [8, 128], strides = [1, 1]} : vector<8x512xf32> to vector<8x128xf32>
    %291 = arith.negf %290 : vector<8x128xf32>
    %292 = math.exp %291 : vector<8x128xf32>
    %cst_54 = arith.constant 1.000000e+00 : f32
    %293 = vector.broadcast %cst_54 : f32 to vector<8x128xf32>
    %294 = arith.addf %293, %292 : vector<8x128xf32>
    %295 = arith.divf %293, %294 : vector<8x128xf32>
    %296 = arith.mulf %287, %270 : vector<8x128xf32>
    %297 = arith.mulf %281, %289 : vector<8x128xf32>
    %298 = arith.addf %296, %297 : vector<8x128xf32>
    %299 = math.tanh %298 : vector<8x128xf32>
    %300 = arith.mulf %295, %299 : vector<8x128xf32>
    %301 = vector.extract_strided_slice %268 {offsets = [1, 0, 0], sizes = [1, 8, 512], strides = [1, 1, 1]} : vector<8x8x512xf32> to vector<1x8x512xf32>
    %302 = vector.shape_cast %301 : vector<1x8x512xf32> to vector<8x512xf32>
    %303 = arith.truncf %300 : vector<8x128xf32> to vector<8x128xbf16>
    %cst_55 = arith.constant dense<0.000000e+00> : vector<8x512xf32>
    %304 = tpu.matmul %303, %263, %cst_55 {dimension_numbers = #tpu.dot_dimension_numbers<[1], [0], [0], [1], [0, 0, 1, 1], [], []>} : vector<8x128xbf16>, vector<128x512xbf16>, vector<8x512xf32> -> vector<8x512xf32>
    %305 = arith.addf %302, %304 : vector<8x512xf32>
    %306 = vector.extract_strided_slice %305 {offsets = [0, 0], sizes = [8, 128], strides = [1, 1]} : vector<8x512xf32> to vector<8x128xf32>
    %307 = arith.negf %306 : vector<8x128xf32>
    %308 = math.exp %307 : vector<8x128xf32>
    %cst_56 = arith.constant 1.000000e+00 : f32
    %309 = vector.broadcast %cst_56 : f32 to vector<8x128xf32>
    %310 = arith.addf %309, %308 : vector<8x128xf32>
    %311 = arith.divf %309, %310 : vector<8x128xf32>
    %312 = vector.extract_strided_slice %305 {offsets = [0, 128], sizes = [8, 128], strides = [1, 1]} : vector<8x512xf32> to vector<8x128xf32>
    %313 = arith.negf %312 : vector<8x128xf32>
    %314 = math.exp %313 : vector<8x128xf32>
    %cst_57 = arith.constant 1.000000e+00 : f32
    %315 = vector.broadcast %cst_57 : f32 to vector<8x128xf32>
    %316 = arith.addf %315, %314 : vector<8x128xf32>
    %317 = arith.divf %315, %316 : vector<8x128xf32>
    %318 = vector.extract_strided_slice %305 {offsets = [0, 256], sizes = [8, 128], strides = [1, 1]} : vector<8x512xf32> to vector<8x128xf32>
    %319 = math.tanh %318 : vector<8x128xf32>
    %320 = vector.extract_strided_slice %305 {offsets = [0, 384], sizes = [8, 128], strides = [1, 1]} : vector<8x512xf32> to vector<8x128xf32>
    %321 = arith.negf %320 : vector<8x128xf32>
    %322 = math.exp %321 : vector<8x128xf32>
    %cst_58 = arith.constant 1.000000e+00 : f32
    %323 = vector.broadcast %cst_58 : f32 to vector<8x128xf32>
    %324 = arith.addf %323, %322 : vector<8x128xf32>
    %325 = arith.divf %323, %324 : vector<8x128xf32>
    %326 = arith.mulf %317, %298 : vector<8x128xf32>
    %327 = arith.mulf %311, %319 : vector<8x128xf32>
    %328 = arith.addf %326, %327 : vector<8x128xf32>
    %329 = math.tanh %328 : vector<8x128xf32>
    %330 = arith.mulf %325, %329 : vector<8x128xf32>
    %331 = vector.extract_strided_slice %268 {offsets = [2, 0, 0], sizes = [1, 8, 512], strides = [1, 1, 1]} : vector<8x8x512xf32> to vector<1x8x512xf32>
    %332 = vector.shape_cast %331 : vector<1x8x512xf32> to vector<8x512xf32>
    %333 = arith.truncf %330 : vector<8x128xf32> to vector<8x128xbf16>
    %cst_59 = arith.constant dense<0.000000e+00> : vector<8x512xf32>
    %334 = tpu.matmul %333, %263, %cst_59 {dimension_numbers = #tpu.dot_dimension_numbers<[1], [0], [0], [1], [0, 0, 1, 1], [], []>} : vector<8x128xbf16>, vector<128x512xbf16>, vector<8x512xf32> -> vector<8x512xf32>
    %335 = arith.addf %332, %334 : vector<8x512xf32>
    %336 = vector.extract_strided_slice %335 {offsets = [0, 0], sizes = [8, 128], strides = [1, 1]} : vector<8x512xf32> to vector<8x128xf32>
    %337 = arith.negf %336 : vector<8x128xf32>
    %338 = math.exp %337 : vector<8x128xf32>
    %cst_60 = arith.constant 1.000000e+00 : f32
    %339 = vector.broadcast %cst_60 : f32 to vector<8x128xf32>
    %340 = arith.addf %339, %338 : vector<8x128xf32>
    %341 = arith.divf %339, %340 : vector<8x128xf32>
    %342 = vector.extract_strided_slice %335 {offsets = [0, 128], sizes = [8, 128], strides = [1, 1]} : vector<8x512xf32> to vector<8x128xf32>
    %343 = arith.negf %342 : vector<8x128xf32>
    %344 = math.exp %343 : vector<8x128xf32>
    %cst_61 = arith.constant 1.000000e+00 : f32
    %345 = vector.broadcast %cst_61 : f32 to vector<8x128xf32>
    %346 = arith.addf %345, %344 : vector<8x128xf32>
    %347 = arith.divf %345, %346 : vector<8x128xf32>
    %348 = vector.extract_strided_slice %335 {offsets = [0, 256], sizes = [8, 128], strides = [1, 1]} : vector<8x512xf32> to vector<8x128xf32>
    %349 = math.tanh %348 : vector<8x128xf32>
    %350 = vector.extract_strided_slice %335 {offsets = [0, 384], sizes = [8, 128], strides = [1, 1]} : vector<8x512xf32> to vector<8x128xf32>
    %351 = arith.negf %350 : vector<8x128xf32>
    %352 = math.exp %351 : vector<8x128xf32>
    %cst_62 = arith.constant 1.000000e+00 : f32
    %353 = vector.broadcast %cst_62 : f32 to vector<8x128xf32>
    %354 = arith.addf %353, %352 : vector<8x128xf32>
    %355 = arith.divf %353, %354 : vector<8x128xf32>
    %356 = arith.mulf %347, %328 : vector<8x128xf32>
    %357 = arith.mulf %341, %349 : vector<8x128xf32>
    %358 = arith.addf %356, %357 : vector<8x128xf32>
    %359 = math.tanh %358 : vector<8x128xf32>
    %360 = arith.mulf %355, %359 : vector<8x128xf32>
    %361 = vector.extract_strided_slice %268 {offsets = [3, 0, 0], sizes = [1, 8, 512], strides = [1, 1, 1]} : vector<8x8x512xf32> to vector<1x8x512xf32>
    %362 = vector.shape_cast %361 : vector<1x8x512xf32> to vector<8x512xf32>
    %363 = arith.truncf %360 : vector<8x128xf32> to vector<8x128xbf16>
    %cst_63 = arith.constant dense<0.000000e+00> : vector<8x512xf32>
    %364 = tpu.matmul %363, %263, %cst_63 {dimension_numbers = #tpu.dot_dimension_numbers<[1], [0], [0], [1], [0, 0, 1, 1], [], []>} : vector<8x128xbf16>, vector<128x512xbf16>, vector<8x512xf32> -> vector<8x512xf32>
    %365 = arith.addf %362, %364 : vector<8x512xf32>
    %366 = vector.extract_strided_slice %365 {offsets = [0, 0], sizes = [8, 128], strides = [1, 1]} : vector<8x512xf32> to vector<8x128xf32>
    %367 = arith.negf %366 : vector<8x128xf32>
    %368 = math.exp %367 : vector<8x128xf32>
    %cst_64 = arith.constant 1.000000e+00 : f32
    %369 = vector.broadcast %cst_64 : f32 to vector<8x128xf32>
    %370 = arith.addf %369, %368 : vector<8x128xf32>
    %371 = arith.divf %369, %370 : vector<8x128xf32>
    %372 = vector.extract_strided_slice %365 {offsets = [0, 128], sizes = [8, 128], strides = [1, 1]} : vector<8x512xf32> to vector<8x128xf32>
    %373 = arith.negf %372 : vector<8x128xf32>
    %374 = math.exp %373 : vector<8x128xf32>
    %cst_65 = arith.constant 1.000000e+00 : f32
    %375 = vector.broadcast %cst_65 : f32 to vector<8x128xf32>
    %376 = arith.addf %375, %374 : vector<8x128xf32>
    %377 = arith.divf %375, %376 : vector<8x128xf32>
    %378 = vector.extract_strided_slice %365 {offsets = [0, 256], sizes = [8, 128], strides = [1, 1]} : vector<8x512xf32> to vector<8x128xf32>
    %379 = math.tanh %378 : vector<8x128xf32>
    %380 = vector.extract_strided_slice %365 {offsets = [0, 384], sizes = [8, 128], strides = [1, 1]} : vector<8x512xf32> to vector<8x128xf32>
    %381 = arith.negf %380 : vector<8x128xf32>
    %382 = math.exp %381 : vector<8x128xf32>
    %cst_66 = arith.constant 1.000000e+00 : f32
    %383 = vector.broadcast %cst_66 : f32 to vector<8x128xf32>
    %384 = arith.addf %383, %382 : vector<8x128xf32>
    %385 = arith.divf %383, %384 : vector<8x128xf32>
    %386 = arith.mulf %377, %358 : vector<8x128xf32>
    %387 = arith.mulf %371, %379 : vector<8x128xf32>
    %388 = arith.addf %386, %387 : vector<8x128xf32>
    %389 = math.tanh %388 : vector<8x128xf32>
    %390 = arith.mulf %385, %389 : vector<8x128xf32>
    %391 = vector.extract_strided_slice %268 {offsets = [4, 0, 0], sizes = [1, 8, 512], strides = [1, 1, 1]} : vector<8x8x512xf32> to vector<1x8x512xf32>
    %392 = vector.shape_cast %391 : vector<1x8x512xf32> to vector<8x512xf32>
    %393 = arith.truncf %390 : vector<8x128xf32> to vector<8x128xbf16>
    %cst_67 = arith.constant dense<0.000000e+00> : vector<8x512xf32>
    %394 = tpu.matmul %393, %263, %cst_67 {dimension_numbers = #tpu.dot_dimension_numbers<[1], [0], [0], [1], [0, 0, 1, 1], [], []>} : vector<8x128xbf16>, vector<128x512xbf16>, vector<8x512xf32> -> vector<8x512xf32>
    %395 = arith.addf %392, %394 : vector<8x512xf32>
    %396 = vector.extract_strided_slice %395 {offsets = [0, 0], sizes = [8, 128], strides = [1, 1]} : vector<8x512xf32> to vector<8x128xf32>
    %397 = arith.negf %396 : vector<8x128xf32>
    %398 = math.exp %397 : vector<8x128xf32>
    %cst_68 = arith.constant 1.000000e+00 : f32
    %399 = vector.broadcast %cst_68 : f32 to vector<8x128xf32>
    %400 = arith.addf %399, %398 : vector<8x128xf32>
    %401 = arith.divf %399, %400 : vector<8x128xf32>
    %402 = vector.extract_strided_slice %395 {offsets = [0, 128], sizes = [8, 128], strides = [1, 1]} : vector<8x512xf32> to vector<8x128xf32>
    %403 = arith.negf %402 : vector<8x128xf32>
    %404 = math.exp %403 : vector<8x128xf32>
    %cst_69 = arith.constant 1.000000e+00 : f32
    %405 = vector.broadcast %cst_69 : f32 to vector<8x128xf32>
    %406 = arith.addf %405, %404 : vector<8x128xf32>
    %407 = arith.divf %405, %406 : vector<8x128xf32>
    %408 = vector.extract_strided_slice %395 {offsets = [0, 256], sizes = [8, 128], strides = [1, 1]} : vector<8x512xf32> to vector<8x128xf32>
    %409 = math.tanh %408 : vector<8x128xf32>
    %410 = vector.extract_strided_slice %395 {offsets = [0, 384], sizes = [8, 128], strides = [1, 1]} : vector<8x512xf32> to vector<8x128xf32>
    %411 = arith.negf %410 : vector<8x128xf32>
    %412 = math.exp %411 : vector<8x128xf32>
    %cst_70 = arith.constant 1.000000e+00 : f32
    %413 = vector.broadcast %cst_70 : f32 to vector<8x128xf32>
    %414 = arith.addf %413, %412 : vector<8x128xf32>
    %415 = arith.divf %413, %414 : vector<8x128xf32>
    %416 = arith.mulf %407, %388 : vector<8x128xf32>
    %417 = arith.mulf %401, %409 : vector<8x128xf32>
    %418 = arith.addf %416, %417 : vector<8x128xf32>
    %419 = math.tanh %418 : vector<8x128xf32>
    %420 = arith.mulf %415, %419 : vector<8x128xf32>
    %421 = vector.extract_strided_slice %268 {offsets = [5, 0, 0], sizes = [1, 8, 512], strides = [1, 1, 1]} : vector<8x8x512xf32> to vector<1x8x512xf32>
    %422 = vector.shape_cast %421 : vector<1x8x512xf32> to vector<8x512xf32>
    %423 = arith.truncf %420 : vector<8x128xf32> to vector<8x128xbf16>
    %cst_71 = arith.constant dense<0.000000e+00> : vector<8x512xf32>
    %424 = tpu.matmul %423, %263, %cst_71 {dimension_numbers = #tpu.dot_dimension_numbers<[1], [0], [0], [1], [0, 0, 1, 1], [], []>} : vector<8x128xbf16>, vector<128x512xbf16>, vector<8x512xf32> -> vector<8x512xf32>
    %425 = arith.addf %422, %424 : vector<8x512xf32>
    %426 = vector.extract_strided_slice %425 {offsets = [0, 0], sizes = [8, 128], strides = [1, 1]} : vector<8x512xf32> to vector<8x128xf32>
    %427 = arith.negf %426 : vector<8x128xf32>
    %428 = math.exp %427 : vector<8x128xf32>
    %cst_72 = arith.constant 1.000000e+00 : f32
    %429 = vector.broadcast %cst_72 : f32 to vector<8x128xf32>
    %430 = arith.addf %429, %428 : vector<8x128xf32>
    %431 = arith.divf %429, %430 : vector<8x128xf32>
    %432 = vector.extract_strided_slice %425 {offsets = [0, 128], sizes = [8, 128], strides = [1, 1]} : vector<8x512xf32> to vector<8x128xf32>
    %433 = arith.negf %432 : vector<8x128xf32>
    %434 = math.exp %433 : vector<8x128xf32>
    %cst_73 = arith.constant 1.000000e+00 : f32
    %435 = vector.broadcast %cst_73 : f32 to vector<8x128xf32>
    %436 = arith.addf %435, %434 : vector<8x128xf32>
    %437 = arith.divf %435, %436 : vector<8x128xf32>
    %438 = vector.extract_strided_slice %425 {offsets = [0, 256], sizes = [8, 128], strides = [1, 1]} : vector<8x512xf32> to vector<8x128xf32>
    %439 = math.tanh %438 : vector<8x128xf32>
    %440 = vector.extract_strided_slice %425 {offsets = [0, 384], sizes = [8, 128], strides = [1, 1]} : vector<8x512xf32> to vector<8x128xf32>
    %441 = arith.negf %440 : vector<8x128xf32>
    %442 = math.exp %441 : vector<8x128xf32>
    %cst_74 = arith.constant 1.000000e+00 : f32
    %443 = vector.broadcast %cst_74 : f32 to vector<8x128xf32>
    %444 = arith.addf %443, %442 : vector<8x128xf32>
    %445 = arith.divf %443, %444 : vector<8x128xf32>
    %446 = arith.mulf %437, %418 : vector<8x128xf32>
    %447 = arith.mulf %431, %439 : vector<8x128xf32>
    %448 = arith.addf %446, %447 : vector<8x128xf32>
    %449 = math.tanh %448 : vector<8x128xf32>
    %450 = arith.mulf %445, %449 : vector<8x128xf32>
    %451 = vector.extract_strided_slice %268 {offsets = [6, 0, 0], sizes = [1, 8, 512], strides = [1, 1, 1]} : vector<8x8x512xf32> to vector<1x8x512xf32>
    %452 = vector.shape_cast %451 : vector<1x8x512xf32> to vector<8x512xf32>
    %453 = arith.truncf %450 : vector<8x128xf32> to vector<8x128xbf16>
    %cst_75 = arith.constant dense<0.000000e+00> : vector<8x512xf32>
    %454 = tpu.matmul %453, %263, %cst_75 {dimension_numbers = #tpu.dot_dimension_numbers<[1], [0], [0], [1], [0, 0, 1, 1], [], []>} : vector<8x128xbf16>, vector<128x512xbf16>, vector<8x512xf32> -> vector<8x512xf32>
    %455 = arith.addf %452, %454 : vector<8x512xf32>
    %456 = vector.extract_strided_slice %455 {offsets = [0, 0], sizes = [8, 128], strides = [1, 1]} : vector<8x512xf32> to vector<8x128xf32>
    %457 = arith.negf %456 : vector<8x128xf32>
    %458 = math.exp %457 : vector<8x128xf32>
    %cst_76 = arith.constant 1.000000e+00 : f32
    %459 = vector.broadcast %cst_76 : f32 to vector<8x128xf32>
    %460 = arith.addf %459, %458 : vector<8x128xf32>
    %461 = arith.divf %459, %460 : vector<8x128xf32>
    %462 = vector.extract_strided_slice %455 {offsets = [0, 128], sizes = [8, 128], strides = [1, 1]} : vector<8x512xf32> to vector<8x128xf32>
    %463 = arith.negf %462 : vector<8x128xf32>
    %464 = math.exp %463 : vector<8x128xf32>
    %cst_77 = arith.constant 1.000000e+00 : f32
    %465 = vector.broadcast %cst_77 : f32 to vector<8x128xf32>
    %466 = arith.addf %465, %464 : vector<8x128xf32>
    %467 = arith.divf %465, %466 : vector<8x128xf32>
    %468 = vector.extract_strided_slice %455 {offsets = [0, 256], sizes = [8, 128], strides = [1, 1]} : vector<8x512xf32> to vector<8x128xf32>
    %469 = math.tanh %468 : vector<8x128xf32>
    %470 = vector.extract_strided_slice %455 {offsets = [0, 384], sizes = [8, 128], strides = [1, 1]} : vector<8x512xf32> to vector<8x128xf32>
    %471 = arith.negf %470 : vector<8x128xf32>
    %472 = math.exp %471 : vector<8x128xf32>
    %cst_78 = arith.constant 1.000000e+00 : f32
    %473 = vector.broadcast %cst_78 : f32 to vector<8x128xf32>
    %474 = arith.addf %473, %472 : vector<8x128xf32>
    %475 = arith.divf %473, %474 : vector<8x128xf32>
    %476 = arith.mulf %467, %448 : vector<8x128xf32>
    %477 = arith.mulf %461, %469 : vector<8x128xf32>
    %478 = arith.addf %476, %477 : vector<8x128xf32>
    %479 = math.tanh %478 : vector<8x128xf32>
    %480 = arith.mulf %475, %479 : vector<8x128xf32>
    %481 = vector.extract_strided_slice %268 {offsets = [7, 0, 0], sizes = [1, 8, 512], strides = [1, 1, 1]} : vector<8x8x512xf32> to vector<1x8x512xf32>
    %482 = vector.shape_cast %481 : vector<1x8x512xf32> to vector<8x512xf32>
    %483 = arith.truncf %480 : vector<8x128xf32> to vector<8x128xbf16>
    %cst_79 = arith.constant dense<0.000000e+00> : vector<8x512xf32>
    %484 = tpu.matmul %483, %263, %cst_79 {dimension_numbers = #tpu.dot_dimension_numbers<[1], [0], [0], [1], [0, 0, 1, 1], [], []>} : vector<8x128xbf16>, vector<128x512xbf16>, vector<8x512xf32> -> vector<8x512xf32>
    %485 = arith.addf %482, %484 : vector<8x512xf32>
    %486 = vector.extract_strided_slice %485 {offsets = [0, 0], sizes = [8, 128], strides = [1, 1]} : vector<8x512xf32> to vector<8x128xf32>
    %487 = arith.negf %486 : vector<8x128xf32>
    %488 = math.exp %487 : vector<8x128xf32>
    %cst_80 = arith.constant 1.000000e+00 : f32
    %489 = vector.broadcast %cst_80 : f32 to vector<8x128xf32>
    %490 = arith.addf %489, %488 : vector<8x128xf32>
    %491 = arith.divf %489, %490 : vector<8x128xf32>
    %492 = vector.extract_strided_slice %485 {offsets = [0, 128], sizes = [8, 128], strides = [1, 1]} : vector<8x512xf32> to vector<8x128xf32>
    %493 = arith.negf %492 : vector<8x128xf32>
    %494 = math.exp %493 : vector<8x128xf32>
    %cst_81 = arith.constant 1.000000e+00 : f32
    %495 = vector.broadcast %cst_81 : f32 to vector<8x128xf32>
    %496 = arith.addf %495, %494 : vector<8x128xf32>
    %497 = arith.divf %495, %496 : vector<8x128xf32>
    %498 = vector.extract_strided_slice %485 {offsets = [0, 256], sizes = [8, 128], strides = [1, 1]} : vector<8x512xf32> to vector<8x128xf32>
    %499 = math.tanh %498 : vector<8x128xf32>
    %500 = vector.extract_strided_slice %485 {offsets = [0, 384], sizes = [8, 128], strides = [1, 1]} : vector<8x512xf32> to vector<8x128xf32>
    %501 = arith.negf %500 : vector<8x128xf32>
    %502 = math.exp %501 : vector<8x128xf32>
    %cst_82 = arith.constant 1.000000e+00 : f32
    %503 = vector.broadcast %cst_82 : f32 to vector<8x128xf32>
    %504 = arith.addf %503, %502 : vector<8x128xf32>
    %505 = arith.divf %503, %504 : vector<8x128xf32>
    %506 = arith.mulf %497, %478 : vector<8x128xf32>
    %507 = arith.mulf %491, %499 : vector<8x128xf32>
    %508 = arith.addf %506, %507 : vector<8x128xf32>
    %509 = math.tanh %508 : vector<8x128xf32>
    %510 = arith.mulf %505, %509 : vector<8x128xf32>
    %c0_83 = arith.constant 0 : index
    %c0_84 = arith.constant 0 : index
    %511 = vector.load %arg8[%c0_83, %c0_84] : memref<128x1xf32, #tpu.memory_space<vmem>>, vector<128x1xf32>
    %cst_85 = arith.constant dense<0.000000e+00> : vector<8x1xf32>
    %512 = tpu.matmul %510, %511, %cst_85 {dimension_numbers = #tpu.dot_dimension_numbers<[1], [0], [0], [1], [0, 0, 1, 1], [], []>} : vector<8x128xf32>, vector<128x1xf32>, vector<8x1xf32> -> vector<8x1xf32>
    %c0_86 = arith.constant 0 : index
    %c0_87 = arith.constant 0 : index
    %513 = vector.load %arg9[%c0_86, %c0_87] : memref<1x1xf32, #tpu.memory_space<vmem>>, vector<1x1xf32>
    %514 = vector.broadcast %513 : vector<1x1xf32> to vector<8x1xf32>
    %515 = arith.addf %512, %514 : vector<8x1xf32>
    %c0_88 = arith.constant 0 : index
    %c0_89 = arith.constant 0 : index
    %516 = vector.load %arg10[%c0_88, %c0_89] : memref<8x1xf32, #tpu.memory_space<vmem>>, vector<8x1xf32>
    tpu.vector_store %arg10[%c0_88, %c0_89], %515 {strides = array<i32>} : memref<8x1xf32, #tpu.memory_space<vmem>>, vector<8x1xf32>,
    return
  }
  func.func @transform_0(%arg0: i32) -> (i32, i32, i32) {
    %c0_i32 = arith.constant 0 : i32
    %c0_i32_0 = arith.constant 0 : i32
    %c0_i32_1 = arith.constant 0 : i32
    return %arg0, %c0_i32, %c0_i32_0 : i32, i32, i32
  }
  func.func @transform_1(%arg0: i32) -> (i32, i32) {
    %c0_i32 = arith.constant 0 : i32
    %c0_i32_0 = arith.constant 0 : i32
    %c0_i32_1 = arith.constant 0 : i32
    return %c0_i32, %c0_i32_0 : i32, i32
  }
  func.func @transform_2(%arg0: i32) -> (i32, i32) {
    %c0_i32 = arith.constant 0 : i32
    %c0_i32_0 = arith.constant 0 : i32
    %c0_i32_1 = arith.constant 0 : i32
    return %c0_i32, %c0_i32_0 : i32, i32
  }
  func.func @transform_3(%arg0: i32) -> (i32, i32) {
    %c0_i32 = arith.constant 0 : i32
    %c0_i32_0 = arith.constant 0 : i32
    %c0_i32_1 = arith.constant 0 : i32
    return %c0_i32, %c0_i32_0 : i32, i32
  }
  func.func @transform_4(%arg0: i32) -> (i32, i32) {
    %c0_i32 = arith.constant 0 : i32
    %c0_i32_0 = arith.constant 0 : i32
    %c0_i32_1 = arith.constant 0 : i32
    return %c0_i32, %c0_i32_0 : i32, i32
  }
  func.func @transform_5(%arg0: i32) -> (i32, i32) {
    %c0_i32 = arith.constant 0 : i32
    %c0_i32_0 = arith.constant 0 : i32
    %c0_i32_1 = arith.constant 0 : i32
    return %c0_i32, %c0_i32_0 : i32, i32
  }
  func.func @transform_6(%arg0: i32) -> (i32, i32) {
    %c0_i32 = arith.constant 0 : i32
    %c0_i32_0 = arith.constant 0 : i32
    %c0_i32_1 = arith.constant 0 : i32
    return %c0_i32, %c0_i32_0 : i32, i32
  }
  func.func @transform_7(%arg0: i32) -> (i32, i32) {
    %c0_i32 = arith.constant 0 : i32
    %c0_i32_0 = arith.constant 0 : i32
    %c0_i32_1 = arith.constant 0 : i32
    return %c0_i32, %c0_i32_0 : i32, i32
  }
  func.func @transform_8(%arg0: i32) -> (i32, i32) {
    %c0_i32 = arith.constant 0 : i32
    %c0_i32_0 = arith.constant 0 : i32
    %c0_i32_1 = arith.constant 0 : i32
    return %c0_i32, %c0_i32_0 : i32, i32
  }
  func.func @transform_9(%arg0: i32) -> (i32, i32) {
    %c0_i32 = arith.constant 0 : i32
    %c0_i32_0 = arith.constant 0 : i32
    return %arg0, %c0_i32 : i32, i32
  }
}

</mosaic_0001>

<llo_original>
// kernel: tpu_custom_call.1
$region0: #{tpu_custom_call.1}
  #allocation0 [shape = 'u32[]', space=smem, size = 0x4, offset = 0x4, fixed_abs, tag = 'smem constant byte address 0x4 - core index']
  #allocation1 [shape = 'u32[144,128]{1,0:T(1,128)}', space=vmem, size = 0x12000, scoped, tag = 'internal scratch']
  #allocation2 [shape = 'f32[1,1]{1,0:T(1,128)S(1)}', space=vmem, size = 0x200, scoped, tag = 'scoped memory for tpu_custom_call.1']
  %s0 = inlined_call_operand.vmem [shape: bf16[8,8,128], index: 0, kind: input, shape index: {}]
  %s1 = inlined_call_operand.hbm [shape: bf16[128,512], index: 1, kind: input, shape index: {}]
  %s2 = inlined_call_operand.hbm [shape: bf16[128,512], index: 2, kind: input, shape index: {}]
  %s3 = inlined_call_operand.vmem [shape: f32[1,512], index: 3, kind: input, shape index: {}]
  %s4 = inlined_call_operand.hbm [shape: bf16[128,512], index: 4, kind: input, shape index: {}]
  %s5 = inlined_call_operand.hbm [shape: bf16[128,512], index: 5, kind: input, shape index: {}]
  %s6 = inlined_call_operand.vmem [shape: f32[1,512], index: 6, kind: input, shape index: {}]
  %s7 = inlined_call_operand.vmem [shape: f32[128,1], index: 7, kind: input, shape index: {}]
  %s8 = inlined_call_operand.<no memory space> [shape: f32[1,1], index: 8, kind: input, shape index: {}]
  %s9 = inlined_call_operand.vmem [shape: f32[8,1], index: 9, kind: output, shape index: {}]
  %s10 = sld [smem:[#allocation0]]
  $region62: #{tpu_custom_call.1} parent=0
    _
  %s12 = ssub.s32 1, %s10
  %s13 = scalar_select 0, %s12, %s10
  %v14 = vstv %s8
  %15 = vst [vmem:[#allocation2] sm:$0x1] %v14
  $region1: #{tpu_custom_call.1} parent=0
    #allocation3 [shape = 'u8[131072]{0}', space=vmem, size = 0x20000, scoped, tag = 'input window, operand 1, single buffered']
    #allocation4 [shape = 's32[1]{0}', space=sflag, size = 0x4, scoped, tag = 'scoped memory for tpu_custom_call.1']
    #allocation5 [shape = 'u8[131072]{0}', space=vmem, size = 0x20000, scoped, tag = 'input window, operand 2, single buffered']
    #allocation6 [shape = 's32[1]{0}', space=sflag, size = 0x4, scoped, tag = 'scoped memory for tpu_custom_call.1']
    #allocation7 [shape = 'u8[131072]{0}', space=vmem, size = 0x20000, scoped, tag = 'input window, operand 4, single buffered']
    #allocation8 [shape = 'u8[131072]{0}', space=vmem, size = 0x20000, scoped, tag = 'input window, operand 5, single buffered']
    #allocation9 [shape = 's32[1]{0}', space=sflag, size = 0x4, scoped, tag = 'scoped memory for tpu_custom_call.1']
    %16 = vsyncpa [#allocation4], 0
    %17 = vsyncpa [#allocation6], 0
    %18 = vsyncpa [#allocation9], 0
    // Predicated region
    $region2: #{tpu_custom_call.1} parent=1 // pred_check
      _
    $region3: #{tpu_custom_call.1} parent=1 // pred_check_branch
      %20 = sbr.rel (0) target = $region5
    $region4: #{tpu_custom_call.1} parent=1 // pred_region
      _
    $region5: #{tpu_custom_call.1} parent=1 // pred_fallthru
      _
    // Predicated region
    $region6: #{tpu_custom_call.1} parent=1 // pred_check
      _
    $region7: #{tpu_custom_call.1} parent=1 // pred_check_branch
      %22 = sbr.rel (0) target = $region9
    $region8: #{tpu_custom_call.1} parent=1 // pred_region
      %s24 = ssub.s32 4096, 4096
      %25 = vsyncadd [#allocation4], %s24
      %s26 = sshll.u32 [#allocation3], 4
      %s27 = int_to_ptr.vmem [resolvable:$true] %s26
      %32 = dma.hbm_to_vmem [thread:$0]  %s1, 4096, %s27, [#allocation4], 256, 256, 16
    $region9: #{tpu_custom_call.1} parent=1 // pred_fallthru
      _
    // Predicated region
    $region10: #{tpu_custom_call.1} parent=1 // pred_check
      _
    $region11: #{tpu_custom_call.1} parent=1 // pred_check_branch
      %34 = sbr.rel (0) target = $region13
    $region12: #{tpu_custom_call.1} parent=1 // pred_region
      %s36 = ssub.s32 4096, 4096
      %37 = vsyncadd [#allocation6], %s36
      %s38 = sshll.u32 [#allocation5], 4
      %s39 = int_to_ptr.vmem [resolvable:$true] %s38
      %44 = dma.hbm_to_vmem [thread:$0]  %s2, 4096, %s39, [#allocation6], 256, 256, 16
    $region13: #{tpu_custom_call.1} parent=1 // pred_fallthru
      _
    // Predicated region
    $region14: #{tpu_custom_call.1} parent=1 // pred_check
      _
    $region15: #{tpu_custom_call.1} parent=1 // pred_check_branch
      %46 = sbr.rel (0) target = $region17
    $region16: #{tpu_custom_call.1} parent=1 // pred_region
      _
    $region17: #{tpu_custom_call.1} parent=1 // pred_fallthru
      _
    // Predicated region
    $region18: #{tpu_custom_call.1} parent=1 // pred_check
      _
    $region19: #{tpu_custom_call.1} parent=1 // pred_check_branch
      %48 = sbr.rel (0) target = $region21
    $region20: #{tpu_custom_call.1} parent=1 // pred_region
      %s50 = ssub.s32 4096, 4096
      %51 = vsyncadd [#allocation6], %s50
      %s52 = sshll.u32 [#allocation7], 4
      %s53 = int_to_ptr.vmem [resolvable:$true] %s52
      %58 = dma.hbm_to_vmem [thread:$0]  %s4, 4096, %s53, [#allocation6], 256, 256, 16
    $region21: #{tpu_custom_call.1} parent=1 // pred_fallthru
      _
    // Predicated region
    $region22: #{tpu_custom_call.1} parent=1 // pred_check
      _
    $region23: #{tpu_custom_call.1} parent=1 // pred_check_branch
      %60 = sbr.rel (0) target = $region25
    $region24: #{tpu_custom_call.1} parent=1 // pred_region
      %s62 = ssub.s32 4096, 4096
      %63 = vsyncadd [#allocation9], %s62
      %s64 = sshll.u32 [#allocation8], 4
      %s65 = int_to_ptr.vmem [resolvable:$true] %s64
      %70 = dma.hbm_to_vmem [thread:$0]  %s5, 4096, %s65, [#allocation9], 256, 256, 16
    $region25: #{tpu_custom_call.1} parent=1 // pred_fallthru
      _
    // Predicated region
    $region26: #{tpu_custom_call.1} parent=1 // pred_check
      _
    $region27: #{tpu_custom_call.1} parent=1 // pred_check_branch
      %72 = sbr.rel (0) target = $region29
    $region28: #{tpu_custom_call.1} parent=1 // pred_region
      _
    $region29: #{tpu_custom_call.1} parent=1 // pred_fallthru
      _
    // Predicated region
    $region30: #{tpu_custom_call.1} parent=1 // pred_check
      _
    $region31: #{tpu_custom_call.1} parent=1 // pred_check_branch
      %74 = sbr.rel (0) target = $region33
    $region32: #{tpu_custom_call.1} parent=1 // pred_region
      _
    $region33: #{tpu_custom_call.1} parent=1 // pred_fallthru
      _
    // Predicated region
    $region34: #{tpu_custom_call.1} parent=1 // pred_check
      _
    $region35: #{tpu_custom_call.1} parent=1 // pred_check_branch
      %76 = sbr.rel (0) target = $region37
    $region36: #{tpu_custom_call.1} parent=1 // pred_region
      _
    $region37: #{tpu_custom_call.1} parent=1 // pred_fallthru
      _
    // Predicated region
    $region38: #{tpu_custom_call.1} parent=1 // pred_check
      _
    $region39: #{tpu_custom_call.1} parent=1 // pred_check_branch
      %78 = sbr.rel (0) target = $region41
    $region40: #{tpu_custom_call.1} parent=1 // pred_region
      %79 = dma.done [#allocation4], 4096
    $region41: #{tpu_custom_call.1} parent=1 // pred_fallthru
      _
    // Predicated region
    $region42: #{tpu_custom_call.1} parent=1 // pred_check
      _
    $region43: #{tpu_custom_call.1} parent=1 // pred_check_branch
      %81 = sbr.rel (0) target = $region45
    $region44: #{tpu_custom_call.1} parent=1 // pred_region
      %82 = dma.done [#allocation6], 4096
    $region45: #{tpu_custom_call.1} parent=1 // pred_fallthru
      _
    // Predicated region
    $region46: #{tpu_custom_call.1} parent=1 // pred_check
      _
    $region47: #{tpu_custom_call.1} parent=1 // pred_check_branch
      %84 = sbr.rel (0) target = $region49
    $region48: #{tpu_custom_call.1} parent=1 // pred_region
      %85 = dma.done [#allocation6], 4096
    $region49: #{tpu_custom_call.1} parent=1 // pred_fallthru
      _
    // Predicated region
    $region50: #{tpu_custom_call.1} parent=1 // pred_check
      _
    $region51: #{tpu_custom_call.1} parent=1 // pred_check_branch
      %87 = sbr.rel (0) target = $region53
    $region52: #{tpu_custom_call.1} parent=1 // pred_region
      %88 = dma.done [#allocation9], 4096
    $region53: #{tpu_custom_call.1} parent=1 // pred_fallthru
      _
    %v90 = vld [vmem:[%s0] sm:$0xf]
    %v91 = vld [vmem:[%s0 + $0x4] sm:$0xf]
    %v92 = vld [vmem:[%s0 + $0x8] sm:$0xf]
    %v93 = vld [vmem:[%s0 + $0xc] sm:$0xf]
    %v94 = vld [vmem:[%s0 + $0x10] sm:$0xf]
    %v95 = vld [vmem:[%s0 + $0x14] sm:$0xf]
    %v96 = vld [vmem:[%s0 + $0x18] sm:$0xf]
    %v97 = vld [vmem:[%s0 + $0x1c] sm:$0xf]
    %v98 = vld [vmem:[#allocation3] sm:$0xff]
    %v99 = vld [vmem:[#allocation3 + $0x8] sm:$0xff]
    %v100 = vld [vmem:[#allocation3 + $0x10] sm:$0xff]
    %v101 = vld [vmem:[#allocation3 + $0x18] sm:$0xff]
    %v102 = vld [vmem:[#allocation3 + $0x20] sm:$0xff]
    %v103 = vld [vmem:[#allocation3 + $0x28] sm:$0xff]
    %v104 = vld [vmem:[#allocation3 + $0x30] sm:$0xff]
    %v105 = vld [vmem:[#allocation3 + $0x38] sm:$0xff]
    %v106 = vld [vmem:[#allocation3 + $0x40] sm:$0xff]
    %v107 = vld [vmem:[#allocation3 + $0x48] sm:$0xff]
    %v108 = vld [vmem:[#allocation3 + $0x50] sm:$0xff]
    %v109 = vld [vmem:[#allocation3 + $0x58] sm:$0xff]
    %v110 = vld [vmem:[#allocation3 + $0x60] sm:$0xff]
    %v111 = vld [vmem:[#allocation3 + $0x68] sm:$0xff]
    %v112 = vld [vmem:[#allocation3 + $0x70] sm:$0xff]
    %v113 = vld [vmem:[#allocation3 + $0x78] sm:$0xff]
    %v114 = vld [vmem:[#allocation3 + $0x80] sm:$0xff]
    %v115 = vld [vmem:[#allocation3 + $0x88] sm:$0xff]
    %v116 = vld [vmem:[#allocation3 + $0x90] sm:$0xff]
    %v117 = vld [vmem:[#allocation3 + $0x98] sm:$0xff]
    %v118 = vld [vmem:[#allocation3 + $0xa0] sm:$0xff]
    %v119 = vld [vmem:[#allocation3 + $0xa8] sm:$0xff]
    %v120 = vld [vmem:[#allocation3 + $0xb0] sm:$0xff]
    %v121 = vld [vmem:[#allocation3 + $0xb8] sm:$0xff]
    %v122 = vld [vmem:[#allocation3 + $0xc0] sm:$0xff]
    %v123 = vld [vmem:[#allocation3 + $0xc8] sm:$0xff]
    %v124 = vld [vmem:[#allocation3 + $0xd0] sm:$0xff]
    %v125 = vld [vmem:[#allocation3 + $0xd8] sm:$0xff]
    %v126 = vld [vmem:[#allocation3 + $0xe0] sm:$0xff]
    %v127 = vld [vmem:[#allocation3 + $0xe8] sm:$0xff]
    %v128 = vld [vmem:[#allocation3 + $0xf0] sm:$0xff]
    %v129 = vld [vmem:[#allocation3 + $0xf8] sm:$0xff]
    %v130 = vld [vmem:[#allocation5] sm:$0xff]
    %v131 = vld [vmem:[#allocation5 + $0x8] sm:$0xff]
    %v132 = vld [vmem:[#allocation5 + $0x10] sm:$0xff]
    %v133 = vld [vmem:[#allocation5 + $0x18] sm:$0xff]
    %v134 = vld [vmem:[#allocation5 + $0x20] sm:$0xff]
    %v135 = vld [vmem:[#allocation5 + $0x28] sm:$0xff]
    %v136 = vld [vmem:[#allocation5 + $0x30] sm:$0xff]
    %v137 = vld [vmem:[#allocation5 + $0x38] sm:$0xff]
    %v138 = vld [vmem:[#allocation5 + $0x40] sm:$0xff]
    %v139 = vld [vmem:[#allocation5 + $0x48] sm:$0xff]
    %v140 = vld [vmem:[#allocation5 + $0x50] sm:$0xff]
    %v141 = vld [vmem:[#allocation5 + $0x58] sm:$0xff]
    %v142 = vld [vmem:[#allocation5 + $0x60] sm:$0xff]
    %v143 = vld [vmem:[#allocation5 + $0x68] sm:$0xff]
    %v144 = vld [vmem:[#allocation5 + $0x70] sm:$0xff]
    %v145 = vld [vmem:[#allocation5 + $0x78] sm:$0xff]
    %v146 = vld [vmem:[#allocation5 + $0x80] sm:$0xff]
    %v147 = vld [vmem:[#allocation5 + $0x88] sm:$0xff]
    %v148 = vld [vmem:[#allocation5 + $0x90] sm:$0xff]
    %v149 = vld [vmem:[#allocation5 + $0x98] sm:$0xff]
    %v150 = vld [vmem:[#allocation5 + $0xa0] sm:$0xff]
    %v151 = vld [vmem:[#allocation5 + $0xa8] sm:$0xff]
    %v152 = vld [vmem:[#allocation5 + $0xb0] sm:$0xff]
    %v153 = vld [vmem:[#allocation5 + $0xb8] sm:$0xff]
    %v154 = vld [vmem:[#allocation5 + $0xc0] sm:$0xff]
    %v155 = vld [vmem:[#allocation5 + $0xc8] sm:$0xff]
    %v156 = vld [vmem:[#allocation5 + $0xd0] sm:$0xff]
    %v157 = vld [vmem:[#allocation5 + $0xd8] sm:$0xff]
    %v158 = vld [vmem:[#allocation5 + $0xe0] sm:$0xff]
    %v159 = vld [vmem:[#allocation5 + $0xe8] sm:$0xff]
    %v160 = vld [vmem:[#allocation5 + $0xf0] sm:$0xff]
    %v161 = vld [vmem:[#allocation5 + $0xf8] sm:$0xff]
    %v162 = vld [vmem:[%s3] sm:$0xf]
    %v164 = vlaneseq
    %v165 = vshrl.u32 %v164, 7
    %v166 = vsub.s32 0, %v165
    %v167 = vrot.slane %v162, %v166
    %v168 = vlaneseq
    %v169 = vshrl.u32 %v168, 7
    %v170 = vsub.s32 1, %v169
    %v171 = vrot.slane %v162, %v170
    %v172 = vlaneseq
    %v173 = vshrl.u32 %v172, 7
    %v174 = vsub.s32 2, %v173
    %v175 = vrot.slane %v162, %v174
    %v176 = vlaneseq
    %v177 = vshrl.u32 %v176, 7
    %v178 = vsub.s32 3, %v177
    %v179 = vrot.slane %v162, %v178
    %v192 = vunpack.c.l.b16 %v90
    %v193 = vunpack.c.l.b16 %v91
    %v194 = vunpack.c.l.b16 %v92
    %v195 = vunpack.c.l.b16 %v93
    %v196 = vunpack.c.l.b16 %v94
    %v197 = vunpack.c.l.b16 %v95
    %v198 = vunpack.c.l.b16 %v96
    %v199 = vunpack.c.l.b16 %v97
    %v200 = vpack.c.b16 %v193, %v192
    %v201 = vpack.c.b16 %v195, %v194
    %v202 = vpack.c.b16 %v197, %v196
    %v203 = vpack.c.b16 %v199, %v198
    %v240 = vunpack.c.l.b16 %v98
    %v241 = vunpack.c.h.b16 %v98
    %v242 = vunpack.c.l.b16 %v99
    %v243 = vunpack.c.h.b16 %v99
    %v244 = vunpack.c.l.b16 %v100
    %v245 = vunpack.c.h.b16 %v100
    %v246 = vunpack.c.l.b16 %v101
    %v247 = vunpack.c.h.b16 %v101
    %v248 = vunpack.c.l.b16 %v102
    %v249 = vunpack.c.h.b16 %v102
    %v250 = vunpack.c.l.b16 %v103
    %v251 = vunpack.c.h.b16 %v103
    %v252 = vunpack.c.l.b16 %v104
    %v253 = vunpack.c.h.b16 %v104
    %v254 = vunpack.c.l.b16 %v105
    %v255 = vunpack.c.h.b16 %v105
    %v256 = vunpack.c.l.b16 %v106
    %v257 = vunpack.c.h.b16 %v106
    %v258 = vunpack.c.l.b16 %v107
    %v259 = vunpack.c.h.b16 %v107
    %v260 = vunpack.c.l.b16 %v108
    %v261 = vunpack.c.h.b16 %v108
    %v262 = vunpack.c.l.b16 %v109
    %v263 = vunpack.c.h.b16 %v109
    %v264 = vunpack.c.l.b16 %v110
    %v265 = vunpack.c.h.b16 %v110
    %v266 = vunpack.c.l.b16 %v111
    %v267 = vunpack.c.h.b16 %v111
    %v268 = vunpack.c.l.b16 %v112
    %v269 = vunpack.c.h.b16 %v112
    %v270 = vunpack.c.l.b16 %v113
    %v271 = vunpack.c.h.b16 %v113
    %v272 = vunpack.c.l.b16 %v114
    %v273 = vunpack.c.h.b16 %v114
    %v274 = vunpack.c.l.b16 %v115
    %v275 = vunpack.c.h.b16 %v115
    %v276 = vunpack.c.l.b16 %v116
    %v277 = vunpack.c.h.b16 %v116
    %v278 = vunpack.c.l.b16 %v117
    %v279 = vunpack.c.h.b16 %v117
    %v280 = vunpack.c.l.b16 %v118
    %v281 = vunpack.c.h.b16 %v118
    %v282 = vunpack.c.l.b16 %v119
    %v283 = vunpack.c.h.b16 %v119
    %v284 = vunpack.c.l.b16 %v120
    %v285 = vunpack.c.h.b16 %v120
    %v286 = vunpack.c.l.b16 %v121
    %v287 = vunpack.c.h.b16 %v121
    %v288 = vunpack.c.l.b16 %v122
    %v289 = vunpack.c.h.b16 %v122
    %v290 = vunpack.c.l.b16 %v123
    %v291 = vunpack.c.h.b16 %v123
    %v292 = vunpack.c.l.b16 %v124
    %v293 = vunpack.c.h.b16 %v124
    %v294 = vunpack.c.l.b16 %v125
    %v295 = vunpack.c.h.b16 %v125
    %v296 = vunpack.c.l.b16 %v126
    %v297 = vunpack.c.h.b16 %v126
    %v298 = vunpack.c.l.b16 %v127
    %v299 = vunpack.c.h.b16 %v127
    %v300 = vunpack.c.l.b16 %v128
    %v301 = vunpack.c.h.b16 %v128
    %v302 = vunpack.c.l.b16 %v129
    %v303 = vunpack.c.h.b16 %v129
    %v304 = vpack.c.b16 %v244, %v240
    %v305 = vpack.c.b16 %v245, %v241
    %v306 = vpack.c.b16 %v246, %v242
    %v307 = vpack.c.b16 %v247, %v243
    %v308 = vpack.c.b16 %v252, %v248
    %v309 = vpack.c.b16 %v253, %v249
    %v310 = vpack.c.b16 %v254, %v250
    %v311 = vpack.c.b16 %v255, %v251
    %v312 = vpack.c.b16 %v260, %v256
    %v313 = vpack.c.b16 %v261, %v257
    %v314 = vpack.c.b16 %v262, %v258
    %v315 = vpack.c.b16 %v263, %v259
    %v316 = vpack.c.b16 %v268, %v264
    %v317 = vpack.c.b16 %v269, %v265
    %v318 = vpack.c.b16 %v270, %v266
    %v319 = vpack.c.b16 %v271, %v267
    %v320 = vpack.c.b16 %v276, %v272
    %v321 = vpack.c.b16 %v277, %v273
    %v322 = vpack.c.b16 %v278, %v274
    %v323 = vpack.c.b16 %v279, %v275
    %v324 = vpack.c.b16 %v284, %v280
    %v325 = vpack.c.b16 %v285, %v281
    %v326 = vpack.c.b16 %v286, %v282
    %v327 = vpack.c.b16 %v287, %v283
    %v328 = vpack.c.b16 %v292, %v288
    %v329 = vpack.c.b16 %v293, %v289
    %v330 = vpack.c.b16 %v294, %v290
    %v331 = vpack.c.b16 %v295, %v291
    %v332 = vpack.c.b16 %v300, %v296
    %v333 = vpack.c.b16 %v301, %v297
    %v334 = vpack.c.b16 %v302, %v298
    %v335 = vpack.c.b16 %v303, %v299
    %368 = vmatprep.subr.bf16.mxu0 %v305
    %369 = vmatpush1.bf16.msra.mxu0 %v304
    %370 = vmatprep.subr.bf16.mxu0 %v309
    %371 = vmatpush1.bf16.msra.mxu0 %v308
    %372 = vmatprep.subr.bf16.mxu0 %v313
    %373 = vmatpush1.bf16.msra.mxu0 %v312
    %374 = vmatprep.subr.bf16.mxu0 %v317
    %375 = vmatpush1.bf16.msra.mxu0 %v316
    %376 = vmatprep.subr.bf16.mxu0 %v321
    %377 = vmatpush1.bf16.msra.mxu0 %v320
    %378 = vmatprep.subr.bf16.mxu0 %v325
    %379 = vmatpush1.bf16.msra.mxu0 %v324
    %380 = vmatprep.subr.bf16.mxu0 %v329
    %381 = vmatpush1.bf16.msra.mxu0 %v328
    %382 = vmatprep.subr.bf16.mxu0 %v333
    %383 = vmatpush1.bf16.msra.mxu0 %v332
    %384 = vmatprep.subr.bf16.mxu0 0
    %385 = vmatpush1.bf16.msra.mxu0 0
    %386 = vmatprep.subr.bf16.mxu0 0
    %387 = vmatpush1.bf16.msra.mxu0 0
    %388 = vmatprep.subr.bf16.mxu0 0
    %389 = vmatpush1.bf16.msra.mxu0 0
    %390 = vmatprep.subr.bf16.mxu0 0
    %391 = vmatpush1.bf16.msra.mxu0 0
    %392 = vmatprep.subr.bf16.mxu0 0
    %393 = vmatpush1.bf16.msra.mxu0 0
    %394 = vmatprep.subr.bf16.mxu0 0
    %395 = vmatpush1.bf16.msra.mxu0 0
    %396 = vmatprep.subr.bf16.mxu0 0
    %397 = vmatpush1.bf16.msra.mxu0 0
    %398 = vmatprep.subr.bf16.mxu0 0
    %399 = vmatpush1.bf16.msra.mxu0 0
    %400 = vmatprep.mubr.bf16.mxu0 0
    %401 = vmatmul.mubr.bf16.gmra.mrb[0].mxu0 %v200
    %v402 = vpop.f32.mrb[0].mxu0
    %v403 = vadd.f32 %v167, %v402
    %v404 = vpop.f32.mrb[0].mxu0
    %v405 = vadd.f32 %v171, %v404
    %v406 = vpop.f32.mrb[0].mxu0
    %v407 = vadd.f32 %v167, %v406
    %v408 = vpop.f32.mrb[0].mxu0
    %v409 = vadd.f32 %v171, %v408
    %410 = vmatprep.mubr.bf16.mxu0 0
    %411 = vmatmul.mubr.bf16.gmra.mrb[0].mxu0 %v201
    %v412 = vpop.f32.mrb[0].mxu0
    %v413 = vadd.f32 %v167, %v412
    %v414 = vpop.f32.mrb[0].mxu0
    %v415 = vadd.f32 %v171, %v414
    %v416 = vpop.f32.mrb[0].mxu0
    %v417 = vadd.f32 %v167, %v416
    %v418 = vpop.f32.mrb[0].mxu0
    %v419 = vadd.f32 %v171, %v418
    %420 = vmatprep.mubr.bf16.mxu0 0
    %421 = vmatmul.mubr.bf16.gmra.mrb[0].mxu0 %v202
    %v422 = vpop.f32.mrb[0].mxu0
    %v423 = vadd.f32 %v167, %v422
    %v424 = vpop.f32.mrb[0].mxu0
    %v425 = vadd.f32 %v171, %v424
    %v426 = vpop.f32.mrb[0].mxu0
    %v427 = vadd.f32 %v167, %v426
    %v428 = vpop.f32.mrb[0].mxu0
    %v429 = vadd.f32 %v171, %v428
    %430 = vmatprep.mubr.bf16.mxu0 0
    %431 = vmatmul.mubr.bf16.gmra.mrb[0].mxu0 %v203
    %v432 = vpop.f32.mrb[0].mxu0
    %v433 = vadd.f32 %v167, %v432
    %v434 = vpop.f32.mrb[0].mxu0
    %v435 = vadd.f32 %v171, %v434
    %v436 = vpop.f32.mrb[0].mxu0
    %v437 = vadd.f32 %v167, %v436
    %v438 = vpop.f32.mrb[0].mxu0
    %v439 = vadd.f32 %v171, %v438
    %440 = vdwg.mxu0
    %441 = vmatprep.subr.bf16.mxu0 %v307
    %442 = vmatpush1.bf16.msra.mxu0 %v306
    %443 = vmatprep.subr.bf16.mxu0 %v311
    %444 = vmatpush1.bf16.msra.mxu0 %v310
    %445 = vmatprep.subr.bf16.mxu0 %v315
    %446 = vmatpush1.bf16.msra.mxu0 %v314
    %447 = vmatprep.subr.bf16.mxu0 %v319
    %448 = vmatpush1.bf16.msra.mxu0 %v318
    %449 = vmatprep.subr.bf16.mxu0 %v323
    %450 = vmatpush1.bf16.msra.mxu0 %v322
    %451 = vmatprep.subr.bf16.mxu0 %v327
    %452 = vmatpush1.bf16.msra.mxu0 %v326
    %453 = vmatprep.subr.bf16.mxu0 %v331
    %454 = vmatpush1.bf16.msra.mxu0 %v330
    %455 = vmatprep.subr.bf16.mxu0 %v335
    %456 = vmatpush1.bf16.msra.mxu0 %v334
    %457 = vmatprep.subr.bf16.mxu0 0
    %458 = vmatpush1.bf16.msra.mxu0 0
    %459 = vmatprep.subr.bf16.mxu0 0
    %460 = vmatpush1.bf16.msra.mxu0 0
    %461 = vmatprep.subr.bf16.mxu0 0
    %462 = vmatpush1.bf16.msra.mxu0 0
    %463 = vmatprep.subr.bf16.mxu0 0
    %464 = vmatpush1.bf16.msra.mxu0 0
    %465 = vmatprep.subr.bf16.mxu0 0
    %466 = vmatpush1.bf16.msra.mxu0 0
    %467 = vmatprep.subr.bf16.mxu0 0
    %468 = vmatpush1.bf16.msra.mxu0 0
    %469 = vmatprep.subr.bf16.mxu0 0
    %470 = vmatpush1.bf16.msra.mxu0 0
    %471 = vmatprep.subr.bf16.mxu0 0
    %472 = vmatpush1.bf16.msra.mxu0 0
    %473 = vmatprep.mubr.bf16.mxu0 0
    %474 = vmatmul.mubr.bf16.gmra.mrb[0].mxu0 %v200
    %v475 = vpop.f32.mrb[0].mxu0
    %v476 = vadd.f32 %v175, %v475
    %v477 = vpop.f32.mrb[0].mxu0
    %v478 = vadd.f32 %v179, %v477
    %v479 = vpop.f32.mrb[0].mxu0
    %v480 = vadd.f32 %v175, %v479
    %v481 = vpop.f32.mrb[0].mxu0
    %v482 = vadd.f32 %v179, %v481
    %483 = vmatprep.mubr.bf16.mxu0 0
    %484 = vmatmul.mubr.bf16.gmra.mrb[0].mxu0 %v201
    %v485 = vpop.f32.mrb[0].mxu0
    %v486 = vadd.f32 %v175, %v485
    %v487 = vpop.f32.mrb[0].mxu0
    %v488 = vadd.f32 %v179, %v487
    %v489 = vpop.f32.mrb[0].mxu0
    %v490 = vadd.f32 %v175, %v489
    %v491 = vpop.f32.mrb[0].mxu0
    %v492 = vadd.f32 %v179, %v491
    %493 = vmatprep.mubr.bf16.mxu0 0
    %494 = vmatmul.mubr.bf16.gmra.mrb[0].mxu0 %v202
    %v495 = vpop.f32.mrb[0].mxu0
    %v496 = vadd.f32 %v175, %v495
    %v497 = vpop.f32.mrb[0].mxu0
    %v498 = vadd.f32 %v179, %v497
    %v499 = vpop.f32.mrb[0].mxu0
    %v500 = vadd.f32 %v175, %v499
    %v501 = vpop.f32.mrb[0].mxu0
    %v502 = vadd.f32 %v179, %v501
    %503 = vmatprep.mubr.bf16.mxu0 0
    %504 = vmatmul.mubr.bf16.gmra.mrb[0].mxu0 %v203
    %v505 = vpop.f32.mrb[0].mxu0
    %v506 = vadd.f32 %v175, %v505
    %v507 = vpop.f32.mrb[0].mxu0
    %v508 = vadd.f32 %v179, %v507
    %v509 = vpop.f32.mrb[0].mxu0
    %v510 = vadd.f32 %v175, %v509
    %v511 = vpop.f32.mrb[0].mxu0
    %v512 = vadd.f32 %v179, %v511
    %513 = vdwg.mxu0
    %v546 = vunpack.c.l.b16 %v130
    %v547 = vunpack.c.h.b16 %v130
    %v548 = vunpack.c.l.b16 %v131
    %v549 = vunpack.c.h.b16 %v131
    %v550 = vunpack.c.l.b16 %v132
    %v551 = vunpack.c.h.b16 %v132
    %v552 = vunpack.c.l.b16 %v133
    %v553 = vunpack.c.h.b16 %v133
    %v554 = vunpack.c.l.b16 %v134
    %v555 = vunpack.c.h.b16 %v134
    %v556 = vunpack.c.l.b16 %v135
    %v557 = vunpack.c.h.b16 %v135
    %v558 = vunpack.c.l.b16 %v136
    %v559 = vunpack.c.h.b16 %v136
    %v560 = vunpack.c.l.b16 %v137
    %v561 = vunpack.c.h.b16 %v137
    %v562 = vunpack.c.l.b16 %v138
    %v563 = vunpack.c.h.b16 %v138
    %v564 = vunpack.c.l.b16 %v139
    %v565 = vunpack.c.h.b16 %v139
    %v566 = vunpack.c.l.b16 %v140
    %v567 = vunpack.c.h.b16 %v140
    %v568 = vunpack.c.l.b16 %v141
    %v569 = vunpack.c.h.b16 %v141
    %v570 = vunpack.c.l.b16 %v142
    %v571 = vunpack.c.h.b16 %v142
    %v572 = vunpack.c.l.b16 %v143
    %v573 = vunpack.c.h.b16 %v143
    %v574 = vunpack.c.l.b16 %v144
    %v575 = vunpack.c.h.b16 %v144
    %v576 = vunpack.c.l.b16 %v145
    %v577 = vunpack.c.h.b16 %v145
    %v578 = vunpack.c.l.b16 %v146
    %v579 = vunpack.c.h.b16 %v146
    %v580 = vunpack.c.l.b16 %v147
    %v581 = vunpack.c.h.b16 %v147
    %v582 = vunpack.c.l.b16 %v148
    %v583 = vunpack.c.h.b16 %v148
    %v584 = vunpack.c.l.b16 %v149
    %v585 = vunpack.c.h.b16 %v149
    %v586 = vunpack.c.l.b16 %v150
    %v587 = vunpack.c.h.b16 %v150
    %v588 = vunpack.c.l.b16 %v151
    %v589 = vunpack.c.h.b16 %v151
    %v590 = vunpack.c.l.b16 %v152
    %v591 = vunpack.c.h.b16 %v152
    %v592 = vunpack.c.l.b16 %v153
    %v593 = vunpack.c.h.b16 %v153
    %v594 = vunpack.c.l.b16 %v154
    %v595 = vunpack.c.h.b16 %v154
    %v596 = vunpack.c.l.b16 %v155
    %v597 = vunpack.c.h.b16 %v155
    %v598 = vunpack.c.l.b16 %v156
    %v599 = vunpack.c.h.b16 %v156
    %v600 = vunpack.c.l.b16 %v157
    %v601 = vunpack.c.h.b16 %v157
    %v602 = vunpack.c.l.b16 %v158
    %v603 = vunpack.c.h.b16 %v158
    %v604 = vunpack.c.l.b16 %v159
    %v605 = vunpack.c.h.b16 %v159
    %v606 = vunpack.c.l.b16 %v160
    %v607 = vunpack.c.h.b16 %v160
    %v608 = vunpack.c.l.b16 %v161
    %v609 = vunpack.c.h.b16 %v161
    %v610 = vpack.c.b16 %v550, %v546
    %v611 = vpack.c.b16 %v551, %v547
    %v612 = vpack.c.b16 %v552, %v548
    %v613 = vpack.c.b16 %v553, %v549
    %v614 = vpack.c.b16 %v558, %v554
    %v615 = vpack.c.b16 %v559, %v555
    %v616 = vpack.c.b16 %v560, %v556
    %v617 = vpack.c.b16 %v561, %v557
    %v618 = vpack.c.b16 %v566, %v562
    %v619 = vpack.c.b16 %v567, %v563
    %v620 = vpack.c.b16 %v568, %v564
    %v621 = vpack.c.b16 %v569, %v565
    %v622 = vpack.c.b16 %v574, %v570
    %v623 = vpack.c.b16 %v575, %v571
    %v624 = vpack.c.b16 %v576, %v572
    %v625 = vpack.c.b16 %v577, %v573
    %v626 = vpack.c.b16 %v582, %v578
    %v627 = vpack.c.b16 %v583, %v579
    %v628 = vpack.c.b16 %v584, %v580
    %v629 = vpack.c.b16 %v585, %v581
    %v630 = vpack.c.b16 %v590, %v586
    %v631 = vpack.c.b16 %v591, %v587
    %v632 = vpack.c.b16 %v592, %v588
    %v633 = vpack.c.b16 %v593, %v589
    %v634 = vpack.c.b16 %v598, %v594
    %v635 = vpack.c.b16 %v599, %v595
    %v636 = vpack.c.b16 %v600, %v596
    %v637 = vpack.c.b16 %v601, %v597
    %v638 = vpack.c.b16 %v606, %v602
    %v639 = vpack.c.b16 %v607, %v603
    %v640 = vpack.c.b16 %v608, %v604
    %v641 = vpack.c.b16 %v609, %v605
    %674 = vmatprep.subr.bf16.mxu0 %v611
    %675 = vmatpush1.bf16.msra.mxu0 %v610
    %676 = vmatprep.subr.bf16.mxu0 %v615
    %677 = vmatpush1.bf16.msra.mxu0 %v614
    %678 = vmatprep.subr.bf16.mxu0 %v619
    %679 = vmatpush1.bf16.msra.mxu0 %v618
    %680 = vmatprep.subr.bf16.mxu0 %v623
    %681 = vmatpush1.bf16.msra.mxu0 %v622
    %682 = vmatprep.subr.bf16.mxu0 %v627
    %683 = vmatpush1.bf16.msra.mxu0 %v626
    %684 = vmatprep.subr.bf16.mxu0 %v631
    %685 = vmatpush1.bf16.msra.mxu0 %v630
    %686 = vmatprep.subr.bf16.mxu0 %v635
    %687 = vmatpush1.bf16.msra.mxu0 %v634
    %688 = vmatprep.subr.bf16.mxu0 %v639
    %689 = vmatpush1.bf16.msra.mxu0 %v638
    %690 = vmatprep.subr.bf16.mxu0 0
    %691 = vmatpush1.bf16.msra.mxu0 0
    %692 = vmatprep.subr.bf16.mxu0 0
    %693 = vmatpush1.bf16.msra.mxu0 0
    %694 = vmatprep.subr.bf16.mxu0 0
    %695 = vmatpush1.bf16.msra.mxu0 0
    %696 = vmatprep.subr.bf16.mxu0 0
    %697 = vmatpush1.bf16.msra.mxu0 0
    %698 = vmatprep.subr.bf16.mxu0 0
    %699 = vmatpush1.bf16.msra.mxu0 0
    %700 = vmatprep.subr.bf16.mxu0 0
    %701 = vmatpush1.bf16.msra.mxu0 0
    %702 = vmatprep.subr.bf16.mxu0 0
    %703 = vmatpush1.bf16.msra.mxu0 0
    %704 = vmatprep.subr.bf16.mxu0 0
    %705 = vmatpush1.bf16.msra.mxu0 0
    %706 = vmatprep.mubr.bf16.mxu0 0
    %707 = vmatmul.mubr.bf16.gmra.mrb[0].mxu0 0
    %v708 = vpop.f32.mrb[0].mxu0
    %v709 = vadd.f32 0.0, %v708
    %v710 = vpop.f32.mrb[0].mxu0
    %v711 = vadd.f32 0.0, %v710
    %v712 = vpop.f32.mrb[0].mxu0
    %v713 = vpop.f32.mrb[0].mxu0
    %714 = vdwg.mxu0
    %715 = vmatprep.subr.bf16.mxu0 %v613
    %716 = vmatpush1.bf16.msra.mxu0 %v612
    %717 = vmatprep.subr.bf16.mxu0 %v617
    %718 = vmatpush1.bf16.msra.mxu0 %v616
    %719 = vmatprep.subr.bf16.mxu0 %v621
    %720 = vmatpush1.bf16.msra.mxu0 %v620
    %721 = vmatprep.subr.bf16.mxu0 %v625
    %722 = vmatpush1.bf16.msra.mxu0 %v624
    %723 = vmatprep.subr.bf16.mxu0 %v629
    %724 = vmatpush1.bf16.msra.mxu0 %v628
    %725 = vmatprep.subr.bf16.mxu0 %v633
    %726 = vmatpush1.bf16.msra.mxu0 %v632
    %727 = vmatprep.subr.bf16.mxu0 %v637
    %728 = vmatpush1.bf16.msra.mxu0 %v636
    %729 = vmatprep.subr.bf16.mxu0 %v641
    %730 = vmatpush1.bf16.msra.mxu0 %v640
    %731 = vmatprep.subr.bf16.mxu0 0
    %732 = vmatpush1.bf16.msra.mxu0 0
    %733 = vmatprep.subr.bf16.mxu0 0
    %734 = vmatpush1.bf16.msra.mxu0 0
    %735 = vmatprep.subr.bf16.mxu0 0
    %736 = vmatpush1.bf16.msra.mxu0 0
    %737 = vmatprep.subr.bf16.mxu0 0
    %738 = vmatpush1.bf16.msra.mxu0 0
    %739 = vmatprep.subr.bf16.mxu0 0
    %740 = vmatpush1.bf16.msra.mxu0 0
    %741 = vmatprep.subr.bf16.mxu0 0
    %742 = vmatpush1.bf16.msra.mxu0 0
    %743 = vmatprep.subr.bf16.mxu0 0
    %744 = vmatpush1.bf16.msra.mxu0 0
    %745 = vmatprep.subr.bf16.mxu0 0
    %746 = vmatpush1.bf16.msra.mxu0 0
    %747 = vmatprep.mubr.bf16.mxu0 0
    %748 = vmatmul.mubr.bf16.gmra.mrb[0].mxu0 0
    %v749 = vpop.f32.mrb[0].mxu0
    %v750 = vadd.f32 0.0, %v749
    %v751 = vpop.f32.mrb[0].mxu0
    %v752 = vadd.f32 0.0, %v751
    %v753 = vpop.f32.mrb[0].mxu0
    %v754 = vpop.f32.mrb[0].mxu0
    %755 = vdwg.mxu0
    %v760 = vrot.slane %v709, 1
    %v761 = vrot.slane %v711, 1
    %v762 = vrot.slane %v750, 1
    %v763 = vrot.slane %v752, 1
    %v764 = vrot.slane %v709, 2
    %v765 = vrot.slane %v711, 2
    %v766 = vrot.slane %v750, 2
    %v767 = vrot.slane %v752, 2
    %v768 = vrot.slane %v709, 3
    %v769 = vrot.slane %v711, 3
    %v770 = vrot.slane %v750, 3
    %v771 = vrot.slane %v752, 3
    %v772 = vrot.slane %v709, 4
    %v773 = vrot.slane %v711, 4
    %v774 = vrot.slane %v750, 4
    %v775 = vrot.slane %v752, 4
    %v776 = vrot.slane %v709, 5
    %v777 = vrot.slane %v711, 5
    %v778 = vrot.slane %v750, 5
    %v779 = vrot.slane %v752, 5
    %v780 = vrot.slane %v709, 6
    %v781 = vrot.slane %v711, 6
    %v782 = vrot.slane %v750, 6
    %v783 = vrot.slane %v752, 6
    %v784 = vrot.slane %v709, 7
    %v785 = vrot.slane %v711, 7
    %v786 = vrot.slane %v750, 7
    %v787 = vrot.slane %v752, 7
    %v820 = vadd.f32 %v403, %v709
    %v821 = vadd.f32 %v405, %v711
    %v822 = vadd.f32 %v476, %v750
    %v823 = vadd.f32 %v478, %v752
    %v824 = vadd.f32 %v407, %v760
    %v825 = vadd.f32 %v409, %v761
    %v826 = vadd.f32 %v480, %v762
    %v827 = vadd.f32 %v482, %v763
    %v828 = vadd.f32 %v413, %v764
    %v829 = vadd.f32 %v415, %v765
    %v830 = vadd.f32 %v486, %v766
    %v831 = vadd.f32 %v488, %v767
    %v832 = vadd.f32 %v417, %v768
    %v833 = vadd.f32 %v419, %v769
    %v834 = vadd.f32 %v490, %v770
    %v835 = vadd.f32 %v492, %v771
    %v836 = vadd.f32 %v423, %v772
    %v837 = vadd.f32 %v425, %v773
    %v838 = vadd.f32 %v496, %v774
    %v839 = vadd.f32 %v498, %v775
    %v840 = vadd.f32 %v427, %v776
    %v841 = vadd.f32 %v429, %v777
    %v842 = vadd.f32 %v500, %v778
    %v843 = vadd.f32 %v502, %v779
    %v844 = vadd.f32 %v433, %v780
    %v845 = vadd.f32 %v435, %v781
    %v846 = vadd.f32 %v506, %v782
    %v847 = vadd.f32 %v508, %v783
    %v848 = vadd.f32 %v437, %v784
    %v849 = vadd.f32 %v439, %v785
    %v850 = vadd.f32 %v510, %v786
    %v851 = vadd.f32 %v512, %v787
    %v852 = vxor.u32 %v820, 2147483648
    %v853 = vxor.u32 %v824, 2147483648
    %v854 = vxor.u32 %v828, 2147483648
    %v855 = vxor.u32 %v832, 2147483648
    %v856 = vxor.u32 %v836, 2147483648
    %v857 = vxor.u32 %v840, 2147483648
    %v858 = vxor.u32 %v844, 2147483648
    %v859 = vxor.u32 %v848, 2147483648
    %v860 = vmul.f32 %v852, 1.442695
    %v861 = vpow.pop %v860
    %v862 = vmul.f32 %v853, 1.442695
    %v863 = vpow.pop %v862
    %v864 = vmul.f32 %v854, 1.442695
    %v865 = vpow.pop %v864
    %v866 = vmul.f32 %v855, 1.442695
    %v867 = vpow.pop %v866
    %v868 = vmul.f32 %v856, 1.442695
    %v869 = vpow.pop %v868
    %v870 = vmul.f32 %v857, 1.442695
    %v871 = vpow.pop %v870
    %v872 = vmul.f32 %v858, 1.442695
    %v873 = vpow.pop %v872
    %v874 = vmul.f32 %v859, 1.442695
    %v875 = vpow.pop %v874
    %v876 = vadd.f32 %v861, 1.0
    %v877 = vadd.f32 %v863, 1.0
    %v878 = vadd.f32 %v865, 1.0
    %v879 = vadd.f32 %v867, 1.0
    %v880 = vadd.f32 %v869, 1.0
    %v881 = vadd.f32 %v871, 1.0
    %v882 = vadd.f32 %v873, 1.0
    %v883 = vadd.f32 %v875, 1.0
    %v884 = vrcp.pop %v876
    %v885 = vmul.f32 1.0, %v884
    %v886 = vrcp.pop %v877
    %v887 = vmul.f32 1.0, %v886
    %v888 = vrcp.pop %v878
    %v889 = vmul.f32 1.0, %v888
    %v890 = vrcp.pop %v879
    %v891 = vmul.f32 1.0, %v890
    %v892 = vrcp.pop %v880
    %v893 = vmul.f32 1.0, %v892
    %v894 = vrcp.pop %v881
    %v895 = vmul.f32 1.0, %v894
    %v896 = vrcp.pop %v882
    %v897 = vmul.f32 1.0, %v896
    %v898 = vrcp.pop %v883
    %v899 = vmul.f32 1.0, %v898
    %v900 = vxor.u32 %v821, 2147483648
    %v901 = vxor.u32 %v825, 2147483648
    %v902 = vxor.u32 %v829, 2147483648
    %v903 = vxor.u32 %v833, 2147483648
    %v904 = vxor.u32 %v837, 2147483648
    %v905 = vxor.u32 %v841, 2147483648
    %v906 = vxor.u32 %v845, 2147483648
    %v907 = vxor.u32 %v849, 2147483648
    %v908 = vmul.f32 %v900, 1.442695
    %v909 = vpow.pop %v908
    %v910 = vmul.f32 %v901, 1.442695
    %v911 = vpow.pop %v910
    %v912 = vmul.f32 %v902, 1.442695
    %v913 = vpow.pop %v912
    %v914 = vmul.f32 %v903, 1.442695
    %v915 = vpow.pop %v914
    %v916 = vmul.f32 %v904, 1.442695
    %v917 = vpow.pop %v916
    %v918 = vmul.f32 %v905, 1.442695
    %v919 = vpow.pop %v918
    %v920 = vmul.f32 %v906, 1.442695
    %v921 = vpow.pop %v920
    %v922 = vmul.f32 %v907, 1.442695
    %v923 = vpow.pop %v922
    %v924 = vadd.f32 %v909, 1.0
    %v925 = vadd.f32 %v911, 1.0
    %v926 = vadd.f32 %v913, 1.0
    %v927 = vadd.f32 %v915, 1.0
    %v928 = vadd.f32 %v917, 1.0
    %v929 = vadd.f32 %v919, 1.0
    %v930 = vadd.f32 %v921, 1.0
    %v931 = vadd.f32 %v923, 1.0
    %v932 = vrcp.pop %v924
    %v933 = vmul.f32 1.0, %v932
    %v934 = vrcp.pop %v925
    %v935 = vmul.f32 1.0, %v934
    %v936 = vrcp.pop %v926
    %v937 = vmul.f32 1.0, %v936
    %v938 = vrcp.pop %v927
    %v939 = vmul.f32 1.0, %v938
    %v940 = vrcp.pop %v928
    %v941 = vmul.f32 1.0, %v940
    %v942 = vrcp.pop %v929
    %v943 = vmul.f32 1.0, %v942
    %v944 = vrcp.pop %v930
    %v945 = vmul.f32 1.0, %v944
    %v946 = vrcp.pop %v931
    %v947 = vmul.f32 1.0, %v946
    %v948 = vtanh.pop %v822
    %v949 = vtanh.pop %v826
    %v950 = vtanh.pop %v830
    %v951 = vtanh.pop %v834
    %v952 = vtanh.pop %v838
    %v953 = vtanh.pop %v842
    %v954 = vtanh.pop %v846
    %v955 = vtanh.pop %v850
    %v956 = vxor.u32 %v823, 2147483648
    %v957 = vxor.u32 %v827, 2147483648
    %v958 = vxor.u32 %v831, 2147483648
    %v959 = vxor.u32 %v835, 2147483648
    %v960 = vxor.u32 %v839, 2147483648
    %v961 = vxor.u32 %v843, 2147483648
    %v962 = vxor.u32 %v847, 2147483648
    %v963 = vxor.u32 %v851, 2147483648
    %v964 = vmul.f32 %v956, 1.442695
    %v965 = vpow.pop %v964
    %v966 = vmul.f32 %v957, 1.442695
    %v967 = vpow.pop %v966
    %v968 = vmul.f32 %v958, 1.442695
    %v969 = vpow.pop %v968
    %v970 = vmul.f32 %v959, 1.442695
    %v971 = vpow.pop %v970
    %v972 = vmul.f32 %v960, 1.442695
    %v973 = vpow.pop %v972
    %v974 = vmul.f32 %v961, 1.442695
    %v975 = vpow.pop %v974
    %v976 = vmul.f32 %v962, 1.442695
    %v977 = vpow.pop %v976
    %v978 = vmul.f32 %v963, 1.442695
    %v979 = vpow.pop %v978
    %v980 = vadd.f32 %v965, 1.0
    %v981 = vadd.f32 %v967, 1.0
    %v982 = vadd.f32 %v969, 1.0
    %v983 = vadd.f32 %v971, 1.0
    %v984 = vadd.f32 %v973, 1.0
    %v985 = vadd.f32 %v975, 1.0
    %v986 = vadd.f32 %v977, 1.0
    %v987 = vadd.f32 %v979, 1.0
    %v988 = vrcp.pop %v980
    %v989 = vmul.f32 1.0, %v988
    %v990 = vrcp.pop %v981
    %v991 = vmul.f32 1.0, %v990
    %v992 = vrcp.pop %v982
    %v993 = vmul.f32 1.0, %v992
    %v994 = vrcp.pop %v983
    %v995 = vmul.f32 1.0, %v994
    %v996 = vrcp.pop %v984
    %v997 = vmul.f32 1.0, %v996
    %v998 = vrcp.pop %v985
    %v999 = vmul.f32 1.0, %v998
    %v1000 = vrcp.pop %v986
    %v1001 = vmul.f32 1.0, %v1000
    %v1002 = vrcp.pop %v987
    %v1003 = vmul.f32 1.0, %v1002
    %v1004 = vmul.f32 %v933, 0.0
    %v1005 = vmul.f32 %v935, 0.0
    %v1006 = vmul.f32 %v937, 0.0
    %v1007 = vmul.f32 %v939, 0.0
    %v1008 = vmul.f32 %v941, 0.0
    %v1009 = vmul.f32 %v943, 0.0
    %v1010 = vmul.f32 %v945, 0.0
    %v1011 = vmul.f32 %v947, 0.0
    %v1012 = vmul.f32 %v885, %v948
    %v1013 = vmul.f32 %v887, %v949
    %v1014 = vmul.f32 %v889, %v950
    %v1015 = vmul.f32 %v891, %v951
    %v1016 = vmul.f32 %v893, %v952
    %v1017 = vmul.f32 %v895, %v953
    %v1018 = vmul.f32 %v897, %v954
    %v1019 = vmul.f32 %v899, %v955
    %v1020 = vadd.f32 %v1004, %v1012
    %v1021 = vadd.f32 %v1005, %v1013
    %v1022 = vadd.f32 %v1006, %v1014
    %v1023 = vadd.f32 %v1007, %v1015
    %v1024 = vadd.f32 %v1008, %v1016
    %v1025 = vadd.f32 %v1009, %v1017
    %v1026 = vadd.f32 %v1010, %v1018
    %v1027 = vadd.f32 %v1011, %v1019
    %v1028 = vtanh.pop %v1020
    %v1029 = vtanh.pop %v1021
    %v1030 = vtanh.pop %v1022
    %v1031 = vtanh.pop %v1023
    %v1032 = vtanh.pop %v1024
    %v1033 = vtanh.pop %v1025
    %v1034 = vtanh.pop %v1026
    %v1035 = vtanh.pop %v1027
    %v1036 = vmul.f32 %v989, %v1028
    %v1037 = vmul.f32 %v991, %v1029
    %v1038 = vmul.f32 %v993, %v1030
    %v1039 = vmul.f32 %v995, %v1031
    %v1040 = vmul.f32 %v997, %v1032
    %v1041 = vmul.f32 %v999, %v1033
    %v1042 = vmul.f32 %v1001, %v1034
    %v1043 = vmul.f32 %v1003, %v1035
    %v1044 = vpack.c.bf16 %v1036, %v1036
    %v1045 = vpack.c.bf16 %v1037, %v1037
    %v1046 = vpack.c.bf16 %v1038, %v1038
    %v1047 = vpack.c.bf16 %v1039, %v1039
    %v1048 = vpack.c.bf16 %v1040, %v1040
    %v1049 = vpack.c.bf16 %v1041, %v1041
    %v1050 = vpack.c.bf16 %v1042, %v1042
    %v1051 = vpack.c.bf16 %v1043, %v1043
    %v1060 = vunpack.c.l.b16 %v1044
    %v1061 = vunpack.c.l.b16 %v1045
    %v1062 = vunpack.c.l.b16 %v1046
    %v1063 = vunpack.c.l.b16 %v1047
    %v1064 = vunpack.c.l.b16 %v1048
    %v1065 = vunpack.c.l.b16 %v1049
    %v1066 = vunpack.c.l.b16 %v1050
    %v1067 = vunpack.c.l.b16 %v1051
    %v1068 = vrot.slane %v1061, 7
    %vm1069 = vcmask 1041409
    %v1070 = vsel %vm1069, %v1068, %v1060
    %v1071 = vrot.slane %v1062, 6
    %vm1072 = vcmask 1042434
    %v1073 = vsel %vm1072, %v1071, %v1070
    %v1074 = vrot.slane %v1063, 5
    %vm1075 = vcmask 1043459
    %v1076 = vsel %vm1075, %v1074, %v1073
    %v1077 = vrot.slane %v1064, 4
    %vm1078 = vcmask 1044484
    %v1079 = vsel %vm1078, %v1077, %v1076
    %v1080 = vrot.slane %v1065, 3
    %vm1081 = vcmask 1045509
    %v1082 = vsel %vm1081, %v1080, %v1079
    %v1083 = vrot.slane %v1066, 2
    %vm1084 = vcmask 1046534
    %v1085 = vsel %vm1084, %v1083, %v1082
    %v1086 = vrot.slane %v1067, 1
    %vm1087 = vcmask 1047559
    %v1088 = vsel %vm1087, %v1086, %v1085
    %v1089 = vpack.c.b16 %v1088, %v1088
    %1091 = vmatprep.subr.bf16.mxu0 %v611
    %1092 = vmatpush1.bf16.msra.mxu0 %v610
    %1093 = vmatprep.subr.bf16.mxu0 %v615
    %1094 = vmatpush1.bf16.msra.mxu0 %v614
    %1095 = vmatprep.subr.bf16.mxu0 %v619
    %1096 = vmatpush1.bf16.msra.mxu0 %v618
    %1097 = vmatprep.subr.bf16.mxu0 %v623
    %1098 = vmatpush1.bf16.msra.mxu0 %v622
    %1099 = vmatprep.subr.bf16.mxu0 %v627
    %1100 = vmatpush1.bf16.msra.mxu0 %v626
    %1101 = vmatprep.subr.bf16.mxu0 %v631
    %1102 = vmatpush1.bf16.msra.mxu0 %v630
    %1103 = vmatprep.subr.bf16.mxu0 %v635
    %1104 = vmatpush1.bf16.msra.mxu0 %v634
    %1105 = vmatprep.subr.bf16.mxu0 %v639
    %1106 = vmatpush1.bf16.msra.mxu0 %v638
    %1107 = vmatprep.subr.bf16.mxu0 0
    %1108 = vmatpush1.bf16.msra.mxu0 0
    %1109 = vmatprep.subr.bf16.mxu0 0
    %1110 = vmatpush1.bf16.msra.mxu0 0
    %1111 = vmatprep.subr.bf16.mxu0 0
    %1112 = vmatpush1.bf16.msra.mxu0 0
    %1113 = vmatprep.subr.bf16.mxu0 0
    %1114 = vmatpush1.bf16.msra.mxu0 0
    %1115 = vmatprep.subr.bf16.mxu0 0
    %1116 = vmatpush1.bf16.msra.mxu0 0
    %1117 = vmatprep.subr.bf16.mxu0 0
    %1118 = vmatpush1.bf16.msra.mxu0 0
    %1119 = vmatprep.subr.bf16.mxu0 0
    %1120 = vmatpush1.bf16.msra.mxu0 0
    %1121 = vmatprep.subr.bf16.mxu0 0
    %1122 = vmatpush1.bf16.msra.mxu0 0
    %1123 = vmatprep.mubr.bf16.mxu0 0
    %1124 = vmatmul.mubr.bf16.gmra.mrb[0].mxu0 %v1089
    %v1125 = vpop.f32.mrb[0].mxu0
    %v1126 = vadd.f32 0.0, %v1125
    %v1127 = vpop.f32.mrb[0].mxu0
    %v1128 = vadd.f32 0.0, %v1127
    %v1129 = vpop.f32.mrb[0].mxu0
    %v1130 = vpop.f32.mrb[0].mxu0
    %1131 = vdwg.mxu0
    %1132 = vmatprep.subr.bf16.mxu0 %v613
    %1133 = vmatpush1.bf16.msra.mxu0 %v612
    %1134 = vmatprep.subr.bf16.mxu0 %v617
    %1135 = vmatpush1.bf16.msra.mxu0 %v616
    %1136 = vmatprep.subr.bf16.mxu0 %v621
    %1137 = vmatpush1.bf16.msra.mxu0 %v620
    %1138 = vmatprep.subr.bf16.mxu0 %v625
    %1139 = vmatpush1.bf16.msra.mxu0 %v624
    %1140 = vmatprep.subr.bf16.mxu0 %v629
    %1141 = vmatpush1.bf16.msra.mxu0 %v628
    %1142 = vmatprep.subr.bf16.mxu0 %v633
    %1143 = vmatpush1.bf16.msra.mxu0 %v632
    %1144 = vmatprep.subr.bf16.mxu0 %v637
    %1145 = vmatpush1.bf16.msra.mxu0 %v636
    %1146 = vmatprep.subr.bf16.mxu0 %v641
    %1147 = vmatpush1.bf16.msra.mxu0 %v640
    %1148 = vmatprep.subr.bf16.mxu0 0
    %1149 = vmatpush1.bf16.msra.mxu0 0
    %1150 = vmatprep.subr.bf16.mxu0 0
    %1151 = vmatpush1.bf16.msra.mxu0 0
    %1152 = vmatprep.subr.bf16.mxu0 0
    %1153 = vmatpush1.bf16.msra.mxu0 0
    %1154 = vmatprep.subr.bf16.mxu0 0
    %1155 = vmatpush1.bf16.msra.mxu0 0
    %1156 = vmatprep.subr.bf16.mxu0 0
    %1157 = vmatpush1.bf16.msra.mxu0 0
    %1158 = vmatprep.subr.bf16.mxu0 0
    %1159 = vmatpush1.bf16.msra.mxu0 0
    %1160 = vmatprep.subr.bf16.mxu0 0
    %1161 = vmatpush1.bf16.msra.mxu0 0
    %1162 = vmatprep.subr.bf16.mxu0 0
    %1163 = vmatpush1.bf16.msra.mxu0 0
    %1164 = vmatprep.mubr.bf16.mxu0 0
    %1165 = vmatmul.mubr.bf16.gmra.mrb[0].mxu0 %v1089
    %v1166 = vpop.f32.mrb[0].mxu0
    %v1167 = vadd.f32 0.0, %v1166
    %v1168 = vpop.f32.mrb[0].mxu0
    %v1169 = vadd.f32 0.0, %v1168
    %v1170 = vpop.f32.mrb[0].mxu0
    %v1171 = vpop.f32.mrb[0].mxu0
    %1172 = vdwg.mxu0
    %v1177 = vrot.slane %v1126, 7
    %v1178 = vrot.slane %v1128, 7
    %v1179 = vrot.slane %v1167, 7
    %v1180 = vrot.slane %v1169, 7
    %v1181 = vrot.slane %v1126, 1
    %v1182 = vrot.slane %v1128, 1
    %v1183 = vrot.slane %v1167, 1
    %v1184 = vrot.slane %v1169, 1
    %v1185 = vrot.slane %v1126, 2
    %v1186 = vrot.slane %v1128, 2
    %v1187 = vrot.slane %v1167, 2
    %v1188 = vrot.slane %v1169, 2
    %v1189 = vrot.slane %v1126, 3
    %v1190 = vrot.slane %v1128, 3
    %v1191 = vrot.slane %v1167, 3
    %v1192 = vrot.slane %v1169, 3
    %v1193 = vrot.slane %v1126, 4
    %v1194 = vrot.slane %v1128, 4
    %v1195 = vrot.slane %v1167, 4
    %v1196 = vrot.slane %v1169, 4
    %v1197 = vrot.slane %v1126, 5
    %v1198 = vrot.slane %v1128, 5
    %v1199 = vrot.slane %v1167, 5
    %v1200 = vrot.slane %v1169, 5
    %v1201 = vrot.slane %v1126, 6
    %v1202 = vrot.slane %v1128, 6
    %v1203 = vrot.slane %v1167, 6
    %v1204 = vrot.slane %v1169, 6
    %v1237 = vadd.f32 %v403, %v1177
    %v1238 = vadd.f32 %v405, %v1178
    %v1239 = vadd.f32 %v476, %v1179
    %v1240 = vadd.f32 %v478, %v1180
    %v1241 = vadd.f32 %v407, %v1126
    %v1242 = vadd.f32 %v409, %v1128
    %v1243 = vadd.f32 %v480, %v1167
    %v1244 = vadd.f32 %v482, %v1169
    %v1245 = vadd.f32 %v413, %v1181
    %v1246 = vadd.f32 %v415, %v1182
    %v1247 = vadd.f32 %v486, %v1183
    %v1248 = vadd.f32 %v488, %v1184
    %v1249 = vadd.f32 %v417, %v1185
    %v1250 = vadd.f32 %v419, %v1186
    %v1251 = vadd.f32 %v490, %v1187
    %v1252 = vadd.f32 %v492, %v1188
    %v1253 = vadd.f32 %v423, %v1189
    %v1254 = vadd.f32 %v425, %v1190
    %v1255 = vadd.f32 %v496, %v1191
    %v1256 = vadd.f32 %v498, %v1192
    %v1257 = vadd.f32 %v427, %v1193
    %v1258 = vadd.f32 %v429, %v1194
    %v1259 = vadd.f32 %v500, %v1195
    %v1260 = vadd.f32 %v502, %v1196
    %v1261 = vadd.f32 %v433, %v1197
    %v1262 = vadd.f32 %v435, %v1198
    %v1263 = vadd.f32 %v506, %v1199
    %v1264 = vadd.f32 %v508, %v1200
    %v1265 = vadd.f32 %v437, %v1201
    %v1266 = vadd.f32 %v439, %v1202
    %v1267 = vadd.f32 %v510, %v1203
    %v1268 = vadd.f32 %v512, %v1204
    %v1269 = vxor.u32 %v1237, 2147483648
    %v1270 = vxor.u32 %v1241, 2147483648
    %v1271 = vxor.u32 %v1245, 2147483648
    %v1272 = vxor.u32 %v1249, 2147483648
    %v1273 = vxor.u32 %v1253, 2147483648
    %v1274 = vxor.u32 %v1257, 2147483648
    %v1275 = vxor.u32 %v1261, 2147483648
    %v1276 = vxor.u32 %v1265, 2147483648
    %v1277 = vmul.f32 %v1269, 1.442695
    %v1278 = vpow.pop %v1277
    %v1279 = vmul.f32 %v1270, 1.442695
    %v1280 = vpow.pop %v1279
    %v1281 = vmul.f32 %v1271, 1.442695
    %v1282 = vpow.pop %v1281
    %v1283 = vmul.f32 %v1272, 1.442695
    %v1284 = vpow.pop %v1283
    %v1285 = vmul.f32 %v1273, 1.442695
    %v1286 = vpow.pop %v1285
    %v1287 = vmul.f32 %v1274, 1.442695
    %v1288 = vpow.pop %v1287
    %v1289 = vmul.f32 %v1275, 1.442695
    %v1290 = vpow.pop %v1289
    %v1291 = vmul.f32 %v1276, 1.442695
    %v1292 = vpow.pop %v1291
    %v1293 = vadd.f32 %v1278, 1.0
    %v1294 = vadd.f32 %v1280, 1.0
    %v1295 = vadd.f32 %v1282, 1.0
    %v1296 = vadd.f32 %v1284, 1.0
    %v1297 = vadd.f32 %v1286, 1.0
    %v1298 = vadd.f32 %v1288, 1.0
    %v1299 = vadd.f32 %v1290, 1.0
    %v1300 = vadd.f32 %v1292, 1.0
    %v1301 = vrcp.pop %v1293
    %v1302 = vmul.f32 1.0, %v1301
    %v1303 = vrcp.pop %v1294
    %v1304 = vmul.f32 1.0, %v1303
    %v1305 = vrcp.pop %v1295
    %v1306 = vmul.f32 1.0, %v1305
    %v1307 = vrcp.pop %v1296
    %v1308 = vmul.f32 1.0, %v1307
    %v1309 = vrcp.pop %v1297
    %v1310 = vmul.f32 1.0, %v1309
    %v1311 = vrcp.pop %v1298
    %v1312 = vmul.f32 1.0, %v1311
    %v1313 = vrcp.pop %v1299
    %v1314 = vmul.f32 1.0, %v1313
    %v1315 = vrcp.pop %v1300
    %v1316 = vmul.f32 1.0, %v1315
    %v1317 = vxor.u32 %v1238, 2147483648
    %v1318 = vxor.u32 %v1242, 2147483648
    %v1319 = vxor.u32 %v1246, 2147483648
    %v1320 = vxor.u32 %v1250, 2147483648
    %v1321 = vxor.u32 %v1254, 2147483648
    %v1322 = vxor.u32 %v1258, 2147483648
    %v1323 = vxor.u32 %v1262, 2147483648
    %v1324 = vxor.u32 %v1266, 2147483648
    %v1325 = vmul.f32 %v1317, 1.442695
    %v1326 = vpow.pop %v1325
    %v1327 = vmul.f32 %v1318, 1.442695
    %v1328 = vpow.pop %v1327
    %v1329 = vmul.f32 %v1319, 1.442695
    %v1330 = vpow.pop %v1329
    %v1331 = vmul.f32 %v1320, 1.442695
    %v1332 = vpow.pop %v1331
    %v1333 = vmul.f32 %v1321, 1.442695
    %v1334 = vpow.pop %v1333
    %v1335 = vmul.f32 %v1322, 1.442695
    %v1336 = vpow.pop %v1335
    %v1337 = vmul.f32 %v1323, 1.442695
    %v1338 = vpow.pop %v1337
    %v1339 = vmul.f32 %v1324, 1.442695
    %v1340 = vpow.pop %v1339
    %v1341 = vadd.f32 %v1326, 1.0
    %v1342 = vadd.f32 %v1328, 1.0
    %v1343 = vadd.f32 %v1330, 1.0
    %v1344 = vadd.f32 %v1332, 1.0
    %v1345 = vadd.f32 %v1334, 1.0
    %v1346 = vadd.f32 %v1336, 1.0
    %v1347 = vadd.f32 %v1338, 1.0
    %v1348 = vadd.f32 %v1340, 1.0
    %v1349 = vrcp.pop %v1341
    %v1350 = vmul.f32 1.0, %v1349
    %v1351 = vrcp.pop %v1342
    %v1352 = vmul.f32 1.0, %v1351
    %v1353 = vrcp.pop %v1343
    %v1354 = vmul.f32 1.0, %v1353
    %v1355 = vrcp.pop %v1344
    %v1356 = vmul.f32 1.0, %v1355
    %v1357 = vrcp.pop %v1345
    %v1358 = vmul.f32 1.0, %v1357
    %v1359 = vrcp.pop %v1346
    %v1360 = vmul.f32 1.0, %v1359
    %v1361 = vrcp.pop %v1347
    %v1362 = vmul.f32 1.0, %v1361
    %v1363 = vrcp.pop %v1348
    %v1364 = vmul.f32 1.0, %v1363
    %v1365 = vtanh.pop %v1239
    %v1366 = vtanh.pop %v1243
    %v1367 = vtanh.pop %v1247
    %v1368 = vtanh.pop %v1251
    %v1369 = vtanh.pop %v1255
    %v1370 = vtanh.pop %v1259
    %v1371 = vtanh.pop %v1263
    %v1372 = vtanh.pop %v1267
    %v1373 = vxor.u32 %v1240, 2147483648
    %v1374 = vxor.u32 %v1244, 2147483648
    %v1375 = vxor.u32 %v1248, 2147483648
    %v1376 = vxor.u32 %v1252, 2147483648
    %v1377 = vxor.u32 %v1256, 2147483648
    %v1378 = vxor.u32 %v1260, 2147483648
    %v1379 = vxor.u32 %v1264, 2147483648
    %v1380 = vxor.u32 %v1268, 2147483648
    %v1381 = vmul.f32 %v1373, 1.442695
    %v1382 = vpow.pop %v1381
    %v1383 = vmul.f32 %v1374, 1.442695
    %v1384 = vpow.pop %v1383
    %v1385 = vmul.f32 %v1375, 1.442695
    %v1386 = vpow.pop %v1385
    %v1387 = vmul.f32 %v1376, 1.442695
    %v1388 = vpow.pop %v1387
    %v1389 = vmul.f32 %v1377, 1.442695
    %v1390 = vpow.pop %v1389
    %v1391 = vmul.f32 %v1378, 1.442695
    %v1392 = vpow.pop %v1391
    %v1393 = vmul.f32 %v1379, 1.442695
    %v1394 = vpow.pop %v1393
    %v1395 = vmul.f32 %v1380, 1.442695
    %v1396 = vpow.pop %v1395
    %v1397 = vadd.f32 %v1382, 1.0
    %v1398 = vadd.f32 %v1384, 1.0
    %v1399 = vadd.f32 %v1386, 1.0
    %v1400 = vadd.f32 %v1388, 1.0
    %v1401 = vadd.f32 %v1390, 1.0
    %v1402 = vadd.f32 %v1392, 1.0
    %v1403 = vadd.f32 %v1394, 1.0
    %v1404 = vadd.f32 %v1396, 1.0
    %v1405 = vrcp.pop %v1397
    %v1406 = vmul.f32 1.0, %v1405
    %v1407 = vrcp.pop %v1398
    %v1408 = vmul.f32 1.0, %v1407
    %v1409 = vrcp.pop %v1399
    %v1410 = vmul.f32 1.0, %v1409
    %v1411 = vrcp.pop %v1400
    %v1412 = vmul.f32 1.0, %v1411
    %v1413 = vrcp.pop %v1401
    %v1414 = vmul.f32 1.0, %v1413
    %v1415 = vrcp.pop %v1402
    %v1416 = vmul.f32 1.0, %v1415
    %v1417 = vrcp.pop %v1403
    %v1418 = vmul.f32 1.0, %v1417
    %v1419 = vrcp.pop %v1404
    %v1420 = vmul.f32 1.0, %v1419
    %v1429 = vrot.slane %v1020, 7
    %v1430 = vrot.slane %v1021, 7
    %v1431 = vrot.slane %v1022, 7
    %v1432 = vrot.slane %v1023, 7
    %v1433 = vrot.slane %v1024, 7
    %v1434 = vrot.slane %v1025, 7
    %v1435 = vrot.slane %v1026, 7
    %v1436 = vrot.slane %v1027, 7
    %v1445 = vmul.f32 %v1350, %v1429
    %v1446 = vmul.f32 %v1352, %v1430
    %v1447 = vmul.f32 %v1354, %v1431
    %v1448 = vmul.f32 %v1356, %v1432
    %v1449 = vmul.f32 %v1358, %v1433
    %v1450 = vmul.f32 %v1360, %v1434
    %v1451 = vmul.f32 %v1362, %v1435
    %v1452 = vmul.f32 %v1364, %v1436
    %v1453 = vmul.f32 %v1302, %v1365
    %v1454 = vmul.f32 %v1304, %v1366
    %v1455 = vmul.f32 %v1306, %v1367
    %v1456 = vmul.f32 %v1308, %v1368
    %v1457 = vmul.f32 %v1310, %v1369
    %v1458 = vmul.f32 %v1312, %v1370
    %v1459 = vmul.f32 %v1314, %v1371
    %v1460 = vmul.f32 %v1316, %v1372
    %v1461 = vadd.f32 %v1445, %v1453
    %v1462 = vadd.f32 %v1446, %v1454
    %v1463 = vadd.f32 %v1447, %v1455
    %v1464 = vadd.f32 %v1448, %v1456
    %v1465 = vadd.f32 %v1449, %v1457
    %v1466 = vadd.f32 %v1450, %v1458
    %v1467 = vadd.f32 %v1451, %v1459
    %v1468 = vadd.f32 %v1452, %v1460
    %v1469 = vtanh.pop %v1461
    %v1470 = vtanh.pop %v1462
    %v1471 = vtanh.pop %v1463
    %v1472 = vtanh.pop %v1464
    %v1473 = vtanh.pop %v1465
    %v1474 = vtanh.pop %v1466
    %v1475 = vtanh.pop %v1467
    %v1476 = vtanh.pop %v1468
    %v1477 = vmul.f32 %v1406, %v1469
    %v1478 = vmul.f32 %v1408, %v1470
    %v1479 = vmul.f32 %v1410, %v1471
    %v1480 = vmul.f32 %v1412, %v1472
    %v1481 = vmul.f32 %v1414, %v1473
    %v1482 = vmul.f32 %v1416, %v1474
    %v1483 = vmul.f32 %v1418, %v1475
    %v1484 = vmul.f32 %v1420, %v1476
    %v1485 = vpack.c.bf16 %v1477, %v1477
    %v1486 = vpack.c.bf16 %v1478, %v1478
    %v1487 = vpack.c.bf16 %v1479, %v1479
    %v1488 = vpack.c.bf16 %v1480, %v1480
    %v1489 = vpack.c.bf16 %v1481, %v1481
    %v1490 = vpack.c.bf16 %v1482, %v1482
    %v1491 = vpack.c.bf16 %v1483, %v1483
    %v1492 = vpack.c.bf16 %v1484, %v1484
    %v1501 = vunpack.c.l.b16 %v1485
    %v1502 = vunpack.c.l.b16 %v1486
    %v1503 = vunpack.c.l.b16 %v1487
    %v1504 = vunpack.c.l.b16 %v1488
    %v1505 = vunpack.c.l.b16 %v1489
    %v1506 = vunpack.c.l.b16 %v1490
    %v1507 = vunpack.c.l.b16 %v1491
    %v1508 = vunpack.c.l.b16 %v1492
    %v1509 = vrot.slane %v1501, 1
    %v1510 = vsel %vm1069, %v1502, %v1509
    %v1511 = vrot.slane %v1503, 7
    %v1512 = vsel %vm1072, %v1511, %v1510
    %v1513 = vrot.slane %v1504, 6
    %v1514 = vsel %vm1075, %v1513, %v1512
    %v1515 = vrot.slane %v1505, 5
    %v1516 = vsel %vm1078, %v1515, %v1514
    %v1517 = vrot.slane %v1506, 4
    %v1518 = vsel %vm1081, %v1517, %v1516
    %v1519 = vrot.slane %v1507, 3
    %v1520 = vsel %vm1084, %v1519, %v1518
    %v1521 = vrot.slane %v1508, 2
    %v1522 = vsel %vm1087, %v1521, %v1520
    %v1523 = vpack.c.b16 %v1522, %v1522
    %1525 = vmatprep.subr.bf16.mxu0 %v611
    %1526 = vmatpush1.bf16.msra.mxu0 %v610
    %1527 = vmatprep.subr.bf16.mxu0 %v615
    %1528 = vmatpush1.bf16.msra.mxu0 %v614
    %1529 = vmatprep.subr.bf16.mxu0 %v619
    %1530 = vmatpush1.bf16.msra.mxu0 %v618
    %1531 = vmatprep.subr.bf16.mxu0 %v623
    %1532 = vmatpush1.bf16.msra.mxu0 %v622
    %1533 = vmatprep.subr.bf16.mxu0 %v627
    %1534 = vmatpush1.bf16.msra.mxu0 %v626
    %1535 = vmatprep.subr.bf16.mxu0 %v631
    %1536 = vmatpush1.bf16.msra.mxu0 %v630
    %1537 = vmatprep.subr.bf16.mxu0 %v635
    %1538 = vmatpush1.bf16.msra.mxu0 %v634
    %1539 = vmatprep.subr.bf16.mxu0 %v639
    %1540 = vmatpush1.bf16.msra.mxu0 %v638
    %1541 = vmatprep.subr.bf16.mxu0 0
    %1542 = vmatpush1.bf16.msra.mxu0 0
    %1543 = vmatprep.subr.bf16.mxu0 0
    %1544 = vmatpush1.bf16.msra.mxu0 0
    %1545 = vmatprep.subr.bf16.mxu0 0
    %1546 = vmatpush1.bf16.msra.mxu0 0
    %1547 = vmatprep.subr.bf16.mxu0 0
    %1548 = vmatpush1.bf16.msra.mxu0 0
    %1549 = vmatprep.subr.bf16.mxu0 0
    %1550 = vmatpush1.bf16.msra.mxu0 0
    %1551 = vmatprep.subr.bf16.mxu0 0
    %1552 = vmatpush1.bf16.msra.mxu0 0
    %1553 = vmatprep.subr.bf16.mxu0 0
    %1554 = vmatpush1.bf16.msra.mxu0 0
    %1555 = vmatprep.subr.bf16.mxu0 0
    %1556 = vmatpush1.bf16.msra.mxu0 0
    %1557 = vmatprep.mubr.bf16.mxu0 0
    %1558 = vmatmul.mubr.bf16.gmra.mrb[0].mxu0 %v1523
    %v1559 = vpop.f32.mrb[0].mxu0
    %v1560 = vadd.f32 0.0, %v1559
    %v1561 = vpop.f32.mrb[0].mxu0
    %v1562 = vadd.f32 0.0, %v1561
    %v1563 = vpop.f32.mrb[0].mxu0
    %v1564 = vpop.f32.mrb[0].mxu0
    %1565 = vdwg.mxu0
    %1566 = vmatprep.subr.bf16.mxu0 %v613
    %1567 = vmatpush1.bf16.msra.mxu0 %v612
    %1568 = vmatprep.subr.bf16.mxu0 %v617
    %1569 = vmatpush1.bf16.msra.mxu0 %v616
    %1570 = vmatprep.subr.bf16.mxu0 %v621
    %1571 = vmatpush1.bf16.msra.mxu0 %v620
    %1572 = vmatprep.subr.bf16.mxu0 %v625
    %1573 = vmatpush1.bf16.msra.mxu0 %v624
    %1574 = vmatprep.subr.bf16.mxu0 %v629
    %1575 = vmatpush1.bf16.msra.mxu0 %v628
    %1576 = vmatprep.subr.bf16.mxu0 %v633
    %1577 = vmatpush1.bf16.msra.mxu0 %v632
    %1578 = vmatprep.subr.bf16.mxu0 %v637
    %1579 = vmatpush1.bf16.msra.mxu0 %v636
    %1580 = vmatprep.subr.bf16.mxu0 %v641
    %1581 = vmatpush1.bf16.msra.mxu0 %v640
    %1582 = vmatprep.subr.bf16.mxu0 0
    %1583 = vmatpush1.bf16.msra.mxu0 0
    %1584 = vmatprep.subr.bf16.mxu0 0
    %1585 = vmatpush1.bf16.msra.mxu0 0
    %1586 = vmatprep.subr.bf16.mxu0 0
    %1587 = vmatpush1.bf16.msra.mxu0 0
    %1588 = vmatprep.subr.bf16.mxu0 0
    %1589 = vmatpush1.bf16.msra.mxu0 0
    %1590 = vmatprep.subr.bf16.mxu0 0
    %1591 = vmatpush1.bf16.msra.mxu0 0
    %1592 = vmatprep.subr.bf16.mxu0 0
    %1593 = vmatpush1.bf16.msra.mxu0 0
    %1594 = vmatprep.subr.bf16.mxu0 0
    %1595 = vmatpush1.bf16.msra.mxu0 0
    %1596 = vmatprep.subr.bf16.mxu0 0
    %1597 = vmatpush1.bf16.msra.mxu0 0
    %1598 = vmatprep.mubr.bf16.mxu0 0
    %1599 = vmatmul.mubr.bf16.gmra.mrb[0].mxu0 %v1523
    %v1600 = vpop.f32.mrb[0].mxu0
    %v1601 = vadd.f32 0.0, %v1600
    %v1602 = vpop.f32.mrb[0].mxu0
    %v1603 = vadd.f32 0.0, %v1602
    %v1604 = vpop.f32.mrb[0].mxu0
    %v1605 = vpop.f32.mrb[0].mxu0
    %1606 = vdwg.mxu0
    %v1611 = vrot.slane %v1560, 6
    %v1612 = vrot.slane %v1562, 6
    %v1613 = vrot.slane %v1601, 6
    %v1614 = vrot.slane %v1603, 6
    %v1615 = vrot.slane %v1560, 7
    %v1616 = vrot.slane %v1562, 7
    %v1617 = vrot.slane %v1601, 7
    %v1618 = vrot.slane %v1603, 7
    %v1619 = vrot.slane %v1560, 1
    %v1620 = vrot.slane %v1562, 1
    %v1621 = vrot.slane %v1601, 1
    %v1622 = vrot.slane %v1603, 1
    %v1623 = vrot.slane %v1560, 2
    %v1624 = vrot.slane %v1562, 2
    %v1625 = vrot.slane %v1601, 2
    %v1626 = vrot.slane %v1603, 2
    %v1627 = vrot.slane %v1560, 3
    %v1628 = vrot.slane %v1562, 3
    %v1629 = vrot.slane %v1601, 3
    %v1630 = vrot.slane %v1603, 3
    %v1631 = vrot.slane %v1560, 4
    %v1632 = vrot.slane %v1562, 4
    %v1633 = vrot.slane %v1601, 4
    %v1634 = vrot.slane %v1603, 4
    %v1635 = vrot.slane %v1560, 5
    %v1636 = vrot.slane %v1562, 5
    %v1637 = vrot.slane %v1601, 5
    %v1638 = vrot.slane %v1603, 5
    %v1671 = vadd.f32 %v403, %v1611
    %v1672 = vadd.f32 %v405, %v1612
    %v1673 = vadd.f32 %v476, %v1613
    %v1674 = vadd.f32 %v478, %v1614
    %v1675 = vadd.f32 %v407, %v1615
    %v1676 = vadd.f32 %v409, %v1616
    %v1677 = vadd.f32 %v480, %v1617
    %v1678 = vadd.f32 %v482, %v1618
    %v1679 = vadd.f32 %v413, %v1560
    %v1680 = vadd.f32 %v415, %v1562
    %v1681 = vadd.f32 %v486, %v1601
    %v1682 = vadd.f32 %v488, %v1603
    %v1683 = vadd.f32 %v417, %v1619
    %v1684 = vadd.f32 %v419, %v1620
    %v1685 = vadd.f32 %v490, %v1621
    %v1686 = vadd.f32 %v492, %v1622
    %v1687 = vadd.f32 %v423, %v1623
    %v1688 = vadd.f32 %v425, %v1624
    %v1689 = vadd.f32 %v496, %v1625
    %v1690 = vadd.f32 %v498, %v1626
    %v1691 = vadd.f32 %v427, %v1627
    %v1692 = vadd.f32 %v429, %v1628
    %v1693 = vadd.f32 %v500, %v1629
    %v1694 = vadd.f32 %v502, %v1630
    %v1695 = vadd.f32 %v433, %v1631
    %v1696 = vadd.f32 %v435, %v1632
    %v1697 = vadd.f32 %v506, %v1633
    %v1698 = vadd.f32 %v508, %v1634
    %v1699 = vadd.f32 %v437, %v1635
    %v1700 = vadd.f32 %v439, %v1636
    %v1701 = vadd.f32 %v510, %v1637
    %v1702 = vadd.f32 %v512, %v1638
    %v1703 = vxor.u32 %v1671, 2147483648
    %v1704 = vxor.u32 %v1675, 2147483648
    %v1705 = vxor.u32 %v1679, 2147483648
    %v1706 = vxor.u32 %v1683, 2147483648
    %v1707 = vxor.u32 %v1687, 2147483648
    %v1708 = vxor.u32 %v1691, 2147483648
    %v1709 = vxor.u32 %v1695, 2147483648
    %v1710 = vxor.u32 %v1699, 2147483648
    %v1711 = vmul.f32 %v1703, 1.442695
    %v1712 = vpow.pop %v1711
    %v1713 = vmul.f32 %v1704, 1.442695
    %v1714 = vpow.pop %v1713
    %v1715 = vmul.f32 %v1705, 1.442695
    %v1716 = vpow.pop %v1715
    %v1717 = vmul.f32 %v1706, 1.442695
    %v1718 = vpow.pop %v1717
    %v1719 = vmul.f32 %v1707, 1.442695
    %v1720 = vpow.pop %v1719
    %v1721 = vmul.f32 %v1708, 1.442695
    %v1722 = vpow.pop %v1721
    %v1723 = vmul.f32 %v1709, 1.442695
    %v1724 = vpow.pop %v1723
    %v1725 = vmul.f32 %v1710, 1.442695
    %v1726 = vpow.pop %v1725
    %v1727 = vadd.f32 %v1712, 1.0
    %v1728 = vadd.f32 %v1714, 1.0
    %v1729 = vadd.f32 %v1716, 1.0
    %v1730 = vadd.f32 %v1718, 1.0
    %v1731 = vadd.f32 %v1720, 1.0
    %v1732 = vadd.f32 %v1722, 1.0
    %v1733 = vadd.f32 %v1724, 1.0
    %v1734 = vadd.f32 %v1726, 1.0
    %v1735 = vrcp.pop %v1727
    %v1736 = vmul.f32 1.0, %v1735
    %v1737 = vrcp.pop %v1728
    %v1738 = vmul.f32 1.0, %v1737
    %v1739 = vrcp.pop %v1729
    %v1740 = vmul.f32 1.0, %v1739
    %v1741 = vrcp.pop %v1730
    %v1742 = vmul.f32 1.0, %v1741
    %v1743 = vrcp.pop %v1731
    %v1744 = vmul.f32 1.0, %v1743
    %v1745 = vrcp.pop %v1732
    %v1746 = vmul.f32 1.0, %v1745
    %v1747 = vrcp.pop %v1733
    %v1748 = vmul.f32 1.0, %v1747
    %v1749 = vrcp.pop %v1734
    %v1750 = vmul.f32 1.0, %v1749
    %v1751 = vxor.u32 %v1672, 2147483648
    %v1752 = vxor.u32 %v1676, 2147483648
    %v1753 = vxor.u32 %v1680, 2147483648
    %v1754 = vxor.u32 %v1684, 2147483648
    %v1755 = vxor.u32 %v1688, 2147483648
    %v1756 = vxor.u32 %v1692, 2147483648
    %v1757 = vxor.u32 %v1696, 2147483648
    %v1758 = vxor.u32 %v1700, 2147483648
    %v1759 = vmul.f32 %v1751, 1.442695
    %v1760 = vpow.pop %v1759
    %v1761 = vmul.f32 %v1752, 1.442695
    %v1762 = vpow.pop %v1761
    %v1763 = vmul.f32 %v1753, 1.442695
    %v1764 = vpow.pop %v1763
    %v1765 = vmul.f32 %v1754, 1.442695
    %v1766 = vpow.pop %v1765
    %v1767 = vmul.f32 %v1755, 1.442695
    %v1768 = vpow.pop %v1767
    %v1769 = vmul.f32 %v1756, 1.442695
    %v1770 = vpow.pop %v1769
    %v1771 = vmul.f32 %v1757, 1.442695
    %v1772 = vpow.pop %v1771
    %v1773 = vmul.f32 %v1758, 1.442695
    %v1774 = vpow.pop %v1773
    %v1775 = vadd.f32 %v1760, 1.0
    %v1776 = vadd.f32 %v1762, 1.0
    %v1777 = vadd.f32 %v1764, 1.0
    %v1778 = vadd.f32 %v1766, 1.0
    %v1779 = vadd.f32 %v1768, 1.0
    %v1780 = vadd.f32 %v1770, 1.0
    %v1781 = vadd.f32 %v1772, 1.0
    %v1782 = vadd.f32 %v1774, 1.0
    %v1783 = vrcp.pop %v1775
    %v1784 = vmul.f32 1.0, %v1783
    %v1785 = vrcp.pop %v1776
    %v1786 = vmul.f32 1.0, %v1785
    %v1787 = vrcp.pop %v1777
    %v1788 = vmul.f32 1.0, %v1787
    %v1789 = vrcp.pop %v1778
    %v1790 = vmul.f32 1.0, %v1789
    %v1791 = vrcp.pop %v1779
    %v1792 = vmul.f32 1.0, %v1791
    %v1793 = vrcp.pop %v1780
    %v1794 = vmul.f32 1.0, %v1793
    %v1795 = vrcp.pop %v1781
    %v1796 = vmul.f32 1.0, %v1795
    %v1797 = vrcp.pop %v1782
    %v1798 = vmul.f32 1.0, %v1797
    %v1799 = vtanh.pop %v1673
    %v1800 = vtanh.pop %v1677
    %v1801 = vtanh.pop %v1681
    %v1802 = vtanh.pop %v1685
    %v1803 = vtanh.pop %v1689
    %v1804 = vtanh.pop %v1693
    %v1805 = vtanh.pop %v1697
    %v1806 = vtanh.pop %v1701
    %v1807 = vxor.u32 %v1674, 2147483648
    %v1808 = vxor.u32 %v1678, 2147483648
    %v1809 = vxor.u32 %v1682, 2147483648
    %v1810 = vxor.u32 %v1686, 2147483648
    %v1811 = vxor.u32 %v1690, 2147483648
    %v1812 = vxor.u32 %v1694, 2147483648
    %v1813 = vxor.u32 %v1698, 2147483648
    %v1814 = vxor.u32 %v1702, 2147483648
    %v1815 = vmul.f32 %v1807, 1.442695
    %v1816 = vpow.pop %v1815
    %v1817 = vmul.f32 %v1808, 1.442695
    %v1818 = vpow.pop %v1817
    %v1819 = vmul.f32 %v1809, 1.442695
    %v1820 = vpow.pop %v1819
    %v1821 = vmul.f32 %v1810, 1.442695
    %v1822 = vpow.pop %v1821
    %v1823 = vmul.f32 %v1811, 1.442695
    %v1824 = vpow.pop %v1823
    %v1825 = vmul.f32 %v1812, 1.442695
    %v1826 = vpow.pop %v1825
    %v1827 = vmul.f32 %v1813, 1.442695
    %v1828 = vpow.pop %v1827
    %v1829 = vmul.f32 %v1814, 1.442695
    %v1830 = vpow.pop %v1829
    %v1831 = vadd.f32 %v1816, 1.0
    %v1832 = vadd.f32 %v1818, 1.0
    %v1833 = vadd.f32 %v1820, 1.0
    %v1834 = vadd.f32 %v1822, 1.0
    %v1835 = vadd.f32 %v1824, 1.0
    %v1836 = vadd.f32 %v1826, 1.0
    %v1837 = vadd.f32 %v1828, 1.0
    %v1838 = vadd.f32 %v1830, 1.0
    %v1839 = vrcp.pop %v1831
    %v1840 = vmul.f32 1.0, %v1839
    %v1841 = vrcp.pop %v1832
    %v1842 = vmul.f32 1.0, %v1841
    %v1843 = vrcp.pop %v1833
    %v1844 = vmul.f32 1.0, %v1843
    %v1845 = vrcp.pop %v1834
    %v1846 = vmul.f32 1.0, %v1845
    %v1847 = vrcp.pop %v1835
    %v1848 = vmul.f32 1.0, %v1847
    %v1849 = vrcp.pop %v1836
    %v1850 = vmul.f32 1.0, %v1849
    %v1851 = vrcp.pop %v1837
    %v1852 = vmul.f32 1.0, %v1851
    %v1853 = vrcp.pop %v1838
    %v1854 = vmul.f32 1.0, %v1853
    %v1863 = vrot.slane %v1461, 7
    %v1864 = vrot.slane %v1462, 7
    %v1865 = vrot.slane %v1463, 7
    %v1866 = vrot.slane %v1464, 7
    %v1867 = vrot.slane %v1465, 7
    %v1868 = vrot.slane %v1466, 7
    %v1869 = vrot.slane %v1467, 7
    %v1870 = vrot.slane %v1468, 7
    %v1879 = vmul.f32 %v1784, %v1863
    %v1880 = vmul.f32 %v1786, %v1864
    %v1881 = vmul.f32 %v1788, %v1865
    %v1882 = vmul.f32 %v1790, %v1866
    %v1883 = vmul.f32 %v1792, %v1867
    %v1884 = vmul.f32 %v1794, %v1868
    %v1885 = vmul.f32 %v1796, %v1869
    %v1886 = vmul.f32 %v1798, %v1870
    %v1887 = vmul.f32 %v1736, %v1799
    %v1888 = vmul.f32 %v1738, %v1800
    %v1889 = vmul.f32 %v1740, %v1801
    %v1890 = vmul.f32 %v1742, %v1802
    %v1891 = vmul.f32 %v1744, %v1803
    %v1892 = vmul.f32 %v1746, %v1804
    %v1893 = vmul.f32 %v1748, %v1805
    %v1894 = vmul.f32 %v1750, %v1806
    %v1895 = vadd.f32 %v1879, %v1887
    %v1896 = vadd.f32 %v1880, %v1888
    %v1897 = vadd.f32 %v1881, %v1889
    %v1898 = vadd.f32 %v1882, %v1890
    %v1899 = vadd.f32 %v1883, %v1891
    %v1900 = vadd.f32 %v1884, %v1892
    %v1901 = vadd.f32 %v1885, %v1893
    %v1902 = vadd.f32 %v1886, %v1894
    %v1903 = vtanh.pop %v1895
    %v1904 = vtanh.pop %v1896
    %v1905 = vtanh.pop %v1897
    %v1906 = vtanh.pop %v1898
    %v1907 = vtanh.pop %v1899
    %v1908 = vtanh.pop %v1900
    %v1909 = vtanh.pop %v1901
    %v1910 = vtanh.pop %v1902
    %v1911 = vmul.f32 %v1840, %v1903
    %v1912 = vmul.f32 %v1842, %v1904
    %v1913 = vmul.f32 %v1844, %v1905
    %v1914 = vmul.f32 %v1846, %v1906
    %v1915 = vmul.f32 %v1848, %v1907
    %v1916 = vmul.f32 %v1850, %v1908
    %v1917 = vmul.f32 %v1852, %v1909
    %v1918 = vmul.f32 %v1854, %v1910
    %v1919 = vpack.c.bf16 %v1911, %v1911
    %v1920 = vpack.c.bf16 %v1912, %v1912
    %v1921 = vpack.c.bf16 %v1913, %v1913
    %v1922 = vpack.c.bf16 %v1914, %v1914
    %v1923 = vpack.c.bf16 %v1915, %v1915
    %v1924 = vpack.c.bf16 %v1916, %v1916
    %v1925 = vpack.c.bf16 %v1917, %v1917
    %v1926 = vpack.c.bf16 %v1918, %v1918
    %v1935 = vunpack.c.l.b16 %v1919
    %v1936 = vunpack.c.l.b16 %v1920
    %v1937 = vunpack.c.l.b16 %v1921
    %v1938 = vunpack.c.l.b16 %v1922
    %v1939 = vunpack.c.l.b16 %v1923
    %v1940 = vunpack.c.l.b16 %v1924
    %v1941 = vunpack.c.l.b16 %v1925
    %v1942 = vunpack.c.l.b16 %v1926
    %v1943 = vrot.slane %v1935, 2
    %v1944 = vrot.slane %v1936, 1
    %v1945 = vsel %vm1069, %v1944, %v1943
    %v1946 = vsel %vm1072, %v1937, %v1945
    %v1947 = vrot.slane %v1938, 7
    %v1948 = vsel %vm1075, %v1947, %v1946
    %v1949 = vrot.slane %v1939, 6
    %v1950 = vsel %vm1078, %v1949, %v1948
    %v1951 = vrot.slane %v1940, 5
    %v1952 = vsel %vm1081, %v1951, %v1950
    %v1953 = vrot.slane %v1941, 4
    %v1954 = vsel %vm1084, %v1953, %v1952
    %v1955 = vrot.slane %v1942, 3
    %v1956 = vsel %vm1087, %v1955, %v1954
    %v1957 = vpack.c.b16 %v1956, %v1956
    %1959 = vmatprep.subr.bf16.mxu0 %v611
    %1960 = vmatpush1.bf16.msra.mxu0 %v610
    %1961 = vmatprep.subr.bf16.mxu0 %v615
    %1962 = vmatpush1.bf16.msra.mxu0 %v614
    %1963 = vmatprep.subr.bf16.mxu0 %v619
    %1964 = vmatpush1.bf16.msra.mxu0 %v618
    %1965 = vmatprep.subr.bf16.mxu0 %v623
    %1966 = vmatpush1.bf16.msra.mxu0 %v622
    %1967 = vmatprep.subr.bf16.mxu0 %v627
    %1968 = vmatpush1.bf16.msra.mxu0 %v626
    %1969 = vmatprep.subr.bf16.mxu0 %v631
    %1970 = vmatpush1.bf16.msra.mxu0 %v630
    %1971 = vmatprep.subr.bf16.mxu0 %v635
    %1972 = vmatpush1.bf16.msra.mxu0 %v634
    %1973 = vmatprep.subr.bf16.mxu0 %v639
    %1974 = vmatpush1.bf16.msra.mxu0 %v638
    %1975 = vmatprep.subr.bf16.mxu0 0
    %1976 = vmatpush1.bf16.msra.mxu0 0
    %1977 = vmatprep.subr.bf16.mxu0 0
    %1978 = vmatpush1.bf16.msra.mxu0 0
    %1979 = vmatprep.subr.bf16.mxu0 0
    %1980 = vmatpush1.bf16.msra.mxu0 0
    %1981 = vmatprep.subr.bf16.mxu0 0
    %1982 = vmatpush1.bf16.msra.mxu0 0
    %1983 = vmatprep.subr.bf16.mxu0 0
    %1984 = vmatpush1.bf16.msra.mxu0 0
    %1985 = vmatprep.subr.bf16.mxu0 0
    %1986 = vmatpush1.bf16.msra.mxu0 0
    %1987 = vmatprep.subr.bf16.mxu0 0
    %1988 = vmatpush1.bf16.msra.mxu0 0
    %1989 = vmatprep.subr.bf16.mxu0 0
    %1990 = vmatpush1.bf16.msra.mxu0 0
    %1991 = vmatprep.mubr.bf16.mxu0 0
    %1992 = vmatmul.mubr.bf16.gmra.mrb[0].mxu0 %v1957
    %v1993 = vpop.f32.mrb[0].mxu0
    %v1994 = vadd.f32 0.0, %v1993
    %v1995 = vpop.f32.mrb[0].mxu0
    %v1996 = vadd.f32 0.0, %v1995
    %v1997 = vpop.f32.mrb[0].mxu0
    %v1998 = vpop.f32.mrb[0].mxu0
    %1999 = vdwg.mxu0
    %2000 = vmatprep.subr.bf16.mxu0 %v613
    %2001 = vmatpush1.bf16.msra.mxu0 %v612
    %2002 = vmatprep.subr.bf16.mxu0 %v617
    %2003 = vmatpush1.bf16.msra.mxu0 %v616
    %2004 = vmatprep.subr.bf16.mxu0 %v621
    %2005 = vmatpush1.bf16.msra.mxu0 %v620
    %2006 = vmatprep.subr.bf16.mxu0 %v625
    %2007 = vmatpush1.bf16.msra.mxu0 %v624
    %2008 = vmatprep.subr.bf16.mxu0 %v629
    %2009 = vmatpush1.bf16.msra.mxu0 %v628
    %2010 = vmatprep.subr.bf16.mxu0 %v633
    %2011 = vmatpush1.bf16.msra.mxu0 %v632
    %2012 = vmatprep.subr.bf16.mxu0 %v637
    %2013 = vmatpush1.bf16.msra.mxu0 %v636
    %2014 = vmatprep.subr.bf16.mxu0 %v641
    %2015 = vmatpush1.bf16.msra.mxu0 %v640
    %2016 = vmatprep.subr.bf16.mxu0 0
    %2017 = vmatpush1.bf16.msra.mxu0 0
    %2018 = vmatprep.subr.bf16.mxu0 0
    %2019 = vmatpush1.bf16.msra.mxu0 0
    %2020 = vmatprep.subr.bf16.mxu0 0
    %2021 = vmatpush1.bf16.msra.mxu0 0
    %2022 = vmatprep.subr.bf16.mxu0 0
    %2023 = vmatpush1.bf16.msra.mxu0 0
    %2024 = vmatprep.subr.bf16.mxu0 0
    %2025 = vmatpush1.bf16.msra.mxu0 0
    %2026 = vmatprep.subr.bf16.mxu0 0
    %2027 = vmatpush1.bf16.msra.mxu0 0
    %2028 = vmatprep.subr.bf16.mxu0 0
    %2029 = vmatpush1.bf16.msra.mxu0 0
    %2030 = vmatprep.subr.bf16.mxu0 0
    %2031 = vmatpush1.bf16.msra.mxu0 0
    %2032 = vmatprep.mubr.bf16.mxu0 0
    %2033 = vmatmul.mubr.bf16.gmra.mrb[0].mxu0 %v1957
    %v2034 = vpop.f32.mrb[0].mxu0
    %v2035 = vadd.f32 0.0, %v2034
    %v2036 = vpop.f32.mrb[0].mxu0
    %v2037 = vadd.f32 0.0, %v2036
    %v2038 = vpop.f32.mrb[0].mxu0
    %v2039 = vpop.f32.mrb[0].mxu0
    %2040 = vdwg.mxu0
    %v2045 = vrot.slane %v1994, 5
    %v2046 = vrot.slane %v1996, 5
    %v2047 = vrot.slane %v2035, 5
    %v2048 = vrot.slane %v2037, 5
    %v2049 = vrot.slane %v1994, 6
    %v2050 = vrot.slane %v1996, 6
    %v2051 = vrot.slane %v2035, 6
    %v2052 = vrot.slane %v2037, 6
    %v2053 = vrot.slane %v1994, 7
    %v2054 = vrot.slane %v1996, 7
    %v2055 = vrot.slane %v2035, 7
    %v2056 = vrot.slane %v2037, 7
    %v2057 = vrot.slane %v1994, 1
    %v2058 = vrot.slane %v1996, 1
    %v2059 = vrot.slane %v2035, 1
    %v2060 = vrot.slane %v2037, 1
    %v2061 = vrot.slane %v1994, 2
    %v2062 = vrot.slane %v1996, 2
    %v2063 = vrot.slane %v2035, 2
    %v2064 = vrot.slane %v2037, 2
    %v2065 = vrot.slane %v1994, 3
    %v2066 = vrot.slane %v1996, 3
    %v2067 = vrot.slane %v2035, 3
    %v2068 = vrot.slane %v2037, 3
    %v2069 = vrot.slane %v1994, 4
    %v2070 = vrot.slane %v1996, 4
    %v2071 = vrot.slane %v2035, 4
    %v2072 = vrot.slane %v2037, 4
    %v2105 = vadd.f32 %v403, %v2045
    %v2106 = vadd.f32 %v405, %v2046
    %v2107 = vadd.f32 %v476, %v2047
    %v2108 = vadd.f32 %v478, %v2048
    %v2109 = vadd.f32 %v407, %v2049
    %v2110 = vadd.f32 %v409, %v2050
    %v2111 = vadd.f32 %v480, %v2051
    %v2112 = vadd.f32 %v482, %v2052
    %v2113 = vadd.f32 %v413, %v2053
    %v2114 = vadd.f32 %v415, %v2054
    %v2115 = vadd.f32 %v486, %v2055
    %v2116 = vadd.f32 %v488, %v2056
    %v2117 = vadd.f32 %v417, %v1994
    %v2118 = vadd.f32 %v419, %v1996
    %v2119 = vadd.f32 %v490, %v2035
    %v2120 = vadd.f32 %v492, %v2037
    %v2121 = vadd.f32 %v423, %v2057
    %v2122 = vadd.f32 %v425, %v2058
    %v2123 = vadd.f32 %v496, %v2059
    %v2124 = vadd.f32 %v498, %v2060
    %v2125 = vadd.f32 %v427, %v2061
    %v2126 = vadd.f32 %v429, %v2062
    %v2127 = vadd.f32 %v500, %v2063
    %v2128 = vadd.f32 %v502, %v2064
    %v2129 = vadd.f32 %v433, %v2065
    %v2130 = vadd.f32 %v435, %v2066
    %v2131 = vadd.f32 %v506, %v2067
    %v2132 = vadd.f32 %v508, %v2068
    %v2133 = vadd.f32 %v437, %v2069
    %v2134 = vadd.f32 %v439, %v2070
    %v2135 = vadd.f32 %v510, %v2071
    %v2136 = vadd.f32 %v512, %v2072
    %v2137 = vxor.u32 %v2105, 2147483648
    %v2138 = vxor.u32 %v2109, 2147483648
    %v2139 = vxor.u32 %v2113, 2147483648
    %v2140 = vxor.u32 %v2117, 2147483648
    %v2141 = vxor.u32 %v2121, 2147483648
    %v2142 = vxor.u32 %v2125, 2147483648
    %v2143 = vxor.u32 %v2129, 2147483648
    %v2144 = vxor.u32 %v2133, 2147483648
    %v2145 = vmul.f32 %v2137, 1.442695
    %v2146 = vpow.pop %v2145
    %v2147 = vmul.f32 %v2138, 1.442695
    %v2148 = vpow.pop %v2147
    %v2149 = vmul.f32 %v2139, 1.442695
    %v2150 = vpow.pop %v2149
    %v2151 = vmul.f32 %v2140, 1.442695
    %v2152 = vpow.pop %v2151
    %v2153 = vmul.f32 %v2141, 1.442695
    %v2154 = vpow.pop %v2153
    %v2155 = vmul.f32 %v2142, 1.442695
    %v2156 = vpow.pop %v2155
    %v2157 = vmul.f32 %v2143, 1.442695
    %v2158 = vpow.pop %v2157
    %v2159 = vmul.f32 %v2144, 1.442695
    %v2160 = vpow.pop %v2159
    %v2161 = vadd.f32 %v2146, 1.0
    %v2162 = vadd.f32 %v2148, 1.0
    %v2163 = vadd.f32 %v2150, 1.0
    %v2164 = vadd.f32 %v2152, 1.0
    %v2165 = vadd.f32 %v2154, 1.0
    %v2166 = vadd.f32 %v2156, 1.0
    %v2167 = vadd.f32 %v2158, 1.0
    %v2168 = vadd.f32 %v2160, 1.0
    %v2169 = vrcp.pop %v2161
    %v2170 = vmul.f32 1.0, %v2169
    %v2171 = vrcp.pop %v2162
    %v2172 = vmul.f32 1.0, %v2171
    %v2173 = vrcp.pop %v2163
    %v2174 = vmul.f32 1.0, %v2173
    %v2175 = vrcp.pop %v2164
    %v2176 = vmul.f32 1.0, %v2175
    %v2177 = vrcp.pop %v2165
    %v2178 = vmul.f32 1.0, %v2177
    %v2179 = vrcp.pop %v2166
    %v2180 = vmul.f32 1.0, %v2179
    %v2181 = vrcp.pop %v2167
    %v2182 = vmul.f32 1.0, %v2181
    %v2183 = vrcp.pop %v2168
    %v2184 = vmul.f32 1.0, %v2183
    %v2185 = vxor.u32 %v2106, 2147483648
    %v2186 = vxor.u32 %v2110, 2147483648
    %v2187 = vxor.u32 %v2114, 2147483648
    %v2188 = vxor.u32 %v2118, 2147483648
    %v2189 = vxor.u32 %v2122, 2147483648
    %v2190 = vxor.u32 %v2126, 2147483648
    %v2191 = vxor.u32 %v2130, 2147483648
    %v2192 = vxor.u32 %v2134, 2147483648
    %v2193 = vmul.f32 %v2185, 1.442695
    %v2194 = vpow.pop %v2193
    %v2195 = vmul.f32 %v2186, 1.442695
    %v2196 = vpow.pop %v2195
    %v2197 = vmul.f32 %v2187, 1.442695
    %v2198 = vpow.pop %v2197
    %v2199 = vmul.f32 %v2188, 1.442695
    %v2200 = vpow.pop %v2199
    %v2201 = vmul.f32 %v2189, 1.442695
    %v2202 = vpow.pop %v2201
    %v2203 = vmul.f32 %v2190, 1.442695
    %v2204 = vpow.pop %v2203
    %v2205 = vmul.f32 %v2191, 1.442695
    %v2206 = vpow.pop %v2205
    %v2207 = vmul.f32 %v2192, 1.442695
    %v2208 = vpow.pop %v2207
    %v2209 = vadd.f32 %v2194, 1.0
    %v2210 = vadd.f32 %v2196, 1.0
    %v2211 = vadd.f32 %v2198, 1.0
    %v2212 = vadd.f32 %v2200, 1.0
    %v2213 = vadd.f32 %v2202, 1.0
    %v2214 = vadd.f32 %v2204, 1.0
    %v2215 = vadd.f32 %v2206, 1.0
    %v2216 = vadd.f32 %v2208, 1.0
    %v2217 = vrcp.pop %v2209
    %v2218 = vmul.f32 1.0, %v2217
    %v2219 = vrcp.pop %v2210
    %v2220 = vmul.f32 1.0, %v2219
    %v2221 = vrcp.pop %v2211
    %v2222 = vmul.f32 1.0, %v2221
    %v2223 = vrcp.pop %v2212
    %v2224 = vmul.f32 1.0, %v2223
    %v2225 = vrcp.pop %v2213
    %v2226 = vmul.f32 1.0, %v2225
    %v2227 = vrcp.pop %v2214
    %v2228 = vmul.f32 1.0, %v2227
    %v2229 = vrcp.pop %v2215
    %v2230 = vmul.f32 1.0, %v2229
    %v2231 = vrcp.pop %v2216
    %v2232 = vmul.f32 1.0, %v2231
    %v2233 = vtanh.pop %v2107
    %v2234 = vtanh.pop %v2111
    %v2235 = vtanh.pop %v2115
    %v2236 = vtanh.pop %v2119
    %v2237 = vtanh.pop %v2123
    %v2238 = vtanh.pop %v2127
    %v2239 = vtanh.pop %v2131
    %v2240 = vtanh.pop %v2135
    %v2241 = vxor.u32 %v2108, 2147483648
    %v2242 = vxor.u32 %v2112, 2147483648
    %v2243 = vxor.u32 %v2116, 2147483648
    %v2244 = vxor.u32 %v2120, 2147483648
    %v2245 = vxor.u32 %v2124, 2147483648
    %v2246 = vxor.u32 %v2128, 2147483648
    %v2247 = vxor.u32 %v2132, 2147483648
    %v2248 = vxor.u32 %v2136, 2147483648
    %v2249 = vmul.f32 %v2241, 1.442695
    %v2250 = vpow.pop %v2249
    %v2251 = vmul.f32 %v2242, 1.442695
    %v2252 = vpow.pop %v2251
    %v2253 = vmul.f32 %v2243, 1.442695
    %v2254 = vpow.pop %v2253
    %v2255 = vmul.f32 %v2244, 1.442695
    %v2256 = vpow.pop %v2255
    %v2257 = vmul.f32 %v2245, 1.442695
    %v2258 = vpow.pop %v2257
    %v2259 = vmul.f32 %v2246, 1.442695
    %v2260 = vpow.pop %v2259
    %v2261 = vmul.f32 %v2247, 1.442695
    %v2262 = vpow.pop %v2261
    %v2263 = vmul.f32 %v2248, 1.442695
    %v2264 = vpow.pop %v2263
    %v2265 = vadd.f32 %v2250, 1.0
    %v2266 = vadd.f32 %v2252, 1.0
    %v2267 = vadd.f32 %v2254, 1.0
    %v2268 = vadd.f32 %v2256, 1.0
    %v2269 = vadd.f32 %v2258, 1.0
    %v2270 = vadd.f32 %v2260, 1.0
    %v2271 = vadd.f32 %v2262, 1.0
    %v2272 = vadd.f32 %v2264, 1.0
    %v2273 = vrcp.pop %v2265
    %v2274 = vmul.f32 1.0, %v2273
    %v2275 = vrcp.pop %v2266
    %v2276 = vmul.f32 1.0, %v2275
    %v2277 = vrcp.pop %v2267
    %v2278 = vmul.f32 1.0, %v2277
    %v2279 = vrcp.pop %v2268
    %v2280 = vmul.f32 1.0, %v2279
    %v2281 = vrcp.pop %v2269
    %v2282 = vmul.f32 1.0, %v2281
    %v2283 = vrcp.pop %v2270
    %v2284 = vmul.f32 1.0, %v2283
    %v2285 = vrcp.pop %v2271
    %v2286 = vmul.f32 1.0, %v2285
    %v2287 = vrcp.pop %v2272
    %v2288 = vmul.f32 1.0, %v2287
    %v2297 = vrot.slane %v1895, 7
    %v2298 = vrot.slane %v1896, 7
    %v2299 = vrot.slane %v1897, 7
    %v2300 = vrot.slane %v1898, 7
    %v2301 = vrot.slane %v1899, 7
    %v2302 = vrot.slane %v1900, 7
    %v2303 = vrot.slane %v1901, 7
    %v2304 = vrot.slane %v1902, 7
    %v2313 = vmul.f32 %v2218, %v2297
    %v2314 = vmul.f32 %v2220, %v2298
    %v2315 = vmul.f32 %v2222, %v2299
    %v2316 = vmul.f32 %v2224, %v2300
    %v2317 = vmul.f32 %v2226, %v2301
    %v2318 = vmul.f32 %v2228, %v2302
    %v2319 = vmul.f32 %v2230, %v2303
    %v2320 = vmul.f32 %v2232, %v2304
    %v2321 = vmul.f32 %v2170, %v2233
    %v2322 = vmul.f32 %v2172, %v2234
    %v2323 = vmul.f32 %v2174, %v2235
    %v2324 = vmul.f32 %v2176, %v2236
    %v2325 = vmul.f32 %v2178, %v2237
    %v2326 = vmul.f32 %v2180, %v2238
    %v2327 = vmul.f32 %v2182, %v2239
    %v2328 = vmul.f32 %v2184, %v2240
    %v2329 = vadd.f32 %v2313, %v2321
    %v2330 = vadd.f32 %v2314, %v2322
    %v2331 = vadd.f32 %v2315, %v2323
    %v2332 = vadd.f32 %v2316, %v2324
    %v2333 = vadd.f32 %v2317, %v2325
    %v2334 = vadd.f32 %v2318, %v2326
    %v2335 = vadd.f32 %v2319, %v2327
    %v2336 = vadd.f32 %v2320, %v2328
    %v2337 = vtanh.pop %v2329
    %v2338 = vtanh.pop %v2330
    %v2339 = vtanh.pop %v2331
    %v2340 = vtanh.pop %v2332
    %v2341 = vtanh.pop %v2333
    %v2342 = vtanh.pop %v2334
    %v2343 = vtanh.pop %v2335
    %v2344 = vtanh.pop %v2336
    %v2345 = vmul.f32 %v2274, %v2337
    %v2346 = vmul.f32 %v2276, %v2338
    %v2347 = vmul.f32 %v2278, %v2339
    %v2348 = vmul.f32 %v2280, %v2340
    %v2349 = vmul.f32 %v2282, %v2341
    %v2350 = vmul.f32 %v2284, %v2342
    %v2351 = vmul.f32 %v2286, %v2343
    %v2352 = vmul.f32 %v2288, %v2344
    %v2353 = vpack.c.bf16 %v2345, %v2345
    %v2354 = vpack.c.bf16 %v2346, %v2346
    %v2355 = vpack.c.bf16 %v2347, %v2347
    %v2356 = vpack.c.bf16 %v2348, %v2348
    %v2357 = vpack.c.bf16 %v2349, %v2349
    %v2358 = vpack.c.bf16 %v2350, %v2350
    %v2359 = vpack.c.bf16 %v2351, %v2351
    %v2360 = vpack.c.bf16 %v2352, %v2352
    %v2369 = vunpack.c.l.b16 %v2353
    %v2370 = vunpack.c.l.b16 %v2354
    %v2371 = vunpack.c.l.b16 %v2355
    %v2372 = vunpack.c.l.b16 %v2356
    %v2373 = vunpack.c.l.b16 %v2357
    %v2374 = vunpack.c.l.b16 %v2358
    %v2375 = vunpack.c.l.b16 %v2359
    %v2376 = vunpack.c.l.b16 %v2360
    %v2377 = vrot.slane %v2369, 3
    %v2378 = vrot.slane %v2370, 2
    %v2379 = vsel %vm1069, %v2378, %v2377
    %v2380 = vrot.slane %v2371, 1
    %v2381 = vsel %vm1072, %v2380, %v2379
    %v2382 = vsel %vm1075, %v2372, %v2381
    %v2383 = vrot.slane %v2373, 7
    %v2384 = vsel %vm1078, %v2383, %v2382
    %v2385 = vrot.slane %v2374, 6
    %v2386 = vsel %vm1081, %v2385, %v2384
    %v2387 = vrot.slane %v2375, 5
    %v2388 = vsel %vm1084, %v2387, %v2386
    %v2389 = vrot.slane %v2376, 4
    %v2390 = vsel %vm1087, %v2389, %v2388
    %v2391 = vpack.c.b16 %v2390, %v2390
    %2393 = vmatprep.subr.bf16.mxu0 %v611
    %2394 = vmatpush1.bf16.msra.mxu0 %v610
    %2395 = vmatprep.subr.bf16.mxu0 %v615
    %2396 = vmatpush1.bf16.msra.mxu0 %v614
    %2397 = vmatprep.subr.bf16.mxu0 %v619
    %2398 = vmatpush1.bf16.msra.mxu0 %v618
    %2399 = vmatprep.subr.bf16.mxu0 %v623
    %2400 = vmatpush1.bf16.msra.mxu0 %v622
    %2401 = vmatprep.subr.bf16.mxu0 %v627
    %2402 = vmatpush1.bf16.msra.mxu0 %v626
    %2403 = vmatprep.subr.bf16.mxu0 %v631
    %2404 = vmatpush1.bf16.msra.mxu0 %v630
    %2405 = vmatprep.subr.bf16.mxu0 %v635
    %2406 = vmatpush1.bf16.msra.mxu0 %v634
    %2407 = vmatprep.subr.bf16.mxu0 %v639
    %2408 = vmatpush1.bf16.msra.mxu0 %v638
    %2409 = vmatprep.subr.bf16.mxu0 0
    %2410 = vmatpush1.bf16.msra.mxu0 0
    %2411 = vmatprep.subr.bf16.mxu0 0
    %2412 = vmatpush1.bf16.msra.mxu0 0
    %2413 = vmatprep.subr.bf16.mxu0 0
    %2414 = vmatpush1.bf16.msra.mxu0 0
    %2415 = vmatprep.subr.bf16.mxu0 0
    %2416 = vmatpush1.bf16.msra.mxu0 0
    %2417 = vmatprep.subr.bf16.mxu0 0
    %2418 = vmatpush1.bf16.msra.mxu0 0
    %2419 = vmatprep.subr.bf16.mxu0 0
    %2420 = vmatpush1.bf16.msra.mxu0 0
    %2421 = vmatprep.subr.bf16.mxu0 0
    %2422 = vmatpush1.bf16.msra.mxu0 0
    %2423 = vmatprep.subr.bf16.mxu0 0
    %2424 = vmatpush1.bf16.msra.mxu0 0
    %2425 = vmatprep.mubr.bf16.mxu0 0
    %2426 = vmatmul.mubr.bf16.gmra.mrb[0].mxu0 %v2391
    %v2427 = vpop.f32.mrb[0].mxu0
    %v2428 = vadd.f32 0.0, %v2427
    %v2429 = vpop.f32.mrb[0].mxu0
    %v2430 = vadd.f32 0.0, %v2429
    %v2431 = vpop.f32.mrb[0].mxu0
    %v2432 = vpop.f32.mrb[0].mxu0
    %2433 = vdwg.mxu0
    %2434 = vmatprep.subr.bf16.mxu0 %v613
    %2435 = vmatpush1.bf16.msra.mxu0 %v612
    %2436 = vmatprep.subr.bf16.mxu0 %v617
    %2437 = vmatpush1.bf16.msra.mxu0 %v616
    %2438 = vmatprep.subr.bf16.mxu0 %v621
    %2439 = vmatpush1.bf16.msra.mxu0 %v620
    %2440 = vmatprep.subr.bf16.mxu0 %v625
    %2441 = vmatpush1.bf16.msra.mxu0 %v624
    %2442 = vmatprep.subr.bf16.mxu0 %v629
    %2443 = vmatpush1.bf16.msra.mxu0 %v628
    %2444 = vmatprep.subr.bf16.mxu0 %v633
    %2445 = vmatpush1.bf16.msra.mxu0 %v632
    %2446 = vmatprep.subr.bf16.mxu0 %v637
    %2447 = vmatpush1.bf16.msra.mxu0 %v636
    %2448 = vmatprep.subr.bf16.mxu0 %v641
    %2449 = vmatpush1.bf16.msra.mxu0 %v640
    %2450 = vmatprep.subr.bf16.mxu0 0
    %2451 = vmatpush1.bf16.msra.mxu0 0
    %2452 = vmatprep.subr.bf16.mxu0 0
    %2453 = vmatpush1.bf16.msra.mxu0 0
    %2454 = vmatprep.subr.bf16.mxu0 0
    %2455 = vmatpush1.bf16.msra.mxu0 0
    %2456 = vmatprep.subr.bf16.mxu0 0
    %2457 = vmatpush1.bf16.msra.mxu0 0
    %2458 = vmatprep.subr.bf16.mxu0 0
    %2459 = vmatpush1.bf16.msra.mxu0 0
    %2460 = vmatprep.subr.bf16.mxu0 0
    %2461 = vmatpush1.bf16.msra.mxu0 0
    %2462 = vmatprep.subr.bf16.mxu0 0
    %2463 = vmatpush1.bf16.msra.mxu0 0
    %2464 = vmatprep.subr.bf16.mxu0 0
    %2465 = vmatpush1.bf16.msra.mxu0 0
    %2466 = vmatprep.mubr.bf16.mxu0 0
    %2467 = vmatmul.mubr.bf16.gmra.mrb[0].mxu0 %v2391
    %v2468 = vpop.f32.mrb[0].mxu0
    %v2469 = vadd.f32 0.0, %v2468
    %v2470 = vpop.f32.mrb[0].mxu0
    %v2471 = vadd.f32 0.0, %v2470
    %v2472 = vpop.f32.mrb[0].mxu0
    %v2473 = vpop.f32.mrb[0].mxu0
    %2474 = vdwg.mxu0
    %v2479 = vrot.slane %v2428, 4
    %v2480 = vrot.slane %v2430, 4
    %v2481 = vrot.slane %v2469, 4
    %v2482 = vrot.slane %v2471, 4
    %v2483 = vrot.slane %v2428, 5
    %v2484 = vrot.slane %v2430, 5
    %v2485 = vrot.slane %v2469, 5
    %v2486 = vrot.slane %v2471, 5
    %v2487 = vrot.slane %v2428, 6
    %v2488 = vrot.slane %v2430, 6
    %v2489 = vrot.slane %v2469, 6
    %v2490 = vrot.slane %v2471, 6
    %v2491 = vrot.slane %v2428, 7
    %v2492 = vrot.slane %v2430, 7
    %v2493 = vrot.slane %v2469, 7
    %v2494 = vrot.slane %v2471, 7
    %v2495 = vrot.slane %v2428, 1
    %v2496 = vrot.slane %v2430, 1
    %v2497 = vrot.slane %v2469, 1
    %v2498 = vrot.slane %v2471, 1
    %v2499 = vrot.slane %v2428, 2
    %v2500 = vrot.slane %v2430, 2
    %v2501 = vrot.slane %v2469, 2
    %v2502 = vrot.slane %v2471, 2
    %v2503 = vrot.slane %v2428, 3
    %v2504 = vrot.slane %v2430, 3
    %v2505 = vrot.slane %v2469, 3
    %v2506 = vrot.slane %v2471, 3
    %v2539 = vadd.f32 %v403, %v2479
    %v2540 = vadd.f32 %v405, %v2480
    %v2541 = vadd.f32 %v476, %v2481
    %v2542 = vadd.f32 %v478, %v2482
    %v2543 = vadd.f32 %v407, %v2483
    %v2544 = vadd.f32 %v409, %v2484
    %v2545 = vadd.f32 %v480, %v2485
    %v2546 = vadd.f32 %v482, %v2486
    %v2547 = vadd.f32 %v413, %v2487
    %v2548 = vadd.f32 %v415, %v2488
    %v2549 = vadd.f32 %v486, %v2489
    %v2550 = vadd.f32 %v488, %v2490
    %v2551 = vadd.f32 %v417, %v2491
    %v2552 = vadd.f32 %v419, %v2492
    %v2553 = vadd.f32 %v490, %v2493
    %v2554 = vadd.f32 %v492, %v2494
    %v2555 = vadd.f32 %v423, %v2428
    %v2556 = vadd.f32 %v425, %v2430
    %v2557 = vadd.f32 %v496, %v2469
    %v2558 = vadd.f32 %v498, %v2471
    %v2559 = vadd.f32 %v427, %v2495
    %v2560 = vadd.f32 %v429, %v2496
    %v2561 = vadd.f32 %v500, %v2497
    %v2562 = vadd.f32 %v502, %v2498
    %v2563 = vadd.f32 %v433, %v2499
    %v2564 = vadd.f32 %v435, %v2500
    %v2565 = vadd.f32 %v506, %v2501
    %v2566 = vadd.f32 %v508, %v2502
    %v2567 = vadd.f32 %v437, %v2503
    %v2568 = vadd.f32 %v439, %v2504
    %v2569 = vadd.f32 %v510, %v2505
    %v2570 = vadd.f32 %v512, %v2506
    %v2571 = vxor.u32 %v2539, 2147483648
    %v2572 = vxor.u32 %v2543, 2147483648
    %v2573 = vxor.u32 %v2547, 2147483648
    %v2574 = vxor.u32 %v2551, 2147483648
    %v2575 = vxor.u32 %v2555, 2147483648
    %v2576 = vxor.u32 %v2559, 2147483648
    %v2577 = vxor.u32 %v2563, 2147483648
    %v2578 = vxor.u32 %v2567, 2147483648
    %v2579 = vmul.f32 %v2571, 1.442695
    %v2580 = vpow.pop %v2579
    %v2581 = vmul.f32 %v2572, 1.442695
    %v2582 = vpow.pop %v2581
    %v2583 = vmul.f32 %v2573, 1.442695
    %v2584 = vpow.pop %v2583
    %v2585 = vmul.f32 %v2574, 1.442695
    %v2586 = vpow.pop %v2585
    %v2587 = vmul.f32 %v2575, 1.442695
    %v2588 = vpow.pop %v2587
    %v2589 = vmul.f32 %v2576, 1.442695
    %v2590 = vpow.pop %v2589
    %v2591 = vmul.f32 %v2577, 1.442695
    %v2592 = vpow.pop %v2591
    %v2593 = vmul.f32 %v2578, 1.442695
    %v2594 = vpow.pop %v2593
    %v2595 = vadd.f32 %v2580, 1.0
    %v2596 = vadd.f32 %v2582, 1.0
    %v2597 = vadd.f32 %v2584, 1.0
    %v2598 = vadd.f32 %v2586, 1.0
    %v2599 = vadd.f32 %v2588, 1.0
    %v2600 = vadd.f32 %v2590, 1.0
    %v2601 = vadd.f32 %v2592, 1.0
    %v2602 = vadd.f32 %v2594, 1.0
    %v2603 = vrcp.pop %v2595
    %v2604 = vmul.f32 1.0, %v2603
    %v2605 = vrcp.pop %v2596
    %v2606 = vmul.f32 1.0, %v2605
    %v2607 = vrcp.pop %v2597
    %v2608 = vmul.f32 1.0, %v2607
    %v2609 = vrcp.pop %v2598
    %v2610 = vmul.f32 1.0, %v2609
    %v2611 = vrcp.pop %v2599
    %v2612 = vmul.f32 1.0, %v2611
    %v2613 = vrcp.pop %v2600
    %v2614 = vmul.f32 1.0, %v2613
    %v2615 = vrcp.pop %v2601
    %v2616 = vmul.f32 1.0, %v2615
    %v2617 = vrcp.pop %v2602
    %v2618 = vmul.f32 1.0, %v2617
    %v2619 = vxor.u32 %v2540, 2147483648
    %v2620 = vxor.u32 %v2544, 2147483648
    %v2621 = vxor.u32 %v2548, 2147483648
    %v2622 = vxor.u32 %v2552, 2147483648
    %v2623 = vxor.u32 %v2556, 2147483648
    %v2624 = vxor.u32 %v2560, 2147483648
    %v2625 = vxor.u32 %v2564, 2147483648
    %v2626 = vxor.u32 %v2568, 2147483648
    %v2627 = vmul.f32 %v2619, 1.442695
    %v2628 = vpow.pop %v2627
    %v2629 = vmul.f32 %v2620, 1.442695
    %v2630 = vpow.pop %v2629
    %v2631 = vmul.f32 %v2621, 1.442695
    %v2632 = vpow.pop %v2631
    %v2633 = vmul.f32 %v2622, 1.442695
    %v2634 = vpow.pop %v2633
    %v2635 = vmul.f32 %v2623, 1.442695
    %v2636 = vpow.pop %v2635
    %v2637 = vmul.f32 %v2624, 1.442695
    %v2638 = vpow.pop %v2637
    %v2639 = vmul.f32 %v2625, 1.442695
    %v2640 = vpow.pop %v2639
    %v2641 = vmul.f32 %v2626, 1.442695
    %v2642 = vpow.pop %v2641
    %v2643 = vadd.f32 %v2628, 1.0
    %v2644 = vadd.f32 %v2630, 1.0
    %v2645 = vadd.f32 %v2632, 1.0
    %v2646 = vadd.f32 %v2634, 1.0
    %v2647 = vadd.f32 %v2636, 1.0
    %v2648 = vadd.f32 %v2638, 1.0
    %v2649 = vadd.f32 %v2640, 1.0
    %v2650 = vadd.f32 %v2642, 1.0
    %v2651 = vrcp.pop %v2643
    %v2652 = vmul.f32 1.0, %v2651
    %v2653 = vrcp.pop %v2644
    %v2654 = vmul.f32 1.0, %v2653
    %v2655 = vrcp.pop %v2645
    %v2656 = vmul.f32 1.0, %v2655
    %v2657 = vrcp.pop %v2646
    %v2658 = vmul.f32 1.0, %v2657
    %v2659 = vrcp.pop %v2647
    %v2660 = vmul.f32 1.0, %v2659
    %v2661 = vrcp.pop %v2648
    %v2662 = vmul.f32 1.0, %v2661
    %v2663 = vrcp.pop %v2649
    %v2664 = vmul.f32 1.0, %v2663
    %v2665 = vrcp.pop %v2650
    %v2666 = vmul.f32 1.0, %v2665
    %v2667 = vtanh.pop %v2541
    %v2668 = vtanh.pop %v2545
    %v2669 = vtanh.pop %v2549
    %v2670 = vtanh.pop %v2553
    %v2671 = vtanh.pop %v2557
    %v2672 = vtanh.pop %v2561
    %v2673 = vtanh.pop %v2565
    %v2674 = vtanh.pop %v2569
    %v2675 = vxor.u32 %v2542, 2147483648
    %v2676 = vxor.u32 %v2546, 2147483648
    %v2677 = vxor.u32 %v2550, 2147483648
    %v2678 = vxor.u32 %v2554, 2147483648
    %v2679 = vxor.u32 %v2558, 2147483648
    %v2680 = vxor.u32 %v2562, 2147483648
    %v2681 = vxor.u32 %v2566, 2147483648
    %v2682 = vxor.u32 %v2570, 2147483648
    %v2683 = vmul.f32 %v2675, 1.442695
    %v2684 = vpow.pop %v2683
    %v2685 = vmul.f32 %v2676, 1.442695
    %v2686 = vpow.pop %v2685
    %v2687 = vmul.f32 %v2677, 1.442695
    %v2688 = vpow.pop %v2687
    %v2689 = vmul.f32 %v2678, 1.442695
    %v2690 = vpow.pop %v2689
    %v2691 = vmul.f32 %v2679, 1.442695
    %v2692 = vpow.pop %v2691
    %v2693 = vmul.f32 %v2680, 1.442695
    %v2694 = vpow.pop %v2693
    %v2695 = vmul.f32 %v2681, 1.442695
    %v2696 = vpow.pop %v2695
    %v2697 = vmul.f32 %v2682, 1.442695
    %v2698 = vpow.pop %v2697
    %v2699 = vadd.f32 %v2684, 1.0
    %v2700 = vadd.f32 %v2686, 1.0
    %v2701 = vadd.f32 %v2688, 1.0
    %v2702 = vadd.f32 %v2690, 1.0
    %v2703 = vadd.f32 %v2692, 1.0
    %v2704 = vadd.f32 %v2694, 1.0
    %v2705 = vadd.f32 %v2696, 1.0
    %v2706 = vadd.f32 %v2698, 1.0
    %v2707 = vrcp.pop %v2699
    %v2708 = vmul.f32 1.0, %v2707
    %v2709 = vrcp.pop %v2700
    %v2710 = vmul.f32 1.0, %v2709
    %v2711 = vrcp.pop %v2701
    %v2712 = vmul.f32 1.0, %v2711
    %v2713 = vrcp.pop %v2702
    %v2714 = vmul.f32 1.0, %v2713
    %v2715 = vrcp.pop %v2703
    %v2716 = vmul.f32 1.0, %v2715
    %v2717 = vrcp.pop %v2704
    %v2718 = vmul.f32 1.0, %v2717
    %v2719 = vrcp.pop %v2705
    %v2720 = vmul.f32 1.0, %v2719
    %v2721 = vrcp.pop %v2706
    %v2722 = vmul.f32 1.0, %v2721
    %v2731 = vrot.slane %v2329, 7
    %v2732 = vrot.slane %v2330, 7
    %v2733 = vrot.slane %v2331, 7
    %v2734 = vrot.slane %v2332, 7
    %v2735 = vrot.slane %v2333, 7
    %v2736 = vrot.slane %v2334, 7
    %v2737 = vrot.slane %v2335, 7
    %v2738 = vrot.slane %v2336, 7
    %v2747 = vmul.f32 %v2652, %v2731
    %v2748 = vmul.f32 %v2654, %v2732
    %v2749 = vmul.f32 %v2656, %v2733
    %v2750 = vmul.f32 %v2658, %v2734
    %v2751 = vmul.f32 %v2660, %v2735
    %v2752 = vmul.f32 %v2662, %v2736
    %v2753 = vmul.f32 %v2664, %v2737
    %v2754 = vmul.f32 %v2666, %v2738
    %v2755 = vmul.f32 %v2604, %v2667
    %v2756 = vmul.f32 %v2606, %v2668
    %v2757 = vmul.f32 %v2608, %v2669
    %v2758 = vmul.f32 %v2610, %v2670
    %v2759 = vmul.f32 %v2612, %v2671
    %v2760 = vmul.f32 %v2614, %v2672
    %v2761 = vmul.f32 %v2616, %v2673
    %v2762 = vmul.f32 %v2618, %v2674
    %v2763 = vadd.f32 %v2747, %v2755
    %v2764 = vadd.f32 %v2748, %v2756
    %v2765 = vadd.f32 %v2749, %v2757
    %v2766 = vadd.f32 %v2750, %v2758
    %v2767 = vadd.f32 %v2751, %v2759
    %v2768 = vadd.f32 %v2752, %v2760
    %v2769 = vadd.f32 %v2753, %v2761
    %v2770 = vadd.f32 %v2754, %v2762
    %v2771 = vtanh.pop %v2763
    %v2772 = vtanh.pop %v2764
    %v2773 = vtanh.pop %v2765
    %v2774 = vtanh.pop %v2766
    %v2775 = vtanh.pop %v2767
    %v2776 = vtanh.pop %v2768
    %v2777 = vtanh.pop %v2769
    %v2778 = vtanh.pop %v2770
    %v2779 = vmul.f32 %v2708, %v2771
    %v2780 = vmul.f32 %v2710, %v2772
    %v2781 = vmul.f32 %v2712, %v2773
    %v2782 = vmul.f32 %v2714, %v2774
    %v2783 = vmul.f32 %v2716, %v2775
    %v2784 = vmul.f32 %v2718, %v2776
    %v2785 = vmul.f32 %v2720, %v2777
    %v2786 = vmul.f32 %v2722, %v2778
    %v2787 = vpack.c.bf16 %v2779, %v2779
    %v2788 = vpack.c.bf16 %v2780, %v2780
    %v2789 = vpack.c.bf16 %v2781, %v2781
    %v2790 = vpack.c.bf16 %v2782, %v2782
    %v2791 = vpack.c.bf16 %v2783, %v2783
    %v2792 = vpack.c.bf16 %v2784, %v2784
    %v2793 = vpack.c.bf16 %v2785, %v2785
    %v2794 = vpack.c.bf16 %v2786, %v2786
    %v2803 = vunpack.c.l.b16 %v2787
    %v2804 = vunpack.c.l.b16 %v2788
    %v2805 = vunpack.c.l.b16 %v2789
    %v2806 = vunpack.c.l.b16 %v2790
    %v2807 = vunpack.c.l.b16 %v2791
    %v2808 = vunpack.c.l.b16 %v2792
    %v2809 = vunpack.c.l.b16 %v2793
    %v2810 = vunpack.c.l.b16 %v2794
    %v2811 = vrot.slane %v2803, 4
    %v2812 = vrot.slane %v2804, 3
    %v2813 = vsel %vm1069, %v2812, %v2811
    %v2814 = vrot.slane %v2805, 2
    %v2815 = vsel %vm1072, %v2814, %v2813
    %v2816 = vrot.slane %v2806, 1
    %v2817 = vsel %vm1075, %v2816, %v2815
    %v2818 = vsel %vm1078, %v2807, %v2817
    %v2819 = vrot.slane %v2808, 7
    %v2820 = vsel %vm1081, %v2819, %v2818
    %v2821 = vrot.slane %v2809, 6
    %v2822 = vsel %vm1084, %v2821, %v2820
    %v2823 = vrot.slane %v2810, 5
    %v2824 = vsel %vm1087, %v2823, %v2822
    %v2825 = vpack.c.b16 %v2824, %v2824
    %2827 = vmatprep.subr.bf16.mxu0 %v611
    %2828 = vmatpush1.bf16.msra.mxu0 %v610
    %2829 = vmatprep.subr.bf16.mxu0 %v615
    %2830 = vmatpush1.bf16.msra.mxu0 %v614
    %2831 = vmatprep.subr.bf16.mxu0 %v619
    %2832 = vmatpush1.bf16.msra.mxu0 %v618
    %2833 = vmatprep.subr.bf16.mxu0 %v623
    %2834 = vmatpush1.bf16.msra.mxu0 %v622
    %2835 = vmatprep.subr.bf16.mxu0 %v627
    %2836 = vmatpush1.bf16.msra.mxu0 %v626
    %2837 = vmatprep.subr.bf16.mxu0 %v631
    %2838 = vmatpush1.bf16.msra.mxu0 %v630
    %2839 = vmatprep.subr.bf16.mxu0 %v635
    %2840 = vmatpush1.bf16.msra.mxu0 %v634
    %2841 = vmatprep.subr.bf16.mxu0 %v639
    %2842 = vmatpush1.bf16.msra.mxu0 %v638
    %2843 = vmatprep.subr.bf16.mxu0 0
    %2844 = vmatpush1.bf16.msra.mxu0 0
    %2845 = vmatprep.subr.bf16.mxu0 0
    %2846 = vmatpush1.bf16.msra.mxu0 0
    %2847 = vmatprep.subr.bf16.mxu0 0
    %2848 = vmatpush1.bf16.msra.mxu0 0
    %2849 = vmatprep.subr.bf16.mxu0 0
    %2850 = vmatpush1.bf16.msra.mxu0 0
    %2851 = vmatprep.subr.bf16.mxu0 0
    %2852 = vmatpush1.bf16.msra.mxu0 0
    %2853 = vmatprep.subr.bf16.mxu0 0
    %2854 = vmatpush1.bf16.msra.mxu0 0
    %2855 = vmatprep.subr.bf16.mxu0 0
    %2856 = vmatpush1.bf16.msra.mxu0 0
    %2857 = vmatprep.subr.bf16.mxu0 0
    %2858 = vmatpush1.bf16.msra.mxu0 0
    %2859 = vmatprep.mubr.bf16.mxu0 0
    %2860 = vmatmul.mubr.bf16.gmra.mrb[0].mxu0 %v2825
    %v2861 = vpop.f32.mrb[0].mxu0
    %v2862 = vadd.f32 0.0, %v2861
    %v2863 = vpop.f32.mrb[0].mxu0
    %v2864 = vadd.f32 0.0, %v2863
    %v2865 = vpop.f32.mrb[0].mxu0
    %v2866 = vpop.f32.mrb[0].mxu0
    %2867 = vdwg.mxu0
    %2868 = vmatprep.subr.bf16.mxu0 %v613
    %2869 = vmatpush1.bf16.msra.mxu0 %v612
    %2870 = vmatprep.subr.bf16.mxu0 %v617
    %2871 = vmatpush1.bf16.msra.mxu0 %v616
    %2872 = vmatprep.subr.bf16.mxu0 %v621
    %2873 = vmatpush1.bf16.msra.mxu0 %v620
    %2874 = vmatprep.subr.bf16.mxu0 %v625
    %2875 = vmatpush1.bf16.msra.mxu0 %v624
    %2876 = vmatprep.subr.bf16.mxu0 %v629
    %2877 = vmatpush1.bf16.msra.mxu0 %v628
    %2878 = vmatprep.subr.bf16.mxu0 %v633
    %2879 = vmatpush1.bf16.msra.mxu0 %v632
    %2880 = vmatprep.subr.bf16.mxu0 %v637
    %2881 = vmatpush1.bf16.msra.mxu0 %v636
    %2882 = vmatprep.subr.bf16.mxu0 %v641
    %2883 = vmatpush1.bf16.msra.mxu0 %v640
    %2884 = vmatprep.subr.bf16.mxu0 0
    %2885 = vmatpush1.bf16.msra.mxu0 0
    %2886 = vmatprep.subr.bf16.mxu0 0
    %2887 = vmatpush1.bf16.msra.mxu0 0
    %2888 = vmatprep.subr.bf16.mxu0 0
    %2889 = vmatpush1.bf16.msra.mxu0 0
    %2890 = vmatprep.subr.bf16.mxu0 0
    %2891 = vmatpush1.bf16.msra.mxu0 0
    %2892 = vmatprep.subr.bf16.mxu0 0
    %2893 = vmatpush1.bf16.msra.mxu0 0
    %2894 = vmatprep.subr.bf16.mxu0 0
    %2895 = vmatpush1.bf16.msra.mxu0 0
    %2896 = vmatprep.subr.bf16.mxu0 0
    %2897 = vmatpush1.bf16.msra.mxu0 0
    %2898 = vmatprep.subr.bf16.mxu0 0
    %2899 = vmatpush1.bf16.msra.mxu0 0
    %2900 = vmatprep.mubr.bf16.mxu0 0
    %2901 = vmatmul.mubr.bf16.gmra.mrb[0].mxu0 %v2825
    %v2902 = vpop.f32.mrb[0].mxu0
    %v2903 = vadd.f32 0.0, %v2902
    %v2904 = vpop.f32.mrb[0].mxu0
    %v2905 = vadd.f32 0.0, %v2904
    %v2906 = vpop.f32.mrb[0].mxu0
    %v2907 = vpop.f32.mrb[0].mxu0
    %2908 = vdwg.mxu0
    %v2913 = vrot.slane %v2862, 3
    %v2914 = vrot.slane %v2864, 3
    %v2915 = vrot.slane %v2903, 3
    %v2916 = vrot.slane %v2905, 3
    %v2917 = vrot.slane %v2862, 4
    %v2918 = vrot.slane %v2864, 4
    %v2919 = vrot.slane %v2903, 4
    %v2920 = vrot.slane %v2905, 4
    %v2921 = vrot.slane %v2862, 5
    %v2922 = vrot.slane %v2864, 5
    %v2923 = vrot.slane %v2903, 5
    %v2924 = vrot.slane %v2905, 5
    %v2925 = vrot.slane %v2862, 6
    %v2926 = vrot.slane %v2864, 6
    %v2927 = vrot.slane %v2903, 6
    %v2928 = vrot.slane %v2905, 6
    %v2929 = vrot.slane %v2862, 7
    %v2930 = vrot.slane %v2864, 7
    %v2931 = vrot.slane %v2903, 7
    %v2932 = vrot.slane %v2905, 7
    %v2933 = vrot.slane %v2862, 1
    %v2934 = vrot.slane %v2864, 1
    %v2935 = vrot.slane %v2903, 1
    %v2936 = vrot.slane %v2905, 1
    %v2937 = vrot.slane %v2862, 2
    %v2938 = vrot.slane %v2864, 2
    %v2939 = vrot.slane %v2903, 2
    %v2940 = vrot.slane %v2905, 2
    %v2973 = vadd.f32 %v403, %v2913
    %v2974 = vadd.f32 %v405, %v2914
    %v2975 = vadd.f32 %v476, %v2915
    %v2976 = vadd.f32 %v478, %v2916
    %v2977 = vadd.f32 %v407, %v2917
    %v2978 = vadd.f32 %v409, %v2918
    %v2979 = vadd.f32 %v480, %v2919
    %v2980 = vadd.f32 %v482, %v2920
    %v2981 = vadd.f32 %v413, %v2921
    %v2982 = vadd.f32 %v415, %v2922
    %v2983 = vadd.f32 %v486, %v2923
    %v2984 = vadd.f32 %v488, %v2924
    %v2985 = vadd.f32 %v417, %v2925
    %v2986 = vadd.f32 %v419, %v2926
    %v2987 = vadd.f32 %v490, %v2927
    %v2988 = vadd.f32 %v492, %v2928
    %v2989 = vadd.f32 %v423, %v2929
    %v2990 = vadd.f32 %v425, %v2930
    %v2991 = vadd.f32 %v496, %v2931
    %v2992 = vadd.f32 %v498, %v2932
    %v2993 = vadd.f32 %v427, %v2862
    %v2994 = vadd.f32 %v429, %v2864
    %v2995 = vadd.f32 %v500, %v2903
    %v2996 = vadd.f32 %v502, %v2905
    %v2997 = vadd.f32 %v433, %v2933
    %v2998 = vadd.f32 %v435, %v2934
    %v2999 = vadd.f32 %v506, %v2935
    %v3000 = vadd.f32 %v508, %v2936
    %v3001 = vadd.f32 %v437, %v2937
    %v3002 = vadd.f32 %v439, %v2938
    %v3003 = vadd.f32 %v510, %v2939
    %v3004 = vadd.f32 %v512, %v2940
    %v3005 = vxor.u32 %v2973, 2147483648
    %v3006 = vxor.u32 %v2977, 2147483648
    %v3007 = vxor.u32 %v2981, 2147483648
    %v3008 = vxor.u32 %v2985, 2147483648
    %v3009 = vxor.u32 %v2989, 2147483648
    %v3010 = vxor.u32 %v2993, 2147483648
    %v3011 = vxor.u32 %v2997, 2147483648
    %v3012 = vxor.u32 %v3001, 2147483648
    %v3013 = vmul.f32 %v3005, 1.442695
    %v3014 = vpow.pop %v3013
    %v3015 = vmul.f32 %v3006, 1.442695
    %v3016 = vpow.pop %v3015
    %v3017 = vmul.f32 %v3007, 1.442695
    %v3018 = vpow.pop %v3017
    %v3019 = vmul.f32 %v3008, 1.442695
    %v3020 = vpow.pop %v3019
    %v3021 = vmul.f32 %v3009, 1.442695
    %v3022 = vpow.pop %v3021
    %v3023 = vmul.f32 %v3010, 1.442695
    %v3024 = vpow.pop %v3023
    %v3025 = vmul.f32 %v3011, 1.442695
    %v3026 = vpow.pop %v3025
    %v3027 = vmul.f32 %v3012, 1.442695
    %v3028 = vpow.pop %v3027
    %v3029 = vadd.f32 %v3014, 1.0
    %v3030 = vadd.f32 %v3016, 1.0
    %v3031 = vadd.f32 %v3018, 1.0
    %v3032 = vadd.f32 %v3020, 1.0
    %v3033 = vadd.f32 %v3022, 1.0
    %v3034 = vadd.f32 %v3024, 1.0
    %v3035 = vadd.f32 %v3026, 1.0
    %v3036 = vadd.f32 %v3028, 1.0
    %v3037 = vrcp.pop %v3029
    %v3038 = vmul.f32 1.0, %v3037
    %v3039 = vrcp.pop %v3030
    %v3040 = vmul.f32 1.0, %v3039
    %v3041 = vrcp.pop %v3031
    %v3042 = vmul.f32 1.0, %v3041
    %v3043 = vrcp.pop %v3032
    %v3044 = vmul.f32 1.0, %v3043
    %v3045 = vrcp.pop %v3033
    %v3046 = vmul.f32 1.0, %v3045
    %v3047 = vrcp.pop %v3034
    %v3048 = vmul.f32 1.0, %v3047
    %v3049 = vrcp.pop %v3035
    %v3050 = vmul.f32 1.0, %v3049
    %v3051 = vrcp.pop %v3036
    %v3052 = vmul.f32 1.0, %v3051
    %v3053 = vxor.u32 %v2974, 2147483648
    %v3054 = vxor.u32 %v2978, 2147483648
    %v3055 = vxor.u32 %v2982, 2147483648
    %v3056 = vxor.u32 %v2986, 2147483648
    %v3057 = vxor.u32 %v2990, 2147483648
    %v3058 = vxor.u32 %v2994, 2147483648
    %v3059 = vxor.u32 %v2998, 2147483648
    %v3060 = vxor.u32 %v3002, 2147483648
    %v3061 = vmul.f32 %v3053, 1.442695
    %v3062 = vpow.pop %v3061
    %v3063 = vmul.f32 %v3054, 1.442695
    %v3064 = vpow.pop %v3063
    %v3065 = vmul.f32 %v3055, 1.442695
    %v3066 = vpow.pop %v3065
    %v3067 = vmul.f32 %v3056, 1.442695
    %v3068 = vpow.pop %v3067
    %v3069 = vmul.f32 %v3057, 1.442695
    %v3070 = vpow.pop %v3069
    %v3071 = vmul.f32 %v3058, 1.442695
    %v3072 = vpow.pop %v3071
    %v3073 = vmul.f32 %v3059, 1.442695
    %v3074 = vpow.pop %v3073
    %v3075 = vmul.f32 %v3060, 1.442695
    %v3076 = vpow.pop %v3075
    %v3077 = vadd.f32 %v3062, 1.0
    %v3078 = vadd.f32 %v3064, 1.0
    %v3079 = vadd.f32 %v3066, 1.0
    %v3080 = vadd.f32 %v3068, 1.0
    %v3081 = vadd.f32 %v3070, 1.0
    %v3082 = vadd.f32 %v3072, 1.0
    %v3083 = vadd.f32 %v3074, 1.0
    %v3084 = vadd.f32 %v3076, 1.0
    %v3085 = vrcp.pop %v3077
    %v3086 = vmul.f32 1.0, %v3085
    %v3087 = vrcp.pop %v3078
    %v3088 = vmul.f32 1.0, %v3087
    %v3089 = vrcp.pop %v3079
    %v3090 = vmul.f32 1.0, %v3089
    %v3091 = vrcp.pop %v3080
    %v3092 = vmul.f32 1.0, %v3091
    %v3093 = vrcp.pop %v3081
    %v3094 = vmul.f32 1.0, %v3093
    %v3095 = vrcp.pop %v3082
    %v3096 = vmul.f32 1.0, %v3095
    %v3097 = vrcp.pop %v3083
    %v3098 = vmul.f32 1.0, %v3097
    %v3099 = vrcp.pop %v3084
    %v3100 = vmul.f32 1.0, %v3099
    %v3101 = vtanh.pop %v2975
    %v3102 = vtanh.pop %v2979
    %v3103 = vtanh.pop %v2983
    %v3104 = vtanh.pop %v2987
    %v3105 = vtanh.pop %v2991
    %v3106 = vtanh.pop %v2995
    %v3107 = vtanh.pop %v2999
    %v3108 = vtanh.pop %v3003
    %v3109 = vxor.u32 %v2976, 2147483648
    %v3110 = vxor.u32 %v2980, 2147483648
    %v3111 = vxor.u32 %v2984, 2147483648
    %v3112 = vxor.u32 %v2988, 2147483648
    %v3113 = vxor.u32 %v2992, 2147483648
    %v3114 = vxor.u32 %v2996, 2147483648
    %v3115 = vxor.u32 %v3000, 2147483648
    %v3116 = vxor.u32 %v3004, 2147483648
    %v3117 = vmul.f32 %v3109, 1.442695
    %v3118 = vpow.pop %v3117
    %v3119 = vmul.f32 %v3110, 1.442695
    %v3120 = vpow.pop %v3119
    %v3121 = vmul.f32 %v3111, 1.442695
    %v3122 = vpow.pop %v3121
    %v3123 = vmul.f32 %v3112, 1.442695
    %v3124 = vpow.pop %v3123
    %v3125 = vmul.f32 %v3113, 1.442695
    %v3126 = vpow.pop %v3125
    %v3127 = vmul.f32 %v3114, 1.442695
    %v3128 = vpow.pop %v3127
    %v3129 = vmul.f32 %v3115, 1.442695
    %v3130 = vpow.pop %v3129
    %v3131 = vmul.f32 %v3116, 1.442695
    %v3132 = vpow.pop %v3131
    %v3133 = vadd.f32 %v3118, 1.0
    %v3134 = vadd.f32 %v3120, 1.0
    %v3135 = vadd.f32 %v3122, 1.0
    %v3136 = vadd.f32 %v3124, 1.0
    %v3137 = vadd.f32 %v3126, 1.0
    %v3138 = vadd.f32 %v3128, 1.0
    %v3139 = vadd.f32 %v3130, 1.0
    %v3140 = vadd.f32 %v3132, 1.0
    %v3141 = vrcp.pop %v3133
    %v3142 = vmul.f32 1.0, %v3141
    %v3143 = vrcp.pop %v3134
    %v3144 = vmul.f32 1.0, %v3143
    %v3145 = vrcp.pop %v3135
    %v3146 = vmul.f32 1.0, %v3145
    %v3147 = vrcp.pop %v3136
    %v3148 = vmul.f32 1.0, %v3147
    %v3149 = vrcp.pop %v3137
    %v3150 = vmul.f32 1.0, %v3149
    %v3151 = vrcp.pop %v3138
    %v3152 = vmul.f32 1.0, %v3151
    %v3153 = vrcp.pop %v3139
    %v3154 = vmul.f32 1.0, %v3153
    %v3155 = vrcp.pop %v3140
    %v3156 = vmul.f32 1.0, %v3155
    %v3165 = vrot.slane %v2763, 7
    %v3166 = vrot.slane %v2764, 7
    %v3167 = vrot.slane %v2765, 7
    %v3168 = vrot.slane %v2766, 7
    %v3169 = vrot.slane %v2767, 7
    %v3170 = vrot.slane %v2768, 7
    %v3171 = vrot.slane %v2769, 7
    %v3172 = vrot.slane %v2770, 7
    %v3181 = vmul.f32 %v3086, %v3165
    %v3182 = vmul.f32 %v3088, %v3166
    %v3183 = vmul.f32 %v3090, %v3167
    %v3184 = vmul.f32 %v3092, %v3168
    %v3185 = vmul.f32 %v3094, %v3169
    %v3186 = vmul.f32 %v3096, %v3170
    %v3187 = vmul.f32 %v3098, %v3171
    %v3188 = vmul.f32 %v3100, %v3172
    %v3189 = vmul.f32 %v3038, %v3101
    %v3190 = vmul.f32 %v3040, %v3102
    %v3191 = vmul.f32 %v3042, %v3103
    %v3192 = vmul.f32 %v3044, %v3104
    %v3193 = vmul.f32 %v3046, %v3105
    %v3194 = vmul.f32 %v3048, %v3106
    %v3195 = vmul.f32 %v3050, %v3107
    %v3196 = vmul.f32 %v3052, %v3108
    %v3197 = vadd.f32 %v3181, %v3189
    %v3198 = vadd.f32 %v3182, %v3190
    %v3199 = vadd.f32 %v3183, %v3191
    %v3200 = vadd.f32 %v3184, %v3192
    %v3201 = vadd.f32 %v3185, %v3193
    %v3202 = vadd.f32 %v3186, %v3194
    %v3203 = vadd.f32 %v3187, %v3195
    %v3204 = vadd.f32 %v3188, %v3196
    %v3205 = vtanh.pop %v3197
    %v3206 = vtanh.pop %v3198
    %v3207 = vtanh.pop %v3199
    %v3208 = vtanh.pop %v3200
    %v3209 = vtanh.pop %v3201
    %v3210 = vtanh.pop %v3202
    %v3211 = vtanh.pop %v3203
    %v3212 = vtanh.pop %v3204
    %v3213 = vmul.f32 %v3142, %v3205
    %v3214 = vmul.f32 %v3144, %v3206
    %v3215 = vmul.f32 %v3146, %v3207
    %v3216 = vmul.f32 %v3148, %v3208
    %v3217 = vmul.f32 %v3150, %v3209
    %v3218 = vmul.f32 %v3152, %v3210
    %v3219 = vmul.f32 %v3154, %v3211
    %v3220 = vmul.f32 %v3156, %v3212
    %v3221 = vpack.c.bf16 %v3213, %v3213
    %v3222 = vpack.c.bf16 %v3214, %v3214
    %v3223 = vpack.c.bf16 %v3215, %v3215
    %v3224 = vpack.c.bf16 %v3216, %v3216
    %v3225 = vpack.c.bf16 %v3217, %v3217
    %v3226 = vpack.c.bf16 %v3218, %v3218
    %v3227 = vpack.c.bf16 %v3219, %v3219
    %v3228 = vpack.c.bf16 %v3220, %v3220
    %v3237 = vunpack.c.l.b16 %v3221
    %v3238 = vunpack.c.l.b16 %v3222
    %v3239 = vunpack.c.l.b16 %v3223
    %v3240 = vunpack.c.l.b16 %v3224
    %v3241 = vunpack.c.l.b16 %v3225
    %v3242 = vunpack.c.l.b16 %v3226
    %v3243 = vunpack.c.l.b16 %v3227
    %v3244 = vunpack.c.l.b16 %v3228
    %v3245 = vrot.slane %v3237, 5
    %v3246 = vrot.slane %v3238, 4
    %v3247 = vsel %vm1069, %v3246, %v3245
    %v3248 = vrot.slane %v3239, 3
    %v3249 = vsel %vm1072, %v3248, %v3247
    %v3250 = vrot.slane %v3240, 2
    %v3251 = vsel %vm1075, %v3250, %v3249
    %v3252 = vrot.slane %v3241, 1
    %v3253 = vsel %vm1078, %v3252, %v3251
    %v3254 = vsel %vm1081, %v3242, %v3253
    %v3255 = vrot.slane %v3243, 7
    %v3256 = vsel %vm1084, %v3255, %v3254
    %v3257 = vrot.slane %v3244, 6
    %v3258 = vsel %vm1087, %v3257, %v3256
    %v3259 = vpack.c.b16 %v3258, %v3258
    %3261 = vmatprep.subr.bf16.mxu0 %v611
    %3262 = vmatpush1.bf16.msra.mxu0 %v610
    %3263 = vmatprep.subr.bf16.mxu0 %v615
    %3264 = vmatpush1.bf16.msra.mxu0 %v614
    %3265 = vmatprep.subr.bf16.mxu0 %v619
    %3266 = vmatpush1.bf16.msra.mxu0 %v618
    %3267 = vmatprep.subr.bf16.mxu0 %v623
    %3268 = vmatpush1.bf16.msra.mxu0 %v622
    %3269 = vmatprep.subr.bf16.mxu0 %v627
    %3270 = vmatpush1.bf16.msra.mxu0 %v626
    %3271 = vmatprep.subr.bf16.mxu0 %v631
    %3272 = vmatpush1.bf16.msra.mxu0 %v630
    %3273 = vmatprep.subr.bf16.mxu0 %v635
    %3274 = vmatpush1.bf16.msra.mxu0 %v634
    %3275 = vmatprep.subr.bf16.mxu0 %v639
    %3276 = vmatpush1.bf16.msra.mxu0 %v638
    %3277 = vmatprep.subr.bf16.mxu0 0
    %3278 = vmatpush1.bf16.msra.mxu0 0
    %3279 = vmatprep.subr.bf16.mxu0 0
    %3280 = vmatpush1.bf16.msra.mxu0 0
    %3281 = vmatprep.subr.bf16.mxu0 0
    %3282 = vmatpush1.bf16.msra.mxu0 0
    %3283 = vmatprep.subr.bf16.mxu0 0
    %3284 = vmatpush1.bf16.msra.mxu0 0
    %3285 = vmatprep.subr.bf16.mxu0 0
    %3286 = vmatpush1.bf16.msra.mxu0 0
    %3287 = vmatprep.subr.bf16.mxu0 0
    %3288 = vmatpush1.bf16.msra.mxu0 0
    %3289 = vmatprep.subr.bf16.mxu0 0
    %3290 = vmatpush1.bf16.msra.mxu0 0
    %3291 = vmatprep.subr.bf16.mxu0 0
    %3292 = vmatpush1.bf16.msra.mxu0 0
    %3293 = vmatprep.mubr.bf16.mxu0 0
    %3294 = vmatmul.mubr.bf16.gmra.mrb[0].mxu0 %v3259
    %v3295 = vpop.f32.mrb[0].mxu0
    %v3296 = vadd.f32 0.0, %v3295
    %v3297 = vpop.f32.mrb[0].mxu0
    %v3298 = vadd.f32 0.0, %v3297
    %v3299 = vpop.f32.mrb[0].mxu0
    %v3300 = vpop.f32.mrb[0].mxu0
    %3301 = vdwg.mxu0
    %3302 = vmatprep.subr.bf16.mxu0 %v613
    %3303 = vmatpush1.bf16.msra.mxu0 %v612
    %3304 = vmatprep.subr.bf16.mxu0 %v617
    %3305 = vmatpush1.bf16.msra.mxu0 %v616
    %3306 = vmatprep.subr.bf16.mxu0 %v621
    %3307 = vmatpush1.bf16.msra.mxu0 %v620
    %3308 = vmatprep.subr.bf16.mxu0 %v625
    %3309 = vmatpush1.bf16.msra.mxu0 %v624
    %3310 = vmatprep.subr.bf16.mxu0 %v629
    %3311 = vmatpush1.bf16.msra.mxu0 %v628
    %3312 = vmatprep.subr.bf16.mxu0 %v633
    %3313 = vmatpush1.bf16.msra.mxu0 %v632
    %3314 = vmatprep.subr.bf16.mxu0 %v637
    %3315 = vmatpush1.bf16.msra.mxu0 %v636
    %3316 = vmatprep.subr.bf16.mxu0 %v641
    %3317 = vmatpush1.bf16.msra.mxu0 %v640
    %3318 = vmatprep.subr.bf16.mxu0 0
    %3319 = vmatpush1.bf16.msra.mxu0 0
    %3320 = vmatprep.subr.bf16.mxu0 0
    %3321 = vmatpush1.bf16.msra.mxu0 0
    %3322 = vmatprep.subr.bf16.mxu0 0
    %3323 = vmatpush1.bf16.msra.mxu0 0
    %3324 = vmatprep.subr.bf16.mxu0 0
    %3325 = vmatpush1.bf16.msra.mxu0 0
    %3326 = vmatprep.subr.bf16.mxu0 0
    %3327 = vmatpush1.bf16.msra.mxu0 0
    %3328 = vmatprep.subr.bf16.mxu0 0
    %3329 = vmatpush1.bf16.msra.mxu0 0
    %3330 = vmatprep.subr.bf16.mxu0 0
    %3331 = vmatpush1.bf16.msra.mxu0 0
    %3332 = vmatprep.subr.bf16.mxu0 0
    %3333 = vmatpush1.bf16.msra.mxu0 0
    %3334 = vmatprep.mubr.bf16.mxu0 0
    %3335 = vmatmul.mubr.bf16.gmra.mrb[0].mxu0 %v3259
    %v3336 = vpop.f32.mrb[0].mxu0
    %v3337 = vadd.f32 0.0, %v3336
    %v3338 = vpop.f32.mrb[0].mxu0
    %v3339 = vadd.f32 0.0, %v3338
    %v3340 = vpop.f32.mrb[0].mxu0
    %v3341 = vpop.f32.mrb[0].mxu0
    %3342 = vdwg.mxu0
    %v3347 = vrot.slane %v3296, 2
    %v3348 = vrot.slane %v3298, 2
    %v3349 = vrot.slane %v3337, 2
    %v3350 = vrot.slane %v3339, 2
    %v3351 = vrot.slane %v3296, 3
    %v3352 = vrot.slane %v3298, 3
    %v3353 = vrot.slane %v3337, 3
    %v3354 = vrot.slane %v3339, 3
    %v3355 = vrot.slane %v3296, 4
    %v3356 = vrot.slane %v3298, 4
    %v3357 = vrot.slane %v3337, 4
    %v3358 = vrot.slane %v3339, 4
    %v3359 = vrot.slane %v3296, 5
    %v3360 = vrot.slane %v3298, 5
    %v3361 = vrot.slane %v3337, 5
    %v3362 = vrot.slane %v3339, 5
    %v3363 = vrot.slane %v3296, 6
    %v3364 = vrot.slane %v3298, 6
    %v3365 = vrot.slane %v3337, 6
    %v3366 = vrot.slane %v3339, 6
    %v3367 = vrot.slane %v3296, 7
    %v3368 = vrot.slane %v3298, 7
    %v3369 = vrot.slane %v3337, 7
    %v3370 = vrot.slane %v3339, 7
    %v3371 = vrot.slane %v3296, 1
    %v3372 = vrot.slane %v3298, 1
    %v3373 = vrot.slane %v3337, 1
    %v3374 = vrot.slane %v3339, 1
    %v3407 = vadd.f32 %v403, %v3347
    %v3408 = vadd.f32 %v405, %v3348
    %v3409 = vadd.f32 %v476, %v3349
    %v3410 = vadd.f32 %v478, %v3350
    %v3411 = vadd.f32 %v407, %v3351
    %v3412 = vadd.f32 %v409, %v3352
    %v3413 = vadd.f32 %v480, %v3353
    %v3414 = vadd.f32 %v482, %v3354
    %v3415 = vadd.f32 %v413, %v3355
    %v3416 = vadd.f32 %v415, %v3356
    %v3417 = vadd.f32 %v486, %v3357
    %v3418 = vadd.f32 %v488, %v3358
    %v3419 = vadd.f32 %v417, %v3359
    %v3420 = vadd.f32 %v419, %v3360
    %v3421 = vadd.f32 %v490, %v3361
    %v3422 = vadd.f32 %v492, %v3362
    %v3423 = vadd.f32 %v423, %v3363
    %v3424 = vadd.f32 %v425, %v3364
    %v3425 = vadd.f32 %v496, %v3365
    %v3426 = vadd.f32 %v498, %v3366
    %v3427 = vadd.f32 %v427, %v3367
    %v3428 = vadd.f32 %v429, %v3368
    %v3429 = vadd.f32 %v500, %v3369
    %v3430 = vadd.f32 %v502, %v3370
    %v3431 = vadd.f32 %v433, %v3296
    %v3432 = vadd.f32 %v435, %v3298
    %v3433 = vadd.f32 %v506, %v3337
    %v3434 = vadd.f32 %v508, %v3339
    %v3435 = vadd.f32 %v437, %v3371
    %v3436 = vadd.f32 %v439, %v3372
    %v3437 = vadd.f32 %v510, %v3373
    %v3438 = vadd.f32 %v512, %v3374
    %v3439 = vxor.u32 %v3407, 2147483648
    %v3440 = vxor.u32 %v3411, 2147483648
    %v3441 = vxor.u32 %v3415, 2147483648
    %v3442 = vxor.u32 %v3419, 2147483648
    %v3443 = vxor.u32 %v3423, 2147483648
    %v3444 = vxor.u32 %v3427, 2147483648
    %v3445 = vxor.u32 %v3431, 2147483648
    %v3446 = vxor.u32 %v3435, 2147483648
    %v3447 = vmul.f32 %v3439, 1.442695
    %v3448 = vpow.pop %v3447
    %v3449 = vmul.f32 %v3440, 1.442695
    %v3450 = vpow.pop %v3449
    %v3451 = vmul.f32 %v3441, 1.442695
    %v3452 = vpow.pop %v3451
    %v3453 = vmul.f32 %v3442, 1.442695
    %v3454 = vpow.pop %v3453
    %v3455 = vmul.f32 %v3443, 1.442695
    %v3456 = vpow.pop %v3455
    %v3457 = vmul.f32 %v3444, 1.442695
    %v3458 = vpow.pop %v3457
    %v3459 = vmul.f32 %v3445, 1.442695
    %v3460 = vpow.pop %v3459
    %v3461 = vmul.f32 %v3446, 1.442695
    %v3462 = vpow.pop %v3461
    %v3463 = vadd.f32 %v3448, 1.0
    %v3464 = vadd.f32 %v3450, 1.0
    %v3465 = vadd.f32 %v3452, 1.0
    %v3466 = vadd.f32 %v3454, 1.0
    %v3467 = vadd.f32 %v3456, 1.0
    %v3468 = vadd.f32 %v3458, 1.0
    %v3469 = vadd.f32 %v3460, 1.0
    %v3470 = vadd.f32 %v3462, 1.0
    %v3471 = vrcp.pop %v3463
    %v3472 = vmul.f32 1.0, %v3471
    %v3473 = vrcp.pop %v3464
    %v3474 = vmul.f32 1.0, %v3473
    %v3475 = vrcp.pop %v3465
    %v3476 = vmul.f32 1.0, %v3475
    %v3477 = vrcp.pop %v3466
    %v3478 = vmul.f32 1.0, %v3477
    %v3479 = vrcp.pop %v3467
    %v3480 = vmul.f32 1.0, %v3479
    %v3481 = vrcp.pop %v3468
    %v3482 = vmul.f32 1.0, %v3481
    %v3483 = vrcp.pop %v3469
    %v3484 = vmul.f32 1.0, %v3483
    %v3485 = vrcp.pop %v3470
    %v3486 = vmul.f32 1.0, %v3485
    %v3487 = vxor.u32 %v3408, 2147483648
    %v3488 = vxor.u32 %v3412, 2147483648
    %v3489 = vxor.u32 %v3416, 2147483648
    %v3490 = vxor.u32 %v3420, 2147483648
    %v3491 = vxor.u32 %v3424, 2147483648
    %v3492 = vxor.u32 %v3428, 2147483648
    %v3493 = vxor.u32 %v3432, 2147483648
    %v3494 = vxor.u32 %v3436, 2147483648
    %v3495 = vmul.f32 %v3487, 1.442695
    %v3496 = vpow.pop %v3495
    %v3497 = vmul.f32 %v3488, 1.442695
    %v3498 = vpow.pop %v3497
    %v3499 = vmul.f32 %v3489, 1.442695
    %v3500 = vpow.pop %v3499
    %v3501 = vmul.f32 %v3490, 1.442695
    %v3502 = vpow.pop %v3501
    %v3503 = vmul.f32 %v3491, 1.442695
    %v3504 = vpow.pop %v3503
    %v3505 = vmul.f32 %v3492, 1.442695
    %v3506 = vpow.pop %v3505
    %v3507 = vmul.f32 %v3493, 1.442695
    %v3508 = vpow.pop %v3507
    %v3509 = vmul.f32 %v3494, 1.442695
    %v3510 = vpow.pop %v3509
    %v3511 = vadd.f32 %v3496, 1.0
    %v3512 = vadd.f32 %v3498, 1.0
    %v3513 = vadd.f32 %v3500, 1.0
    %v3514 = vadd.f32 %v3502, 1.0
    %v3515 = vadd.f32 %v3504, 1.0
    %v3516 = vadd.f32 %v3506, 1.0
    %v3517 = vadd.f32 %v3508, 1.0
    %v3518 = vadd.f32 %v3510, 1.0
    %v3519 = vrcp.pop %v3511
    %v3520 = vmul.f32 1.0, %v3519
    %v3521 = vrcp.pop %v3512
    %v3522 = vmul.f32 1.0, %v3521
    %v3523 = vrcp.pop %v3513
    %v3524 = vmul.f32 1.0, %v3523
    %v3525 = vrcp.pop %v3514
    %v3526 = vmul.f32 1.0, %v3525
    %v3527 = vrcp.pop %v3515
    %v3528 = vmul.f32 1.0, %v3527
    %v3529 = vrcp.pop %v3516
    %v3530 = vmul.f32 1.0, %v3529
    %v3531 = vrcp.pop %v3517
    %v3532 = vmul.f32 1.0, %v3531
    %v3533 = vrcp.pop %v3518
    %v3534 = vmul.f32 1.0, %v3533
    %v3535 = vtanh.pop %v3409
    %v3536 = vtanh.pop %v3413
    %v3537 = vtanh.pop %v3417
    %v3538 = vtanh.pop %v3421
    %v3539 = vtanh.pop %v3425
    %v3540 = vtanh.pop %v3429
    %v3541 = vtanh.pop %v3433
    %v3542 = vtanh.pop %v3437
    %v3543 = vxor.u32 %v3410, 2147483648
    %v3544 = vxor.u32 %v3414, 2147483648
    %v3545 = vxor.u32 %v3418, 2147483648
    %v3546 = vxor.u32 %v3422, 2147483648
    %v3547 = vxor.u32 %v3426, 2147483648
    %v3548 = vxor.u32 %v3430, 2147483648
    %v3549 = vxor.u32 %v3434, 2147483648
    %v3550 = vxor.u32 %v3438, 2147483648
    %v3551 = vmul.f32 %v3543, 1.442695
    %v3552 = vpow.pop %v3551
    %v3553 = vmul.f32 %v3544, 1.442695
    %v3554 = vpow.pop %v3553
    %v3555 = vmul.f32 %v3545, 1.442695
    %v3556 = vpow.pop %v3555
    %v3557 = vmul.f32 %v3546, 1.442695
    %v3558 = vpow.pop %v3557
    %v3559 = vmul.f32 %v3547, 1.442695
    %v3560 = vpow.pop %v3559
    %v3561 = vmul.f32 %v3548, 1.442695
    %v3562 = vpow.pop %v3561
    %v3563 = vmul.f32 %v3549, 1.442695
    %v3564 = vpow.pop %v3563
    %v3565 = vmul.f32 %v3550, 1.442695
    %v3566 = vpow.pop %v3565
    %v3567 = vadd.f32 %v3552, 1.0
    %v3568 = vadd.f32 %v3554, 1.0
    %v3569 = vadd.f32 %v3556, 1.0
    %v3570 = vadd.f32 %v3558, 1.0
    %v3571 = vadd.f32 %v3560, 1.0
    %v3572 = vadd.f32 %v3562, 1.0
    %v3573 = vadd.f32 %v3564, 1.0
    %v3574 = vadd.f32 %v3566, 1.0
    %v3575 = vrcp.pop %v3567
    %v3576 = vmul.f32 1.0, %v3575
    %v3577 = vrcp.pop %v3568
    %v3578 = vmul.f32 1.0, %v3577
    %v3579 = vrcp.pop %v3569
    %v3580 = vmul.f32 1.0, %v3579
    %v3581 = vrcp.pop %v3570
    %v3582 = vmul.f32 1.0, %v3581
    %v3583 = vrcp.pop %v3571
    %v3584 = vmul.f32 1.0, %v3583
    %v3585 = vrcp.pop %v3572
    %v3586 = vmul.f32 1.0, %v3585
    %v3587 = vrcp.pop %v3573
    %v3588 = vmul.f32 1.0, %v3587
    %v3589 = vrcp.pop %v3574
    %v3590 = vmul.f32 1.0, %v3589
    %v3599 = vrot.slane %v3197, 7
    %v3600 = vrot.slane %v3198, 7
    %v3601 = vrot.slane %v3199, 7
    %v3602 = vrot.slane %v3200, 7
    %v3603 = vrot.slane %v3201, 7
    %v3604 = vrot.slane %v3202, 7
    %v3605 = vrot.slane %v3203, 7
    %v3606 = vrot.slane %v3204, 7
    %v3615 = vmul.f32 %v3520, %v3599
    %v3616 = vmul.f32 %v3522, %v3600
    %v3617 = vmul.f32 %v3524, %v3601
    %v3618 = vmul.f32 %v3526, %v3602
    %v3619 = vmul.f32 %v3528, %v3603
    %v3620 = vmul.f32 %v3530, %v3604
    %v3621 = vmul.f32 %v3532, %v3605
    %v3622 = vmul.f32 %v3534, %v3606
    %v3623 = vmul.f32 %v3472, %v3535
    %v3624 = vmul.f32 %v3474, %v3536
    %v3625 = vmul.f32 %v3476, %v3537
    %v3626 = vmul.f32 %v3478, %v3538
    %v3627 = vmul.f32 %v3480, %v3539
    %v3628 = vmul.f32 %v3482, %v3540
    %v3629 = vmul.f32 %v3484, %v3541
    %v3630 = vmul.f32 %v3486, %v3542
    %v3631 = vadd.f32 %v3615, %v3623
    %v3632 = vadd.f32 %v3616, %v3624
    %v3633 = vadd.f32 %v3617, %v3625
    %v3634 = vadd.f32 %v3618, %v3626
    %v3635 = vadd.f32 %v3619, %v3627
    %v3636 = vadd.f32 %v3620, %v3628
    %v3637 = vadd.f32 %v3621, %v3629
    %v3638 = vadd.f32 %v3622, %v3630
    %v3639 = vtanh.pop %v3631
    %v3640 = vtanh.pop %v3632
    %v3641 = vtanh.pop %v3633
    %v3642 = vtanh.pop %v3634
    %v3643 = vtanh.pop %v3635
    %v3644 = vtanh.pop %v3636
    %v3645 = vtanh.pop %v3637
    %v3646 = vtanh.pop %v3638
    %v3647 = vmul.f32 %v3576, %v3639
    %v3648 = vmul.f32 %v3578, %v3640
    %v3649 = vmul.f32 %v3580, %v3641
    %v3650 = vmul.f32 %v3582, %v3642
    %v3651 = vmul.f32 %v3584, %v3643
    %v3652 = vmul.f32 %v3586, %v3644
    %v3653 = vmul.f32 %v3588, %v3645
    %v3654 = vmul.f32 %v3590, %v3646
    %v3655 = vpack.c.bf16 %v3647, %v3647
    %v3656 = vpack.c.bf16 %v3648, %v3648
    %v3657 = vpack.c.bf16 %v3649, %v3649
    %v3658 = vpack.c.bf16 %v3650, %v3650
    %v3659 = vpack.c.bf16 %v3651, %v3651
    %v3660 = vpack.c.bf16 %v3652, %v3652
    %v3661 = vpack.c.bf16 %v3653, %v3653
    %v3662 = vpack.c.bf16 %v3654, %v3654
    %v3671 = vunpack.c.l.b16 %v3655
    %v3672 = vunpack.c.l.b16 %v3656
    %v3673 = vunpack.c.l.b16 %v3657
    %v3674 = vunpack.c.l.b16 %v3658
    %v3675 = vunpack.c.l.b16 %v3659
    %v3676 = vunpack.c.l.b16 %v3660
    %v3677 = vunpack.c.l.b16 %v3661
    %v3678 = vunpack.c.l.b16 %v3662
    %v3679 = vrot.slane %v3671, 6
    %v3680 = vrot.slane %v3672, 5
    %v3681 = vsel %vm1069, %v3680, %v3679
    %v3682 = vrot.slane %v3673, 4
    %v3683 = vsel %vm1072, %v3682, %v3681
    %v3684 = vrot.slane %v3674, 3
    %v3685 = vsel %vm1075, %v3684, %v3683
    %v3686 = vrot.slane %v3675, 2
    %v3687 = vsel %vm1078, %v3686, %v3685
    %v3688 = vrot.slane %v3676, 1
    %v3689 = vsel %vm1081, %v3688, %v3687
    %v3690 = vsel %vm1084, %v3677, %v3689
    %v3691 = vrot.slane %v3678, 7
    %v3692 = vsel %vm1087, %v3691, %v3690
    %v3693 = vpack.c.b16 %v3692, %v3692
    %3695 = vmatprep.subr.bf16.mxu0 %v611
    %3696 = vmatpush1.bf16.msra.mxu0 %v610
    %3697 = vmatprep.subr.bf16.mxu0 %v615
    %3698 = vmatpush1.bf16.msra.mxu0 %v614
    %3699 = vmatprep.subr.bf16.mxu0 %v619
    %3700 = vmatpush1.bf16.msra.mxu0 %v618
    %3701 = vmatprep.subr.bf16.mxu0 %v623
    %3702 = vmatpush1.bf16.msra.mxu0 %v622
    %3703 = vmatprep.subr.bf16.mxu0 %v627
    %3704 = vmatpush1.bf16.msra.mxu0 %v626
    %3705 = vmatprep.subr.bf16.mxu0 %v631
    %3706 = vmatpush1.bf16.msra.mxu0 %v630
    %3707 = vmatprep.subr.bf16.mxu0 %v635
    %3708 = vmatpush1.bf16.msra.mxu0 %v634
    %3709 = vmatprep.subr.bf16.mxu0 %v639
    %3710 = vmatpush1.bf16.msra.mxu0 %v638
    %3711 = vmatprep.subr.bf16.mxu0 0
    %3712 = vmatpush1.bf16.msra.mxu0 0
    %3713 = vmatprep.subr.bf16.mxu0 0
    %3714 = vmatpush1.bf16.msra.mxu0 0
    %3715 = vmatprep.subr.bf16.mxu0 0
    %3716 = vmatpush1.bf16.msra.mxu0 0
    %3717 = vmatprep.subr.bf16.mxu0 0
    %3718 = vmatpush1.bf16.msra.mxu0 0
    %3719 = vmatprep.subr.bf16.mxu0 0
    %3720 = vmatpush1.bf16.msra.mxu0 0
    %3721 = vmatprep.subr.bf16.mxu0 0
    %3722 = vmatpush1.bf16.msra.mxu0 0
    %3723 = vmatprep.subr.bf16.mxu0 0
    %3724 = vmatpush1.bf16.msra.mxu0 0
    %3725 = vmatprep.subr.bf16.mxu0 0
    %3726 = vmatpush1.bf16.msra.mxu0 0
    %3727 = vmatprep.mubr.bf16.mxu0 0
    %3728 = vmatmul.mubr.bf16.gmra.mrb[0].mxu0 %v3693
    %v3729 = vpop.f32.mrb[0].mxu0
    %v3730 = vadd.f32 0.0, %v3729
    %v3731 = vpop.f32.mrb[0].mxu0
    %v3732 = vadd.f32 0.0, %v3731
    %v3733 = vpop.f32.mrb[0].mxu0
    %v3734 = vpop.f32.mrb[0].mxu0
    %3735 = vdwg.mxu0
    %3736 = vmatprep.subr.bf16.mxu0 %v613
    %3737 = vmatpush1.bf16.msra.mxu0 %v612
    %3738 = vmatprep.subr.bf16.mxu0 %v617
    %3739 = vmatpush1.bf16.msra.mxu0 %v616
    %3740 = vmatprep.subr.bf16.mxu0 %v621
    %3741 = vmatpush1.bf16.msra.mxu0 %v620
    %3742 = vmatprep.subr.bf16.mxu0 %v625
    %3743 = vmatpush1.bf16.msra.mxu0 %v624
    %3744 = vmatprep.subr.bf16.mxu0 %v629
    %3745 = vmatpush1.bf16.msra.mxu0 %v628
    %3746 = vmatprep.subr.bf16.mxu0 %v633
    %3747 = vmatpush1.bf16.msra.mxu0 %v632
    %3748 = vmatprep.subr.bf16.mxu0 %v637
    %3749 = vmatpush1.bf16.msra.mxu0 %v636
    %3750 = vmatprep.subr.bf16.mxu0 %v641
    %3751 = vmatpush1.bf16.msra.mxu0 %v640
    %3752 = vmatprep.subr.bf16.mxu0 0
    %3753 = vmatpush1.bf16.msra.mxu0 0
    %3754 = vmatprep.subr.bf16.mxu0 0
    %3755 = vmatpush1.bf16.msra.mxu0 0
    %3756 = vmatprep.subr.bf16.mxu0 0
    %3757 = vmatpush1.bf16.msra.mxu0 0
    %3758 = vmatprep.subr.bf16.mxu0 0
    %3759 = vmatpush1.bf16.msra.mxu0 0
    %3760 = vmatprep.subr.bf16.mxu0 0
    %3761 = vmatpush1.bf16.msra.mxu0 0
    %3762 = vmatprep.subr.bf16.mxu0 0
    %3763 = vmatpush1.bf16.msra.mxu0 0
    %3764 = vmatprep.subr.bf16.mxu0 0
    %3765 = vmatpush1.bf16.msra.mxu0 0
    %3766 = vmatprep.subr.bf16.mxu0 0
    %3767 = vmatpush1.bf16.msra.mxu0 0
    %3768 = vmatprep.mubr.bf16.mxu0 0
    %3769 = vmatmul.mubr.bf16.gmra.mrb[0].mxu0 %v3693
    %v3770 = vpop.f32.mrb[0].mxu0
    %v3771 = vadd.f32 0.0, %v3770
    %v3772 = vpop.f32.mrb[0].mxu0
    %v3773 = vadd.f32 0.0, %v3772
    %v3774 = vpop.f32.mrb[0].mxu0
    %v3775 = vpop.f32.mrb[0].mxu0
    %3776 = vdwg.mxu0
    %v3781 = vrot.slane %v3730, 1
    %v3782 = vrot.slane %v3732, 1
    %v3783 = vrot.slane %v3771, 1
    %v3784 = vrot.slane %v3773, 1
    %v3785 = vrot.slane %v3730, 2
    %v3786 = vrot.slane %v3732, 2
    %v3787 = vrot.slane %v3771, 2
    %v3788 = vrot.slane %v3773, 2
    %v3789 = vrot.slane %v3730, 3
    %v3790 = vrot.slane %v3732, 3
    %v3791 = vrot.slane %v3771, 3
    %v3792 = vrot.slane %v3773, 3
    %v3793 = vrot.slane %v3730, 4
    %v3794 = vrot.slane %v3732, 4
    %v3795 = vrot.slane %v3771, 4
    %v3796 = vrot.slane %v3773, 4
    %v3797 = vrot.slane %v3730, 5
    %v3798 = vrot.slane %v3732, 5
    %v3799 = vrot.slane %v3771, 5
    %v3800 = vrot.slane %v3773, 5
    %v3801 = vrot.slane %v3730, 6
    %v3802 = vrot.slane %v3732, 6
    %v3803 = vrot.slane %v3771, 6
    %v3804 = vrot.slane %v3773, 6
    %v3805 = vrot.slane %v3730, 7
    %v3806 = vrot.slane %v3732, 7
    %v3807 = vrot.slane %v3771, 7
    %v3808 = vrot.slane %v3773, 7
    %v3841 = vadd.f32 %v403, %v3781
    %v3842 = vadd.f32 %v405, %v3782
    %v3843 = vadd.f32 %v476, %v3783
    %v3844 = vadd.f32 %v478, %v3784
    %v3845 = vadd.f32 %v407, %v3785
    %v3846 = vadd.f32 %v409, %v3786
    %v3847 = vadd.f32 %v480, %v3787
    %v3848 = vadd.f32 %v482, %v3788
    %v3849 = vadd.f32 %v413, %v3789
    %v3850 = vadd.f32 %v415, %v3790
    %v3851 = vadd.f32 %v486, %v3791
    %v3852 = vadd.f32 %v488, %v3792
    %v3853 = vadd.f32 %v417, %v3793
    %v3854 = vadd.f32 %v419, %v3794
    %v3855 = vadd.f32 %v490, %v3795
    %v3856 = vadd.f32 %v492, %v3796
    %v3857 = vadd.f32 %v423, %v3797
    %v3858 = vadd.f32 %v425, %v3798
    %v3859 = vadd.f32 %v496, %v3799
    %v3860 = vadd.f32 %v498, %v3800
    %v3861 = vadd.f32 %v427, %v3801
    %v3862 = vadd.f32 %v429, %v3802
    %v3863 = vadd.f32 %v500, %v3803
    %v3864 = vadd.f32 %v502, %v3804
    %v3865 = vadd.f32 %v433, %v3805
    %v3866 = vadd.f32 %v435, %v3806
    %v3867 = vadd.f32 %v506, %v3807
    %v3868 = vadd.f32 %v508, %v3808
    %v3869 = vadd.f32 %v437, %v3730
    %v3870 = vadd.f32 %v439, %v3732
    %v3871 = vadd.f32 %v510, %v3771
    %v3872 = vadd.f32 %v512, %v3773
    %v3873 = vxor.u32 %v3841, 2147483648
    %v3874 = vxor.u32 %v3845, 2147483648
    %v3875 = vxor.u32 %v3849, 2147483648
    %v3876 = vxor.u32 %v3853, 2147483648
    %v3877 = vxor.u32 %v3857, 2147483648
    %v3878 = vxor.u32 %v3861, 2147483648
    %v3879 = vxor.u32 %v3865, 2147483648
    %v3880 = vxor.u32 %v3869, 2147483648
    %v3881 = vmul.f32 %v3873, 1.442695
    %v3882 = vpow.pop %v3881
    %v3883 = vmul.f32 %v3874, 1.442695
    %v3884 = vpow.pop %v3883
    %v3885 = vmul.f32 %v3875, 1.442695
    %v3886 = vpow.pop %v3885
    %v3887 = vmul.f32 %v3876, 1.442695
    %v3888 = vpow.pop %v3887
    %v3889 = vmul.f32 %v3877, 1.442695
    %v3890 = vpow.pop %v3889
    %v3891 = vmul.f32 %v3878, 1.442695
    %v3892 = vpow.pop %v3891
    %v3893 = vmul.f32 %v3879, 1.442695
    %v3894 = vpow.pop %v3893
    %v3895 = vmul.f32 %v3880, 1.442695
    %v3896 = vpow.pop %v3895
    %v3897 = vadd.f32 %v3882, 1.0
    %v3898 = vadd.f32 %v3884, 1.0
    %v3899 = vadd.f32 %v3886, 1.0
    %v3900 = vadd.f32 %v3888, 1.0
    %v3901 = vadd.f32 %v3890, 1.0
    %v3902 = vadd.f32 %v3892, 1.0
    %v3903 = vadd.f32 %v3894, 1.0
    %v3904 = vadd.f32 %v3896, 1.0
    %v3905 = vrcp.pop %v3897
    %v3906 = vmul.f32 1.0, %v3905
    %v3907 = vrcp.pop %v3898
    %v3908 = vmul.f32 1.0, %v3907
    %v3909 = vrcp.pop %v3899
    %v3910 = vmul.f32 1.0, %v3909
    %v3911 = vrcp.pop %v3900
    %v3912 = vmul.f32 1.0, %v3911
    %v3913 = vrcp.pop %v3901
    %v3914 = vmul.f32 1.0, %v3913
    %v3915 = vrcp.pop %v3902
    %v3916 = vmul.f32 1.0, %v3915
    %v3917 = vrcp.pop %v3903
    %v3918 = vmul.f32 1.0, %v3917
    %v3919 = vrcp.pop %v3904
    %v3920 = vmul.f32 1.0, %v3919
    %v3921 = vxor.u32 %v3842, 2147483648
    %v3922 = vxor.u32 %v3846, 2147483648
    %v3923 = vxor.u32 %v3850, 2147483648
    %v3924 = vxor.u32 %v3854, 2147483648
    %v3925 = vxor.u32 %v3858, 2147483648
    %v3926 = vxor.u32 %v3862, 2147483648
    %v3927 = vxor.u32 %v3866, 2147483648
    %v3928 = vxor.u32 %v3870, 2147483648
    %v3929 = vmul.f32 %v3921, 1.442695
    %v3930 = vpow.pop %v3929
    %v3931 = vmul.f32 %v3922, 1.442695
    %v3932 = vpow.pop %v3931
    %v3933 = vmul.f32 %v3923, 1.442695
    %v3934 = vpow.pop %v3933
    %v3935 = vmul.f32 %v3924, 1.442695
    %v3936 = vpow.pop %v3935
    %v3937 = vmul.f32 %v3925, 1.442695
    %v3938 = vpow.pop %v3937
    %v3939 = vmul.f32 %v3926, 1.442695
    %v3940 = vpow.pop %v3939
    %v3941 = vmul.f32 %v3927, 1.442695
    %v3942 = vpow.pop %v3941
    %v3943 = vmul.f32 %v3928, 1.442695
    %v3944 = vpow.pop %v3943
    %v3945 = vadd.f32 %v3930, 1.0
    %v3946 = vadd.f32 %v3932, 1.0
    %v3947 = vadd.f32 %v3934, 1.0
    %v3948 = vadd.f32 %v3936, 1.0
    %v3949 = vadd.f32 %v3938, 1.0
    %v3950 = vadd.f32 %v3940, 1.0
    %v3951 = vadd.f32 %v3942, 1.0
    %v3952 = vadd.f32 %v3944, 1.0
    %v3953 = vrcp.pop %v3945
    %v3954 = vmul.f32 1.0, %v3953
    %v3955 = vrcp.pop %v3946
    %v3956 = vmul.f32 1.0, %v3955
    %v3957 = vrcp.pop %v3947
    %v3958 = vmul.f32 1.0, %v3957
    %v3959 = vrcp.pop %v3948
    %v3960 = vmul.f32 1.0, %v3959
    %v3961 = vrcp.pop %v3949
    %v3962 = vmul.f32 1.0, %v3961
    %v3963 = vrcp.pop %v3950
    %v3964 = vmul.f32 1.0, %v3963
    %v3965 = vrcp.pop %v3951
    %v3966 = vmul.f32 1.0, %v3965
    %v3967 = vrcp.pop %v3952
    %v3968 = vmul.f32 1.0, %v3967
    %v3969 = vtanh.pop %v3843
    %v3970 = vtanh.pop %v3847
    %v3971 = vtanh.pop %v3851
    %v3972 = vtanh.pop %v3855
    %v3973 = vtanh.pop %v3859
    %v3974 = vtanh.pop %v3863
    %v3975 = vtanh.pop %v3867
    %v3976 = vtanh.pop %v3871
    %v3977 = vxor.u32 %v3844, 2147483648
    %v3978 = vxor.u32 %v3848, 2147483648
    %v3979 = vxor.u32 %v3852, 2147483648
    %v3980 = vxor.u32 %v3856, 2147483648
    %v3981 = vxor.u32 %v3860, 2147483648
    %v3982 = vxor.u32 %v3864, 2147483648
    %v3983 = vxor.u32 %v3868, 2147483648
    %v3984 = vxor.u32 %v3872, 2147483648
    %v3985 = vmul.f32 %v3977, 1.442695
    %v3986 = vpow.pop %v3985
    %v3987 = vmul.f32 %v3978, 1.442695
    %v3988 = vpow.pop %v3987
    %v3989 = vmul.f32 %v3979, 1.442695
    %v3990 = vpow.pop %v3989
    %v3991 = vmul.f32 %v3980, 1.442695
    %v3992 = vpow.pop %v3991
    %v3993 = vmul.f32 %v3981, 1.442695
    %v3994 = vpow.pop %v3993
    %v3995 = vmul.f32 %v3982, 1.442695
    %v3996 = vpow.pop %v3995
    %v3997 = vmul.f32 %v3983, 1.442695
    %v3998 = vpow.pop %v3997
    %v3999 = vmul.f32 %v3984, 1.442695
    %v4000 = vpow.pop %v3999
    %v4001 = vadd.f32 %v3986, 1.0
    %v4002 = vadd.f32 %v3988, 1.0
    %v4003 = vadd.f32 %v3990, 1.0
    %v4004 = vadd.f32 %v3992, 1.0
    %v4005 = vadd.f32 %v3994, 1.0
    %v4006 = vadd.f32 %v3996, 1.0
    %v4007 = vadd.f32 %v3998, 1.0
    %v4008 = vadd.f32 %v4000, 1.0
    %v4009 = vrcp.pop %v4001
    %v4010 = vmul.f32 1.0, %v4009
    %v4011 = vrcp.pop %v4002
    %v4012 = vmul.f32 1.0, %v4011
    %v4013 = vrcp.pop %v4003
    %v4014 = vmul.f32 1.0, %v4013
    %v4015 = vrcp.pop %v4004
    %v4016 = vmul.f32 1.0, %v4015
    %v4017 = vrcp.pop %v4005
    %v4018 = vmul.f32 1.0, %v4017
    %v4019 = vrcp.pop %v4006
    %v4020 = vmul.f32 1.0, %v4019
    %v4021 = vrcp.pop %v4007
    %v4022 = vmul.f32 1.0, %v4021
    %v4023 = vrcp.pop %v4008
    %v4024 = vmul.f32 1.0, %v4023
    %v4033 = vrot.slane %v3631, 7
    %v4034 = vrot.slane %v3632, 7
    %v4035 = vrot.slane %v3633, 7
    %v4036 = vrot.slane %v3634, 7
    %v4037 = vrot.slane %v3635, 7
    %v4038 = vrot.slane %v3636, 7
    %v4039 = vrot.slane %v3637, 7
    %v4040 = vrot.slane %v3638, 7
    %v4049 = vmul.f32 %v3954, %v4033
    %v4050 = vmul.f32 %v3956, %v4034
    %v4051 = vmul.f32 %v3958, %v4035
    %v4052 = vmul.f32 %v3960, %v4036
    %v4053 = vmul.f32 %v3962, %v4037
    %v4054 = vmul.f32 %v3964, %v4038
    %v4055 = vmul.f32 %v3966, %v4039
    %v4056 = vmul.f32 %v3968, %v4040
    %v4057 = vmul.f32 %v3906, %v3969
    %v4058 = vmul.f32 %v3908, %v3970
    %v4059 = vmul.f32 %v3910, %v3971
    %v4060 = vmul.f32 %v3912, %v3972
    %v4061 = vmul.f32 %v3914, %v3973
    %v4062 = vmul.f32 %v3916, %v3974
    %v4063 = vmul.f32 %v3918, %v3975
    %v4064 = vmul.f32 %v3920, %v3976
    %v4065 = vadd.f32 %v4049, %v4057
    %v4066 = vadd.f32 %v4050, %v4058
    %v4067 = vadd.f32 %v4051, %v4059
    %v4068 = vadd.f32 %v4052, %v4060
    %v4069 = vadd.f32 %v4053, %v4061
    %v4070 = vadd.f32 %v4054, %v4062
    %v4071 = vadd.f32 %v4055, %v4063
    %v4072 = vadd.f32 %v4056, %v4064
    %v4073 = vtanh.pop %v4065
    %v4074 = vtanh.pop %v4066
    %v4075 = vtanh.pop %v4067
    %v4076 = vtanh.pop %v4068
    %v4077 = vtanh.pop %v4069
    %v4078 = vtanh.pop %v4070
    %v4079 = vtanh.pop %v4071
    %v4080 = vtanh.pop %v4072
    %v4081 = vmul.f32 %v4010, %v4073
    %v4082 = vmul.f32 %v4012, %v4074
    %v4083 = vmul.f32 %v4014, %v4075
    %v4084 = vmul.f32 %v4016, %v4076
    %v4085 = vmul.f32 %v4018, %v4077
    %v4086 = vmul.f32 %v4020, %v4078
    %v4087 = vmul.f32 %v4022, %v4079
    %v4088 = vmul.f32 %v4024, %v4080
    %v4097 = vrot.slane %v1477, 1
    %v4098 = vrot.slane %v1478, 1
    %v4099 = vrot.slane %v1479, 1
    %v4100 = vrot.slane %v1480, 1
    %v4101 = vrot.slane %v1481, 1
    %v4102 = vrot.slane %v1482, 1
    %v4103 = vrot.slane %v1483, 1
    %v4104 = vrot.slane %v1484, 1
    %v4121 = vrot.slane %v1911, 2
    %v4122 = vrot.slane %v1912, 2
    %v4123 = vrot.slane %v1913, 2
    %v4124 = vrot.slane %v1914, 2
    %v4125 = vrot.slane %v1915, 2
    %v4126 = vrot.slane %v1916, 2
    %v4127 = vrot.slane %v1917, 2
    %v4128 = vrot.slane %v1918, 2
    %v4145 = vrot.slane %v2345, 3
    %v4146 = vrot.slane %v2346, 3
    %v4147 = vrot.slane %v2347, 3
    %v4148 = vrot.slane %v2348, 3
    %v4149 = vrot.slane %v2349, 3
    %v4150 = vrot.slane %v2350, 3
    %v4151 = vrot.slane %v2351, 3
    %v4152 = vrot.slane %v2352, 3
    %v4169 = vrot.slane %v2779, 4
    %v4170 = vrot.slane %v2780, 4
    %v4171 = vrot.slane %v2781, 4
    %v4172 = vrot.slane %v2782, 4
    %v4173 = vrot.slane %v2783, 4
    %v4174 = vrot.slane %v2784, 4
    %v4175 = vrot.slane %v2785, 4
    %v4176 = vrot.slane %v2786, 4
    %v4193 = vrot.slane %v3213, 5
    %v4194 = vrot.slane %v3214, 5
    %v4195 = vrot.slane %v3215, 5
    %v4196 = vrot.slane %v3216, 5
    %v4197 = vrot.slane %v3217, 5
    %v4198 = vrot.slane %v3218, 5
    %v4199 = vrot.slane %v3219, 5
    %v4200 = vrot.slane %v3220, 5
    %v4217 = vrot.slane %v3647, 6
    %v4218 = vrot.slane %v3648, 6
    %v4219 = vrot.slane %v3649, 6
    %v4220 = vrot.slane %v3650, 6
    %v4221 = vrot.slane %v3651, 6
    %v4222 = vrot.slane %v3652, 6
    %v4223 = vrot.slane %v3653, 6
    %v4224 = vrot.slane %v3654, 6
    %v4241 = vrot.slane %v4081, 7
    %v4242 = vrot.slane %v4082, 7
    %v4243 = vrot.slane %v4083, 7
    %v4244 = vrot.slane %v4084, 7
    %v4245 = vrot.slane %v4085, 7
    %v4246 = vrot.slane %v4086, 7
    %v4247 = vrot.slane %v4087, 7
    %v4248 = vrot.slane %v4088, 7
    %v4257 = vpack.c.bf16 %v4097, %v4097
    %v4258 = vpack.c.bf16 %v4098, %v4098
    %v4259 = vpack.c.bf16 %v4099, %v4099
    %v4260 = vpack.c.bf16 %v4100, %v4100
    %v4261 = vpack.c.bf16 %v4101, %v4101
    %v4262 = vpack.c.bf16 %v4102, %v4102
    %v4263 = vpack.c.bf16 %v4103, %v4103
    %v4264 = vpack.c.bf16 %v4104, %v4104
    %v4265 = vpack.c.bf16 %v4121, %v4121
    %v4266 = vpack.c.bf16 %v4122, %v4122
    %v4267 = vpack.c.bf16 %v4123, %v4123
    %v4268 = vpack.c.bf16 %v4124, %v4124
    %v4269 = vpack.c.bf16 %v4125, %v4125
    %v4270 = vpack.c.bf16 %v4126, %v4126
    %v4271 = vpack.c.bf16 %v4127, %v4127
    %v4272 = vpack.c.bf16 %v4128, %v4128
    %v4273 = vpack.c.bf16 %v4145, %v4145
    %v4274 = vpack.c.bf16 %v4146, %v4146
    %v4275 = vpack.c.bf16 %v4147, %v4147
    %v4276 = vpack.c.bf16 %v4148, %v4148
    %v4277 = vpack.c.bf16 %v4149, %v4149
    %v4278 = vpack.c.bf16 %v4150, %v4150
    %v4279 = vpack.c.bf16 %v4151, %v4151
    %v4280 = vpack.c.bf16 %v4152, %v4152
    %v4281 = vpack.c.bf16 %v4169, %v4169
    %v4282 = vpack.c.bf16 %v4170, %v4170
    %v4283 = vpack.c.bf16 %v4171, %v4171
    %v4284 = vpack.c.bf16 %v4172, %v4172
    %v4285 = vpack.c.bf16 %v4173, %v4173
    %v4286 = vpack.c.bf16 %v4174, %v4174
    %v4287 = vpack.c.bf16 %v4175, %v4175
    %v4288 = vpack.c.bf16 %v4176, %v4176
    %v4289 = vpack.c.bf16 %v4193, %v4193
    %v4290 = vpack.c.bf16 %v4194, %v4194
    %v4291 = vpack.c.bf16 %v4195, %v4195
    %v4292 = vpack.c.bf16 %v4196, %v4196
    %v4293 = vpack.c.bf16 %v4197, %v4197
    %v4294 = vpack.c.bf16 %v4198, %v4198
    %v4295 = vpack.c.bf16 %v4199, %v4199
    %v4296 = vpack.c.bf16 %v4200, %v4200
    %v4297 = vpack.c.bf16 %v4217, %v4217
    %v4298 = vpack.c.bf16 %v4218, %v4218
    %v4299 = vpack.c.bf16 %v4219, %v4219
    %v4300 = vpack.c.bf16 %v4220, %v4220
    %v4301 = vpack.c.bf16 %v4221, %v4221
    %v4302 = vpack.c.bf16 %v4222, %v4222
    %v4303 = vpack.c.bf16 %v4223, %v4223
    %v4304 = vpack.c.bf16 %v4224, %v4224
    %v4305 = vpack.c.bf16 %v4241, %v4241
    %v4306 = vpack.c.bf16 %v4242, %v4242
    %v4307 = vpack.c.bf16 %v4243, %v4243
    %v4308 = vpack.c.bf16 %v4244, %v4244
    %v4309 = vpack.c.bf16 %v4245, %v4245
    %v4310 = vpack.c.bf16 %v4246, %v4246
    %v4311 = vpack.c.bf16 %v4247, %v4247
    %v4312 = vpack.c.bf16 %v4248, %v4248
    %v4313 = vld [vmem:[#allocation7] sm:$0xff]
    %v4314 = vld [vmem:[#allocation7 + $0x8] sm:$0xff]
    %v4315 = vld [vmem:[#allocation7 + $0x10] sm:$0xff]
    %v4316 = vld [vmem:[#allocation7 + $0x18] sm:$0xff]
    %v4317 = vld [vmem:[#allocation7 + $0x20] sm:$0xff]
    %v4318 = vld [vmem:[#allocation7 + $0x28] sm:$0xff]
    %v4319 = vld [vmem:[#allocation7 + $0x30] sm:$0xff]
    %v4320 = vld [vmem:[#allocation7 + $0x38] sm:$0xff]
    %v4321 = vld [vmem:[#allocation7 + $0x40] sm:$0xff]
    %v4322 = vld [vmem:[#allocation7 + $0x48] sm:$0xff]
    %v4323 = vld [vmem:[#allocation7 + $0x50] sm:$0xff]
    %v4324 = vld [vmem:[#allocation7 + $0x58] sm:$0xff]
    %v4325 = vld [vmem:[#allocation7 + $0x60] sm:$0xff]
    %v4326 = vld [vmem:[#allocation7 + $0x68] sm:$0xff]
    %v4327 = vld [vmem:[#allocation7 + $0x70] sm:$0xff]
    %v4328 = vld [vmem:[#allocation7 + $0x78] sm:$0xff]
    %v4329 = vld [vmem:[#allocation7 + $0x80] sm:$0xff]
    %v4330 = vld [vmem:[#allocation7 + $0x88] sm:$0xff]
    %v4331 = vld [vmem:[#allocation7 + $0x90] sm:$0xff]
    %v4332 = vld [vmem:[#allocation7 + $0x98] sm:$0xff]
    %v4333 = vld [vmem:[#allocation7 + $0xa0] sm:$0xff]
    %v4334 = vld [vmem:[#allocation7 + $0xa8] sm:$0xff]
    %v4335 = vld [vmem:[#allocation7 + $0xb0] sm:$0xff]
    %v4336 = vld [vmem:[#allocation7 + $0xb8] sm:$0xff]
    %v4337 = vld [vmem:[#allocation7 + $0xc0] sm:$0xff]
    %v4338 = vld [vmem:[#allocation7 + $0xc8] sm:$0xff]
    %v4339 = vld [vmem:[#allocation7 + $0xd0] sm:$0xff]
    %v4340 = vld [vmem:[#allocation7 + $0xd8] sm:$0xff]
    %v4341 = vld [vmem:[#allocation7 + $0xe0] sm:$0xff]
    %v4342 = vld [vmem:[#allocation7 + $0xe8] sm:$0xff]
    %v4343 = vld [vmem:[#allocation7 + $0xf0] sm:$0xff]
    %v4344 = vld [vmem:[#allocation7 + $0xf8] sm:$0xff]
    %v4345 = vld [vmem:[#allocation8] sm:$0xff]
    %v4346 = vld [vmem:[#allocation8 + $0x8] sm:$0xff]
    %v4347 = vld [vmem:[#allocation8 + $0x10] sm:$0xff]
    %v4348 = vld [vmem:[#allocation8 + $0x18] sm:$0xff]
    %v4349 = vld [vmem:[#allocation8 + $0x20] sm:$0xff]
    %v4350 = vld [vmem:[#allocation8 + $0x28] sm:$0xff]
    %v4351 = vld [vmem:[#allocation8 + $0x30] sm:$0xff]
    %v4352 = vld [vmem:[#allocation8 + $0x38] sm:$0xff]
    %v4353 = vld [vmem:[#allocation8 + $0x40] sm:$0xff]
    %v4354 = vld [vmem:[#allocation8 + $0x48] sm:$0xff]
    %v4355 = vld [vmem:[#allocation8 + $0x50] sm:$0xff]
    %v4356 = vld [vmem:[#allocation8 + $0x58] sm:$0xff]
    %v4357 = vld [vmem:[#allocation8 + $0x60] sm:$0xff]
    %v4358 = vld [vmem:[#allocation8 + $0x68] sm:$0xff]
    %v4359 = vld [vmem:[#allocation8 + $0x70] sm:$0xff]
    %v4360 = vld [vmem:[#allocation8 + $0x78] sm:$0xff]
    %v4361 = vld [vmem:[#allocation8 + $0x80] sm:$0xff]
    %v4362 = vld [vmem:[#allocation8 + $0x88] sm:$0xff]
    %v4363 = vld [vmem:[#allocation8 + $0x90] sm:$0xff]
    %v4364 = vld [vmem:[#allocation8 + $0x98] sm:$0xff]
    %v4365 = vld [vmem:[#allocation8 + $0xa0] sm:$0xff]
    %v4366 = vld [vmem:[#allocation8 + $0xa8] sm:$0xff]
    %v4367 = vld [vmem:[#allocation8 + $0xb0] sm:$0xff]
    %v4368 = vld [vmem:[#allocation8 + $0xb8] sm:$0xff]
    %v4369 = vld [vmem:[#allocation8 + $0xc0] sm:$0xff]
    %v4370 = vld [vmem:[#allocation8 + $0xc8] sm:$0xff]
    %v4371 = vld [vmem:[#allocation8 + $0xd0] sm:$0xff]
    %v4372 = vld [vmem:[#allocation8 + $0xd8] sm:$0xff]
    %v4373 = vld [vmem:[#allocation8 + $0xe0] sm:$0xff]
    %v4374 = vld [vmem:[#allocation8 + $0xe8] sm:$0xff]
    %v4375 = vld [vmem:[#allocation8 + $0xf0] sm:$0xff]
    %v4376 = vld [vmem:[#allocation8 + $0xf8] sm:$0xff]
    %v4377 = vld [vmem:[%s6] sm:$0xf]
    %v4379 = vlaneseq
    %v4380 = vshrl.u32 %v4379, 7
    %v4381 = vsub.s32 0, %v4380
    %v4382 = vrot.slane %v4377, %v4381
    %v4383 = vlaneseq
    %v4384 = vshrl.u32 %v4383, 7
    %v4385 = vsub.s32 1, %v4384
    %v4386 = vrot.slane %v4377, %v4385
    %v4387 = vlaneseq
    %v4388 = vshrl.u32 %v4387, 7
    %v4389 = vsub.s32 2, %v4388
    %v4390 = vrot.slane %v4377, %v4389
    %v4391 = vlaneseq
    %v4392 = vshrl.u32 %v4391, 7
    %v4393 = vsub.s32 3, %v4392
    %v4394 = vrot.slane %v4377, %v4393
    %v4455 = vunpack.c.l.b16 %v4257
    %v4456 = vunpack.c.l.b16 %v4258
    %v4457 = vunpack.c.l.b16 %v4259
    %v4458 = vunpack.c.l.b16 %v4260
    %v4459 = vunpack.c.l.b16 %v4261
    %v4460 = vunpack.c.l.b16 %v4262
    %v4461 = vunpack.c.l.b16 %v4263
    %v4462 = vunpack.c.l.b16 %v4264
    %v4463 = vunpack.c.l.b16 %v4265
    %v4464 = vunpack.c.l.b16 %v4266
    %v4465 = vunpack.c.l.b16 %v4267
    %v4466 = vunpack.c.l.b16 %v4268
    %v4467 = vunpack.c.l.b16 %v4269
    %v4468 = vunpack.c.l.b16 %v4270
    %v4469 = vunpack.c.l.b16 %v4271
    %v4470 = vunpack.c.l.b16 %v4272
    %v4471 = vunpack.c.l.b16 %v4273
    %v4472 = vunpack.c.l.b16 %v4274
    %v4473 = vunpack.c.l.b16 %v4275
    %v4474 = vunpack.c.l.b16 %v4276
    %v4475 = vunpack.c.l.b16 %v4277
    %v4476 = vunpack.c.l.b16 %v4278
    %v4477 = vunpack.c.l.b16 %v4279
    %v4478 = vunpack.c.l.b16 %v4280
    %v4479 = vunpack.c.l.b16 %v4281
    %v4480 = vunpack.c.l.b16 %v4282
    %v4481 = vunpack.c.l.b16 %v4283
    %v4482 = vunpack.c.l.b16 %v4284
    %v4483 = vunpack.c.l.b16 %v4285
    %v4484 = vunpack.c.l.b16 %v4286
    %v4485 = vunpack.c.l.b16 %v4287
    %v4486 = vunpack.c.l.b16 %v4288
    %v4487 = vunpack.c.l.b16 %v4289
    %v4488 = vunpack.c.l.b16 %v4290
    %v4489 = vunpack.c.l.b16 %v4291
    %v4490 = vunpack.c.l.b16 %v4292
    %v4491 = vunpack.c.l.b16 %v4293
    %v4492 = vunpack.c.l.b16 %v4294
    %v4493 = vunpack.c.l.b16 %v4295
    %v4494 = vunpack.c.l.b16 %v4296
    %v4495 = vunpack.c.l.b16 %v4297
    %v4496 = vunpack.c.l.b16 %v4298
    %v4497 = vunpack.c.l.b16 %v4299
    %v4498 = vunpack.c.l.b16 %v4300
    %v4499 = vunpack.c.l.b16 %v4301
    %v4500 = vunpack.c.l.b16 %v4302
    %v4501 = vunpack.c.l.b16 %v4303
    %v4502 = vunpack.c.l.b16 %v4304
    %v4503 = vunpack.c.l.b16 %v4305
    %v4504 = vunpack.c.l.b16 %v4306
    %v4505 = vunpack.c.l.b16 %v4307
    %v4506 = vunpack.c.l.b16 %v4308
    %v4507 = vunpack.c.l.b16 %v4309
    %v4508 = vunpack.c.l.b16 %v4310
    %v4509 = vunpack.c.l.b16 %v4311
    %v4510 = vunpack.c.l.b16 %v4312
    %v4511 = vrot.slane %v4456, 7
    %v4512 = vsel %vm1069, %v4511, %v4455
    %v4513 = vrot.slane %v4457, 6
    %v4514 = vsel %vm1072, %v4513, %v4512
    %v4515 = vrot.slane %v4458, 5
    %v4516 = vsel %vm1075, %v4515, %v4514
    %v4517 = vrot.slane %v4459, 4
    %v4518 = vsel %vm1078, %v4517, %v4516
    %v4519 = vrot.slane %v4460, 3
    %v4520 = vsel %vm1081, %v4519, %v4518
    %v4521 = vrot.slane %v4461, 2
    %v4522 = vsel %vm1084, %v4521, %v4520
    %v4523 = vrot.slane %v4462, 1
    %v4524 = vsel %vm1087, %v4523, %v4522
    %v4525 = vrot.slane %v4464, 7
    %v4526 = vsel %vm1069, %v4525, %v4463
    %v4527 = vrot.slane %v4465, 6
    %v4528 = vsel %vm1072, %v4527, %v4526
    %v4529 = vrot.slane %v4466, 5
    %v4530 = vsel %vm1075, %v4529, %v4528
    %v4531 = vrot.slane %v4467, 4
    %v4532 = vsel %vm1078, %v4531, %v4530
    %v4533 = vrot.slane %v4468, 3
    %v4534 = vsel %vm1081, %v4533, %v4532
    %v4535 = vrot.slane %v4469, 2
    %v4536 = vsel %vm1084, %v4535, %v4534
    %v4537 = vrot.slane %v4470, 1
    %v4538 = vsel %vm1087, %v4537, %v4536
    %v4539 = vrot.slane %v4472, 7
    %v4540 = vsel %vm1069, %v4539, %v4471
    %v4541 = vrot.slane %v4473, 6
    %v4542 = vsel %vm1072, %v4541, %v4540
    %v4543 = vrot.slane %v4474, 5
    %v4544 = vsel %vm1075, %v4543, %v4542
    %v4545 = vrot.slane %v4475, 4
    %v4546 = vsel %vm1078, %v4545, %v4544
    %v4547 = vrot.slane %v4476, 3
    %v4548 = vsel %vm1081, %v4547, %v4546
    %v4549 = vrot.slane %v4477, 2
    %v4550 = vsel %vm1084, %v4549, %v4548
    %v4551 = vrot.slane %v4478, 1
    %v4552 = vsel %vm1087, %v4551, %v4550
    %v4553 = vrot.slane %v4480, 7
    %v4554 = vsel %vm1069, %v4553, %v4479
    %v4555 = vrot.slane %v4481, 6
    %v4556 = vsel %vm1072, %v4555, %v4554
    %v4557 = vrot.slane %v4482, 5
    %v4558 = vsel %vm1075, %v4557, %v4556
    %v4559 = vrot.slane %v4483, 4
    %v4560 = vsel %vm1078, %v4559, %v4558
    %v4561 = vrot.slane %v4484, 3
    %v4562 = vsel %vm1081, %v4561, %v4560
    %v4563 = vrot.slane %v4485, 2
    %v4564 = vsel %vm1084, %v4563, %v4562
    %v4565 = vrot.slane %v4486, 1
    %v4566 = vsel %vm1087, %v4565, %v4564
    %v4567 = vrot.slane %v4488, 7
    %v4568 = vsel %vm1069, %v4567, %v4487
    %v4569 = vrot.slane %v4489, 6
    %v4570 = vsel %vm1072, %v4569, %v4568
    %v4571 = vrot.slane %v4490, 5
    %v4572 = vsel %vm1075, %v4571, %v4570
    %v4573 = vrot.slane %v4491, 4
    %v4574 = vsel %vm1078, %v4573, %v4572
    %v4575 = vrot.slane %v4492, 3
    %v4576 = vsel %vm1081, %v4575, %v4574
    %v4577 = vrot.slane %v4493, 2
    %v4578 = vsel %vm1084, %v4577, %v4576
    %v4579 = vrot.slane %v4494, 1
    %v4580 = vsel %vm1087, %v4579, %v4578
    %v4581 = vrot.slane %v4496, 7
    %v4582 = vsel %vm1069, %v4581, %v4495
    %v4583 = vrot.slane %v4497, 6
    %v4584 = vsel %vm1072, %v4583, %v4582
    %v4585 = vrot.slane %v4498, 5
    %v4586 = vsel %vm1075, %v4585, %v4584
    %v4587 = vrot.slane %v4499, 4
    %v4588 = vsel %vm1078, %v4587, %v4586
    %v4589 = vrot.slane %v4500, 3
    %v4590 = vsel %vm1081, %v4589, %v4588
    %v4591 = vrot.slane %v4501, 2
    %v4592 = vsel %vm1084, %v4591, %v4590
    %v4593 = vrot.slane %v4502, 1
    %v4594 = vsel %vm1087, %v4593, %v4592
    %v4595 = vrot.slane %v4504, 7
    %v4596 = vsel %vm1069, %v4595, %v4503
    %v4597 = vrot.slane %v4505, 6
    %v4598 = vsel %vm1072, %v4597, %v4596
    %v4599 = vrot.slane %v4506, 5
    %v4600 = vsel %vm1075, %v4599, %v4598
    %v4601 = vrot.slane %v4507, 4
    %v4602 = vsel %vm1078, %v4601, %v4600
    %v4603 = vrot.slane %v4508, 3
    %v4604 = vsel %vm1081, %v4603, %v4602
    %v4605 = vrot.slane %v4509, 2
    %v4606 = vsel %vm1084, %v4605, %v4604
    %v4607 = vrot.slane %v4510, 1
    %v4608 = vsel %vm1087, %v4607, %v4606
    %v4609 = vpack.c.b16 %v4524, %v1088
    %v4610 = vpack.c.b16 %v4552, %v4538
    %v4611 = vpack.c.b16 %v4580, %v4566
    %v4612 = vpack.c.b16 %v4608, %v4594
    %v4649 = vunpack.c.l.b16 %v4313
    %v4650 = vunpack.c.h.b16 %v4313
    %v4651 = vunpack.c.l.b16 %v4314
    %v4652 = vunpack.c.h.b16 %v4314
    %v4653 = vunpack.c.l.b16 %v4315
    %v4654 = vunpack.c.h.b16 %v4315
    %v4655 = vunpack.c.l.b16 %v4316
    %v4656 = vunpack.c.h.b16 %v4316
    %v4657 = vunpack.c.l.b16 %v4317
    %v4658 = vunpack.c.h.b16 %v4317
    %v4659 = vunpack.c.l.b16 %v4318
    %v4660 = vunpack.c.h.b16 %v4318
    %v4661 = vunpack.c.l.b16 %v4319
    %v4662 = vunpack.c.h.b16 %v4319
    %v4663 = vunpack.c.l.b16 %v4320
    %v4664 = vunpack.c.h.b16 %v4320
    %v4665 = vunpack.c.l.b16 %v4321
    %v4666 = vunpack.c.h.b16 %v4321
    %v4667 = vunpack.c.l.b16 %v4322
    %v4668 = vunpack.c.h.b16 %v4322
    %v4669 = vunpack.c.l.b16 %v4323
    %v4670 = vunpack.c.h.b16 %v4323
    %v4671 = vunpack.c.l.b16 %v4324
    %v4672 = vunpack.c.h.b16 %v4324
    %v4673 = vunpack.c.l.b16 %v4325
    %v4674 = vunpack.c.h.b16 %v4325
    %v4675 = vunpack.c.l.b16 %v4326
    %v4676 = vunpack.c.h.b16 %v4326
    %v4677 = vunpack.c.l.b16 %v4327
    %v4678 = vunpack.c.h.b16 %v4327
    %v4679 = vunpack.c.l.b16 %v4328
    %v4680 = vunpack.c.h.b16 %v4328
    %v4681 = vunpack.c.l.b16 %v4329
    %v4682 = vunpack.c.h.b16 %v4329
    %v4683 = vunpack.c.l.b16 %v4330
    %v4684 = vunpack.c.h.b16 %v4330
    %v4685 = vunpack.c.l.b16 %v4331
    %v4686 = vunpack.c.h.b16 %v4331
    %v4687 = vunpack.c.l.b16 %v4332
    %v4688 = vunpack.c.h.b16 %v4332
    %v4689 = vunpack.c.l.b16 %v4333
    %v4690 = vunpack.c.h.b16 %v4333
    %v4691 = vunpack.c.l.b16 %v4334
    %v4692 = vunpack.c.h.b16 %v4334
    %v4693 = vunpack.c.l.b16 %v4335
    %v4694 = vunpack.c.h.b16 %v4335
    %v4695 = vunpack.c.l.b16 %v4336
    %v4696 = vunpack.c.h.b16 %v4336
    %v4697 = vunpack.c.l.b16 %v4337
    %v4698 = vunpack.c.h.b16 %v4337
    %v4699 = vunpack.c.l.b16 %v4338
    %v4700 = vunpack.c.h.b16 %v4338
    %v4701 = vunpack.c.l.b16 %v4339
    %v4702 = vunpack.c.h.b16 %v4339
    %v4703 = vunpack.c.l.b16 %v4340
    %v4704 = vunpack.c.h.b16 %v4340
    %v4705 = vunpack.c.l.b16 %v4341
    %v4706 = vunpack.c.h.b16 %v4341
    %v4707 = vunpack.c.l.b16 %v4342
    %v4708 = vunpack.c.h.b16 %v4342
    %v4709 = vunpack.c.l.b16 %v4343
    %v4710 = vunpack.c.h.b16 %v4343
    %v4711 = vunpack.c.l.b16 %v4344
    %v4712 = vunpack.c.h.b16 %v4344
    %v4713 = vpack.c.b16 %v4653, %v4649
    %v4714 = vpack.c.b16 %v4654, %v4650
    %v4715 = vpack.c.b16 %v4655, %v4651
    %v4716 = vpack.c.b16 %v4656, %v4652
    %v4717 = vpack.c.b16 %v4661, %v4657
    %v4718 = vpack.c.b16 %v4662, %v4658
    %v4719 = vpack.c.b16 %v4663, %v4659
    %v4720 = vpack.c.b16 %v4664, %v4660
    %v4721 = vpack.c.b16 %v4669, %v4665
    %v4722 = vpack.c.b16 %v4670, %v4666
    %v4723 = vpack.c.b16 %v4671, %v4667
    %v4724 = vpack.c.b16 %v4672, %v4668
    %v4725 = vpack.c.b16 %v4677, %v4673
    %v4726 = vpack.c.b16 %v4678, %v4674
    %v4727 = vpack.c.b16 %v4679, %v4675
    %v4728 = vpack.c.b16 %v4680, %v4676
    %v4729 = vpack.c.b16 %v4685, %v4681
    %v4730 = vpack.c.b16 %v4686, %v4682
    %v4731 = vpack.c.b16 %v4687, %v4683
    %v4732 = vpack.c.b16 %v4688, %v4684
    %v4733 = vpack.c.b16 %v4693, %v4689
    %v4734 = vpack.c.b16 %v4694, %v4690
    %v4735 = vpack.c.b16 %v4695, %v4691
    %v4736 = vpack.c.b16 %v4696, %v4692
    %v4737 = vpack.c.b16 %v4701, %v4697
    %v4738 = vpack.c.b16 %v4702, %v4698
    %v4739 = vpack.c.b16 %v4703, %v4699
    %v4740 = vpack.c.b16 %v4704, %v4700
    %v4741 = vpack.c.b16 %v4709, %v4705
    %v4742 = vpack.c.b16 %v4710, %v4706
    %v4743 = vpack.c.b16 %v4711, %v4707
    %v4744 = vpack.c.b16 %v4712, %v4708
    %4777 = vmatprep.subr.bf16.mxu0 %v4714
    %4778 = vmatpush1.bf16.msra.mxu0 %v4713
    %4779 = vmatprep.subr.bf16.mxu0 %v4718
    %4780 = vmatpush1.bf16.msra.mxu0 %v4717
    %4781 = vmatprep.subr.bf16.mxu0 %v4722
    %4782 = vmatpush1.bf16.msra.mxu0 %v4721
    %4783 = vmatprep.subr.bf16.mxu0 %v4726
    %4784 = vmatpush1.bf16.msra.mxu0 %v4725
    %4785 = vmatprep.subr.bf16.mxu0 %v4730
    %4786 = vmatpush1.bf16.msra.mxu0 %v4729
    %4787 = vmatprep.subr.bf16.mxu0 %v4734
    %4788 = vmatpush1.bf16.msra.mxu0 %v4733
    %4789 = vmatprep.subr.bf16.mxu0 %v4738
    %4790 = vmatpush1.bf16.msra.mxu0 %v4737
    %4791 = vmatprep.subr.bf16.mxu0 %v4742
    %4792 = vmatpush1.bf16.msra.mxu0 %v4741
    %4793 = vmatprep.subr.bf16.mxu0 0
    %4794 = vmatpush1.bf16.msra.mxu0 0
    %4795 = vmatprep.subr.bf16.mxu0 0
    %4796 = vmatpush1.bf16.msra.mxu0 0
    %4797 = vmatprep.subr.bf16.mxu0 0
    %4798 = vmatpush1.bf16.msra.mxu0 0
    %4799 = vmatprep.subr.bf16.mxu0 0
    %4800 = vmatpush1.bf16.msra.mxu0 0
    %4801 = vmatprep.subr.bf16.mxu0 0
    %4802 = vmatpush1.bf16.msra.mxu0 0
    %4803 = vmatprep.subr.bf16.mxu0 0
    %4804 = vmatpush1.bf16.msra.mxu0 0
    %4805 = vmatprep.subr.bf16.mxu0 0
    %4806 = vmatpush1.bf16.msra.mxu0 0
    %4807 = vmatprep.subr.bf16.mxu0 0
    %4808 = vmatpush1.bf16.msra.mxu0 0
    %4809 = vmatprep.mubr.bf16.mxu0 0
    %4810 = vmatmul.mubr.bf16.gmra.mrb[0].mxu0 %v4609
    %v4811 = vpop.f32.mrb[0].mxu0
    %v4812 = vadd.f32 %v4382, %v4811
    %v4813 = vpop.f32.mrb[0].mxu0
    %v4814 = vadd.f32 %v4386, %v4813
    %v4815 = vpop.f32.mrb[0].mxu0
    %v4816 = vadd.f32 %v4382, %v4815
    %v4817 = vpop.f32.mrb[0].mxu0
    %v4818 = vadd.f32 %v4386, %v4817
    %4819 = vmatprep.mubr.bf16.mxu0 0
    %4820 = vmatmul.mubr.bf16.gmra.mrb[0].mxu0 %v4610
    %v4821 = vpop.f32.mrb[0].mxu0
    %v4822 = vadd.f32 %v4382, %v4821
    %v4823 = vpop.f32.mrb[0].mxu0
    %v4824 = vadd.f32 %v4386, %v4823
    %v4825 = vpop.f32.mrb[0].mxu0
    %v4826 = vadd.f32 %v4382, %v4825
    %v4827 = vpop.f32.mrb[0].mxu0
    %v4828 = vadd.f32 %v4386, %v4827
    %4829 = vmatprep.mubr.bf16.mxu0 0
    %4830 = vmatmul.mubr.bf16.gmra.mrb[0].mxu0 %v4611
    %v4831 = vpop.f32.mrb[0].mxu0
    %v4832 = vadd.f32 %v4382, %v4831
    %v4833 = vpop.f32.mrb[0].mxu0
    %v4834 = vadd.f32 %v4386, %v4833
    %v4835 = vpop.f32.mrb[0].mxu0
    %v4836 = vadd.f32 %v4382, %v4835
    %v4837 = vpop.f32.mrb[0].mxu0
    %v4838 = vadd.f32 %v4386, %v4837
    %4839 = vmatprep.mubr.bf16.mxu0 0
    %4840 = vmatmul.mubr.bf16.gmra.mrb[0].mxu0 %v4612
    %v4841 = vpop.f32.mrb[0].mxu0
    %v4842 = vadd.f32 %v4382, %v4841
    %v4843 = vpop.f32.mrb[0].mxu0
    %v4844 = vadd.f32 %v4386, %v4843
    %v4845 = vpop.f32.mrb[0].mxu0
    %v4846 = vadd.f32 %v4382, %v4845
    %v4847 = vpop.f32.mrb[0].mxu0
    %v4848 = vadd.f32 %v4386, %v4847
    %4849 = vdwg.mxu0
    %4850 = vmatprep.subr.bf16.mxu0 %v4716
    %4851 = vmatpush1.bf16.msra.mxu0 %v4715
    %4852 = vmatprep.subr.bf16.mxu0 %v4720
    %4853 = vmatpush1.bf16.msra.mxu0 %v4719
    %4854 = vmatprep.subr.bf16.mxu0 %v4724
    %4855 = vmatpush1.bf16.msra.mxu0 %v4723
    %4856 = vmatprep.subr.bf16.mxu0 %v4728
    %4857 = vmatpush1.bf16.msra.mxu0 %v4727
    %4858 = vmatprep.subr.bf16.mxu0 %v4732
    %4859 = vmatpush1.bf16.msra.mxu0 %v4731
    %4860 = vmatprep.subr.bf16.mxu0 %v4736
    %4861 = vmatpush1.bf16.msra.mxu0 %v4735
    %4862 = vmatprep.subr.bf16.mxu0 %v4740
    %4863 = vmatpush1.bf16.msra.mxu0 %v4739
    %4864 = vmatprep.subr.bf16.mxu0 %v4744
    %4865 = vmatpush1.bf16.msra.mxu0 %v4743
    %4866 = vmatprep.subr.bf16.mxu0 0
    %4867 = vmatpush1.bf16.msra.mxu0 0
    %4868 = vmatprep.subr.bf16.mxu0 0
    %4869 = vmatpush1.bf16.msra.mxu0 0
    %4870 = vmatprep.subr.bf16.mxu0 0
    %4871 = vmatpush1.bf16.msra.mxu0 0
    %4872 = vmatprep.subr.bf16.mxu0 0
    %4873 = vmatpush1.bf16.msra.mxu0 0
    %4874 = vmatprep.subr.bf16.mxu0 0
    %4875 = vmatpush1.bf16.msra.mxu0 0
    %4876 = vmatprep.subr.bf16.mxu0 0
    %4877 = vmatpush1.bf16.msra.mxu0 0
    %4878 = vmatprep.subr.bf16.mxu0 0
    %4879 = vmatpush1.bf16.msra.mxu0 0
    %4880 = vmatprep.subr.bf16.mxu0 0
    %4881 = vmatpush1.bf16.msra.mxu0 0
    %4882 = vmatprep.mubr.bf16.mxu0 0
    %4883 = vmatmul.mubr.bf16.gmra.mrb[0].mxu0 %v4609
    %v4884 = vpop.f32.mrb[0].mxu0
    %v4885 = vadd.f32 %v4390, %v4884
    %v4886 = vpop.f32.mrb[0].mxu0
    %v4887 = vadd.f32 %v4394, %v4886
    %v4888 = vpop.f32.mrb[0].mxu0
    %v4889 = vadd.f32 %v4390, %v4888
    %v4890 = vpop.f32.mrb[0].mxu0
    %v4891 = vadd.f32 %v4394, %v4890
    %4892 = vmatprep.mubr.bf16.mxu0 0
    %4893 = vmatmul.mubr.bf16.gmra.mrb[0].mxu0 %v4610
    %v4894 = vpop.f32.mrb[0].mxu0
    %v4895 = vadd.f32 %v4390, %v4894
    %v4896 = vpop.f32.mrb[0].mxu0
    %v4897 = vadd.f32 %v4394, %v4896
    %v4898 = vpop.f32.mrb[0].mxu0
    %v4899 = vadd.f32 %v4390, %v4898
    %v4900 = vpop.f32.mrb[0].mxu0
    %v4901 = vadd.f32 %v4394, %v4900
    %4902 = vmatprep.mubr.bf16.mxu0 0
    %4903 = vmatmul.mubr.bf16.gmra.mrb[0].mxu0 %v4611
    %v4904 = vpop.f32.mrb[0].mxu0
    %v4905 = vadd.f32 %v4390, %v4904
    %v4906 = vpop.f32.mrb[0].mxu0
    %v4907 = vadd.f32 %v4394, %v4906
    %v4908 = vpop.f32.mrb[0].mxu0
    %v4909 = vadd.f32 %v4390, %v4908
    %v4910 = vpop.f32.mrb[0].mxu0
    %v4911 = vadd.f32 %v4394, %v4910
    %4912 = vmatprep.mubr.bf16.mxu0 0
    %4913 = vmatmul.mubr.bf16.gmra.mrb[0].mxu0 %v4612
    %v4914 = vpop.f32.mrb[0].mxu0
    %v4915 = vadd.f32 %v4390, %v4914
    %v4916 = vpop.f32.mrb[0].mxu0
    %v4917 = vadd.f32 %v4394, %v4916
    %v4918 = vpop.f32.mrb[0].mxu0
    %v4919 = vadd.f32 %v4390, %v4918
    %v4920 = vpop.f32.mrb[0].mxu0
    %v4921 = vadd.f32 %v4394, %v4920
    %4922 = vdwg.mxu0
    %v4955 = vunpack.c.l.b16 %v4345
    %v4956 = vunpack.c.h.b16 %v4345
    %v4957 = vunpack.c.l.b16 %v4346
    %v4958 = vunpack.c.h.b16 %v4346
    %v4959 = vunpack.c.l.b16 %v4347
    %v4960 = vunpack.c.h.b16 %v4347
    %v4961 = vunpack.c.l.b16 %v4348
    %v4962 = vunpack.c.h.b16 %v4348
    %v4963 = vunpack.c.l.b16 %v4349
    %v4964 = vunpack.c.h.b16 %v4349
    %v4965 = vunpack.c.l.b16 %v4350
    %v4966 = vunpack.c.h.b16 %v4350
    %v4967 = vunpack.c.l.b16 %v4351
    %v4968 = vunpack.c.h.b16 %v4351
    %v4969 = vunpack.c.l.b16 %v4352
    %v4970 = vunpack.c.h.b16 %v4352
    %v4971 = vunpack.c.l.b16 %v4353
    %v4972 = vunpack.c.h.b16 %v4353
    %v4973 = vunpack.c.l.b16 %v4354
    %v4974 = vunpack.c.h.b16 %v4354
    %v4975 = vunpack.c.l.b16 %v4355
    %v4976 = vunpack.c.h.b16 %v4355
    %v4977 = vunpack.c.l.b16 %v4356
    %v4978 = vunpack.c.h.b16 %v4356
    %v4979 = vunpack.c.l.b16 %v4357
    %v4980 = vunpack.c.h.b16 %v4357
    %v4981 = vunpack.c.l.b16 %v4358
    %v4982 = vunpack.c.h.b16 %v4358
    %v4983 = vunpack.c.l.b16 %v4359
    %v4984 = vunpack.c.h.b16 %v4359
    %v4985 = vunpack.c.l.b16 %v4360
    %v4986 = vunpack.c.h.b16 %v4360
    %v4987 = vunpack.c.l.b16 %v4361
    %v4988 = vunpack.c.h.b16 %v4361
    %v4989 = vunpack.c.l.b16 %v4362
    %v4990 = vunpack.c.h.b16 %v4362
    %v4991 = vunpack.c.l.b16 %v4363
    %v4992 = vunpack.c.h.b16 %v4363
    %v4993 = vunpack.c.l.b16 %v4364
    %v4994 = vunpack.c.h.b16 %v4364
    %v4995 = vunpack.c.l.b16 %v4365
    %v4996 = vunpack.c.h.b16 %v4365
    %v4997 = vunpack.c.l.b16 %v4366
    %v4998 = vunpack.c.h.b16 %v4366
    %v4999 = vunpack.c.l.b16 %v4367
    %v5000 = vunpack.c.h.b16 %v4367
    %v5001 = vunpack.c.l.b16 %v4368
    %v5002 = vunpack.c.h.b16 %v4368
    %v5003 = vunpack.c.l.b16 %v4369
    %v5004 = vunpack.c.h.b16 %v4369
    %v5005 = vunpack.c.l.b16 %v4370
    %v5006 = vunpack.c.h.b16 %v4370
    %v5007 = vunpack.c.l.b16 %v4371
    %v5008 = vunpack.c.h.b16 %v4371
    %v5009 = vunpack.c.l.b16 %v4372
    %v5010 = vunpack.c.h.b16 %v4372
    %v5011 = vunpack.c.l.b16 %v4373
    %v5012 = vunpack.c.h.b16 %v4373
    %v5013 = vunpack.c.l.b16 %v4374
    %v5014 = vunpack.c.h.b16 %v4374
    %v5015 = vunpack.c.l.b16 %v4375
    %v5016 = vunpack.c.h.b16 %v4375
    %v5017 = vunpack.c.l.b16 %v4376
    %v5018 = vunpack.c.h.b16 %v4376
    %v5019 = vpack.c.b16 %v4959, %v4955
    %v5020 = vpack.c.b16 %v4960, %v4956
    %v5021 = vpack.c.b16 %v4961, %v4957
    %v5022 = vpack.c.b16 %v4962, %v4958
    %v5023 = vpack.c.b16 %v4967, %v4963
    %v5024 = vpack.c.b16 %v4968, %v4964
    %v5025 = vpack.c.b16 %v4969, %v4965
    %v5026 = vpack.c.b16 %v4970, %v4966
    %v5027 = vpack.c.b16 %v4975, %v4971
    %v5028 = vpack.c.b16 %v4976, %v4972
    %v5029 = vpack.c.b16 %v4977, %v4973
    %v5030 = vpack.c.b16 %v4978, %v4974
    %v5031 = vpack.c.b16 %v4983, %v4979
    %v5032 = vpack.c.b16 %v4984, %v4980
    %v5033 = vpack.c.b16 %v4985, %v4981
    %v5034 = vpack.c.b16 %v4986, %v4982
    %v5035 = vpack.c.b16 %v4991, %v4987
    %v5036 = vpack.c.b16 %v4992, %v4988
    %v5037 = vpack.c.b16 %v4993, %v4989
    %v5038 = vpack.c.b16 %v4994, %v4990
    %v5039 = vpack.c.b16 %v4999, %v4995
    %v5040 = vpack.c.b16 %v5000, %v4996
    %v5041 = vpack.c.b16 %v5001, %v4997
    %v5042 = vpack.c.b16 %v5002, %v4998
    %v5043 = vpack.c.b16 %v5007, %v5003
    %v5044 = vpack.c.b16 %v5008, %v5004
    %v5045 = vpack.c.b16 %v5009, %v5005
    %v5046 = vpack.c.b16 %v5010, %v5006
    %v5047 = vpack.c.b16 %v5015, %v5011
    %v5048 = vpack.c.b16 %v5016, %v5012
    %v5049 = vpack.c.b16 %v5017, %v5013
    %v5050 = vpack.c.b16 %v5018, %v5014
    %5083 = vmatprep.subr.bf16.mxu0 %v5020
    %5084 = vmatpush1.bf16.msra.mxu0 %v5019
    %5085 = vmatprep.subr.bf16.mxu0 %v5024
    %5086 = vmatpush1.bf16.msra.mxu0 %v5023
    %5087 = vmatprep.subr.bf16.mxu0 %v5028
    %5088 = vmatpush1.bf16.msra.mxu0 %v5027
    %5089 = vmatprep.subr.bf16.mxu0 %v5032
    %5090 = vmatpush1.bf16.msra.mxu0 %v5031
    %5091 = vmatprep.subr.bf16.mxu0 %v5036
    %5092 = vmatpush1.bf16.msra.mxu0 %v5035
    %5093 = vmatprep.subr.bf16.mxu0 %v5040
    %5094 = vmatpush1.bf16.msra.mxu0 %v5039
    %5095 = vmatprep.subr.bf16.mxu0 %v5044
    %5096 = vmatpush1.bf16.msra.mxu0 %v5043
    %5097 = vmatprep.subr.bf16.mxu0 %v5048
    %5098 = vmatpush1.bf16.msra.mxu0 %v5047
    %5099 = vmatprep.subr.bf16.mxu0 0
    %5100 = vmatpush1.bf16.msra.mxu0 0
    %5101 = vmatprep.subr.bf16.mxu0 0
    %5102 = vmatpush1.bf16.msra.mxu0 0
    %5103 = vmatprep.subr.bf16.mxu0 0
    %5104 = vmatpush1.bf16.msra.mxu0 0
    %5105 = vmatprep.subr.bf16.mxu0 0
    %5106 = vmatpush1.bf16.msra.mxu0 0
    %5107 = vmatprep.subr.bf16.mxu0 0
    %5108 = vmatpush1.bf16.msra.mxu0 0
    %5109 = vmatprep.subr.bf16.mxu0 0
    %5110 = vmatpush1.bf16.msra.mxu0 0
    %5111 = vmatprep.subr.bf16.mxu0 0
    %5112 = vmatpush1.bf16.msra.mxu0 0
    %5113 = vmatprep.subr.bf16.mxu0 0
    %5114 = vmatpush1.bf16.msra.mxu0 0
    %5115 = vmatprep.mubr.bf16.mxu0 0
    %5116 = vmatmul.mubr.bf16.gmra.mrb[0].mxu0 0
    %v5117 = vpop.f32.mrb[0].mxu0
    %v5118 = vadd.f32 0.0, %v5117
    %v5119 = vpop.f32.mrb[0].mxu0
    %v5120 = vadd.f32 0.0, %v5119
    %v5121 = vpop.f32.mrb[0].mxu0
    %v5122 = vpop.f32.mrb[0].mxu0
    %5123 = vdwg.mxu0
    %5124 = vmatprep.subr.bf16.mxu0 %v5022
    %5125 = vmatpush1.bf16.msra.mxu0 %v5021
    %5126 = vmatprep.subr.bf16.mxu0 %v5026
    %5127 = vmatpush1.bf16.msra.mxu0 %v5025
    %5128 = vmatprep.subr.bf16.mxu0 %v5030
    %5129 = vmatpush1.bf16.msra.mxu0 %v5029
    %5130 = vmatprep.subr.bf16.mxu0 %v5034
    %5131 = vmatpush1.bf16.msra.mxu0 %v5033
    %5132 = vmatprep.subr.bf16.mxu0 %v5038
    %5133 = vmatpush1.bf16.msra.mxu0 %v5037
    %5134 = vmatprep.subr.bf16.mxu0 %v5042
    %5135 = vmatpush1.bf16.msra.mxu0 %v5041
    %5136 = vmatprep.subr.bf16.mxu0 %v5046
    %5137 = vmatpush1.bf16.msra.mxu0 %v5045
    %5138 = vmatprep.subr.bf16.mxu0 %v5050
    %5139 = vmatpush1.bf16.msra.mxu0 %v5049
    %5140 = vmatprep.subr.bf16.mxu0 0
    %5141 = vmatpush1.bf16.msra.mxu0 0
    %5142 = vmatprep.subr.bf16.mxu0 0
    %5143 = vmatpush1.bf16.msra.mxu0 0
    %5144 = vmatprep.subr.bf16.mxu0 0
    %5145 = vmatpush1.bf16.msra.mxu0 0
    %5146 = vmatprep.subr.bf16.mxu0 0
    %5147 = vmatpush1.bf16.msra.mxu0 0
    %5148 = vmatprep.subr.bf16.mxu0 0
    %5149 = vmatpush1.bf16.msra.mxu0 0
    %5150 = vmatprep.subr.bf16.mxu0 0
    %5151 = vmatpush1.bf16.msra.mxu0 0
    %5152 = vmatprep.subr.bf16.mxu0 0
    %5153 = vmatpush1.bf16.msra.mxu0 0
    %5154 = vmatprep.subr.bf16.mxu0 0
    %5155 = vmatpush1.bf16.msra.mxu0 0
    %5156 = vmatprep.mubr.bf16.mxu0 0
    %5157 = vmatmul.mubr.bf16.gmra.mrb[0].mxu0 0
    %v5158 = vpop.f32.mrb[0].mxu0
    %v5159 = vadd.f32 0.0, %v5158
    %v5160 = vpop.f32.mrb[0].mxu0
    %v5161 = vadd.f32 0.0, %v5160
    %v5162 = vpop.f32.mrb[0].mxu0
    %v5163 = vpop.f32.mrb[0].mxu0
    %5164 = vdwg.mxu0
    %v5165 = vadd.f32 %v4812, %v5118
    %v5166 = vadd.f32 %v4814, %v5120
    %v5167 = vadd.f32 %v4885, %v5159
    %v5168 = vadd.f32 %v4887, %v5161
    %v5169 = vxor.u32 %v5165, 2147483648
    %v5170 = vmul.f32 %v5169, 1.442695
    %v5171 = vpow.pop %v5170
    %v5172 = vadd.f32 %v5171, 1.0
    %v5173 = vrcp.pop %v5172
    %v5174 = vmul.f32 1.0, %v5173
    %v5175 = vxor.u32 %v5166, 2147483648
    %v5176 = vmul.f32 %v5175, 1.442695
    %v5177 = vpow.pop %v5176
    %v5178 = vadd.f32 %v5177, 1.0
    %v5179 = vrcp.pop %v5178
    %v5180 = vmul.f32 1.0, %v5179
    %v5181 = vtanh.pop %v5167
    %v5182 = vxor.u32 %v5168, 2147483648
    %v5183 = vmul.f32 %v5182, 1.442695
    %v5184 = vpow.pop %v5183
    %v5185 = vadd.f32 %v5184, 1.0
    %v5186 = vrcp.pop %v5185
    %v5187 = vmul.f32 1.0, %v5186
    %v5188 = vmul.f32 %v5180, 0.0
    %v5189 = vmul.f32 %v5174, %v5181
    %v5190 = vadd.f32 %v5188, %v5189
    %v5191 = vtanh.pop %v5190
    %v5192 = vmul.f32 %v5187, %v5191
    %v5193 = vpack.c.bf16 %v5192, %v5192
    %5194 = vmatprep.subr.bf16.mxu0 %v5020
    %5195 = vmatpush1.bf16.msra.mxu0 %v5019
    %5196 = vmatprep.subr.bf16.mxu0 %v5024
    %5197 = vmatpush1.bf16.msra.mxu0 %v5023
    %5198 = vmatprep.subr.bf16.mxu0 %v5028
    %5199 = vmatpush1.bf16.msra.mxu0 %v5027
    %5200 = vmatprep.subr.bf16.mxu0 %v5032
    %5201 = vmatpush1.bf16.msra.mxu0 %v5031
    %5202 = vmatprep.subr.bf16.mxu0 %v5036
    %5203 = vmatpush1.bf16.msra.mxu0 %v5035
    %5204 = vmatprep.subr.bf16.mxu0 %v5040
    %5205 = vmatpush1.bf16.msra.mxu0 %v5039
    %5206 = vmatprep.subr.bf16.mxu0 %v5044
    %5207 = vmatpush1.bf16.msra.mxu0 %v5043
    %5208 = vmatprep.subr.bf16.mxu0 %v5048
    %5209 = vmatpush1.bf16.msra.mxu0 %v5047
    %5210 = vmatprep.subr.bf16.mxu0 0
    %5211 = vmatpush1.bf16.msra.mxu0 0
    %5212 = vmatprep.subr.bf16.mxu0 0
    %5213 = vmatpush1.bf16.msra.mxu0 0
    %5214 = vmatprep.subr.bf16.mxu0 0
    %5215 = vmatpush1.bf16.msra.mxu0 0
    %5216 = vmatprep.subr.bf16.mxu0 0
    %5217 = vmatpush1.bf16.msra.mxu0 0
    %5218 = vmatprep.subr.bf16.mxu0 0
    %5219 = vmatpush1.bf16.msra.mxu0 0
    %5220 = vmatprep.subr.bf16.mxu0 0
    %5221 = vmatpush1.bf16.msra.mxu0 0
    %5222 = vmatprep.subr.bf16.mxu0 0
    %5223 = vmatpush1.bf16.msra.mxu0 0
    %5224 = vmatprep.subr.bf16.mxu0 0
    %5225 = vmatpush1.bf16.msra.mxu0 0
    %5226 = vmatprep.mubr.bf16.mxu0 0
    %5227 = vmatmul.mubr.bf16.gmra.mrb[0].mxu0 %v5193
    %v5228 = vpop.f32.mrb[0].mxu0
    %v5229 = vadd.f32 0.0, %v5228
    %v5230 = vpop.f32.mrb[0].mxu0
    %v5231 = vadd.f32 0.0, %v5230
    %v5232 = vpop.f32.mrb[0].mxu0
    %v5233 = vpop.f32.mrb[0].mxu0
    %5234 = vdwg.mxu0
    %5235 = vmatprep.subr.bf16.mxu0 %v5022
    %5236 = vmatpush1.bf16.msra.mxu0 %v5021
    %5237 = vmatprep.subr.bf16.mxu0 %v5026
    %5238 = vmatpush1.bf16.msra.mxu0 %v5025
    %5239 = vmatprep.subr.bf16.mxu0 %v5030
    %5240 = vmatpush1.bf16.msra.mxu0 %v5029
    %5241 = vmatprep.subr.bf16.mxu0 %v5034
    %5242 = vmatpush1.bf16.msra.mxu0 %v5033
    %5243 = vmatprep.subr.bf16.mxu0 %v5038
    %5244 = vmatpush1.bf16.msra.mxu0 %v5037
    %5245 = vmatprep.subr.bf16.mxu0 %v5042
    %5246 = vmatpush1.bf16.msra.mxu0 %v5041
    %5247 = vmatprep.subr.bf16.mxu0 %v5046
    %5248 = vmatpush1.bf16.msra.mxu0 %v5045
    %5249 = vmatprep.subr.bf16.mxu0 %v5050
    %5250 = vmatpush1.bf16.msra.mxu0 %v5049
    %5251 = vmatprep.subr.bf16.mxu0 0
    %5252 = vmatpush1.bf16.msra.mxu0 0
    %5253 = vmatprep.subr.bf16.mxu0 0
    %5254 = vmatpush1.bf16.msra.mxu0 0
    %5255 = vmatprep.subr.bf16.mxu0 0
    %5256 = vmatpush1.bf16.msra.mxu0 0
    %5257 = vmatprep.subr.bf16.mxu0 0
    %5258 = vmatpush1.bf16.msra.mxu0 0
    %5259 = vmatprep.subr.bf16.mxu0 0
    %5260 = vmatpush1.bf16.msra.mxu0 0
    %5261 = vmatprep.subr.bf16.mxu0 0
    %5262 = vmatpush1.bf16.msra.mxu0 0
    %5263 = vmatprep.subr.bf16.mxu0 0
    %5264 = vmatpush1.bf16.msra.mxu0 0
    %5265 = vmatprep.subr.bf16.mxu0 0
    %5266 = vmatpush1.bf16.msra.mxu0 0
    %5267 = vmatprep.mubr.bf16.mxu0 0
    %5268 = vmatmul.mubr.bf16.gmra.mrb[0].mxu0 %v5193
    %v5269 = vpop.f32.mrb[0].mxu0
    %v5270 = vadd.f32 0.0, %v5269
    %v5271 = vpop.f32.mrb[0].mxu0
    %v5272 = vadd.f32 0.0, %v5271
    %v5273 = vpop.f32.mrb[0].mxu0
    %v5274 = vpop.f32.mrb[0].mxu0
    %5275 = vdwg.mxu0
    %v5276 = vadd.f32 %v4816, %v5229
    %v5277 = vadd.f32 %v4818, %v5231
    %v5278 = vadd.f32 %v4889, %v5270
    %v5279 = vadd.f32 %v4891, %v5272
    %v5280 = vxor.u32 %v5276, 2147483648
    %v5281 = vmul.f32 %v5280, 1.442695
    %v5282 = vpow.pop %v5281
    %v5283 = vadd.f32 %v5282, 1.0
    %v5284 = vrcp.pop %v5283
    %v5285 = vmul.f32 1.0, %v5284
    %v5286 = vxor.u32 %v5277, 2147483648
    %v5287 = vmul.f32 %v5286, 1.442695
    %v5288 = vpow.pop %v5287
    %v5289 = vadd.f32 %v5288, 1.0
    %v5290 = vrcp.pop %v5289
    %v5291 = vmul.f32 1.0, %v5290
    %v5292 = vtanh.pop %v5278
    %v5293 = vxor.u32 %v5279, 2147483648
    %v5294 = vmul.f32 %v5293, 1.442695
    %v5295 = vpow.pop %v5294
    %v5296 = vadd.f32 %v5295, 1.0
    %v5297 = vrcp.pop %v5296
    %v5298 = vmul.f32 1.0, %v5297
    %v5299 = vmul.f32 %v5291, %v5190
    %v5300 = vmul.f32 %v5285, %v5292
    %v5301 = vadd.f32 %v5299, %v5300
    %v5302 = vtanh.pop %v5301
    %v5303 = vmul.f32 %v5298, %v5302
    %v5304 = vpack.c.bf16 %v5303, %v5303
    %5305 = vmatprep.subr.bf16.mxu0 %v5020
    %5306 = vmatpush1.bf16.msra.mxu0 %v5019
    %5307 = vmatprep.subr.bf16.mxu0 %v5024
    %5308 = vmatpush1.bf16.msra.mxu0 %v5023
    %5309 = vmatprep.subr.bf16.mxu0 %v5028
    %5310 = vmatpush1.bf16.msra.mxu0 %v5027
    %5311 = vmatprep.subr.bf16.mxu0 %v5032
    %5312 = vmatpush1.bf16.msra.mxu0 %v5031
    %5313 = vmatprep.subr.bf16.mxu0 %v5036
    %5314 = vmatpush1.bf16.msra.mxu0 %v5035
    %5315 = vmatprep.subr.bf16.mxu0 %v5040
    %5316 = vmatpush1.bf16.msra.mxu0 %v5039
    %5317 = vmatprep.subr.bf16.mxu0 %v5044
    %5318 = vmatpush1.bf16.msra.mxu0 %v5043
    %5319 = vmatprep.subr.bf16.mxu0 %v5048
    %5320 = vmatpush1.bf16.msra.mxu0 %v5047
    %5321 = vmatprep.subr.bf16.mxu0 0
    %5322 = vmatpush1.bf16.msra.mxu0 0
    %5323 = vmatprep.subr.bf16.mxu0 0
    %5324 = vmatpush1.bf16.msra.mxu0 0
    %5325 = vmatprep.subr.bf16.mxu0 0
    %5326 = vmatpush1.bf16.msra.mxu0 0
    %5327 = vmatprep.subr.bf16.mxu0 0
    %5328 = vmatpush1.bf16.msra.mxu0 0
    %5329 = vmatprep.subr.bf16.mxu0 0
    %5330 = vmatpush1.bf16.msra.mxu0 0
    %5331 = vmatprep.subr.bf16.mxu0 0
    %5332 = vmatpush1.bf16.msra.mxu0 0
    %5333 = vmatprep.subr.bf16.mxu0 0
    %5334 = vmatpush1.bf16.msra.mxu0 0
    %5335 = vmatprep.subr.bf16.mxu0 0
    %5336 = vmatpush1.bf16.msra.mxu0 0
    %5337 = vmatprep.mubr.bf16.mxu0 0
    %5338 = vmatmul.mubr.bf16.gmra.mrb[0].mxu0 %v5304
    %v5339 = vpop.f32.mrb[0].mxu0
    %v5340 = vadd.f32 0.0, %v5339
    %v5341 = vpop.f32.mrb[0].mxu0
    %v5342 = vadd.f32 0.0, %v5341
    %v5343 = vpop.f32.mrb[0].mxu0
    %v5344 = vpop.f32.mrb[0].mxu0
    %5345 = vdwg.mxu0
    %5346 = vmatprep.subr.bf16.mxu0 %v5022
    %5347 = vmatpush1.bf16.msra.mxu0 %v5021
    %5348 = vmatprep.subr.bf16.mxu0 %v5026
    %5349 = vmatpush1.bf16.msra.mxu0 %v5025
    %5350 = vmatprep.subr.bf16.mxu0 %v5030
    %5351 = vmatpush1.bf16.msra.mxu0 %v5029
    %5352 = vmatprep.subr.bf16.mxu0 %v5034
    %5353 = vmatpush1.bf16.msra.mxu0 %v5033
    %5354 = vmatprep.subr.bf16.mxu0 %v5038
    %5355 = vmatpush1.bf16.msra.mxu0 %v5037
    %5356 = vmatprep.subr.bf16.mxu0 %v5042
    %5357 = vmatpush1.bf16.msra.mxu0 %v5041
    %5358 = vmatprep.subr.bf16.mxu0 %v5046
    %5359 = vmatpush1.bf16.msra.mxu0 %v5045
    %5360 = vmatprep.subr.bf16.mxu0 %v5050
    %5361 = vmatpush1.bf16.msra.mxu0 %v5049
    %5362 = vmatprep.subr.bf16.mxu0 0
    %5363 = vmatpush1.bf16.msra.mxu0 0
    %5364 = vmatprep.subr.bf16.mxu0 0
    %5365 = vmatpush1.bf16.msra.mxu0 0
    %5366 = vmatprep.subr.bf16.mxu0 0
    %5367 = vmatpush1.bf16.msra.mxu0 0
    %5368 = vmatprep.subr.bf16.mxu0 0
    %5369 = vmatpush1.bf16.msra.mxu0 0
    %5370 = vmatprep.subr.bf16.mxu0 0
    %5371 = vmatpush1.bf16.msra.mxu0 0
    %5372 = vmatprep.subr.bf16.mxu0 0
    %5373 = vmatpush1.bf16.msra.mxu0 0
    %5374 = vmatprep.subr.bf16.mxu0 0
    %5375 = vmatpush1.bf16.msra.mxu0 0
    %5376 = vmatprep.subr.bf16.mxu0 0
    %5377 = vmatpush1.bf16.msra.mxu0 0
    %5378 = vmatprep.mubr.bf16.mxu0 0
    %5379 = vmatmul.mubr.bf16.gmra.mrb[0].mxu0 %v5304
    %v5380 = vpop.f32.mrb[0].mxu0
    %v5381 = vadd.f32 0.0, %v5380
    %v5382 = vpop.f32.mrb[0].mxu0
    %v5383 = vadd.f32 0.0, %v5382
    %v5384 = vpop.f32.mrb[0].mxu0
    %v5385 = vpop.f32.mrb[0].mxu0
    %5386 = vdwg.mxu0
    %v5387 = vadd.f32 %v4822, %v5340
    %v5388 = vadd.f32 %v4824, %v5342
    %v5389 = vadd.f32 %v4895, %v5381
    %v5390 = vadd.f32 %v4897, %v5383
    %v5391 = vxor.u32 %v5387, 2147483648
    %v5392 = vmul.f32 %v5391, 1.442695
    %v5393 = vpow.pop %v5392
    %v5394 = vadd.f32 %v5393, 1.0
    %v5395 = vrcp.pop %v5394
    %v5396 = vmul.f32 1.0, %v5395
    %v5397 = vxor.u32 %v5388, 2147483648
    %v5398 = vmul.f32 %v5397, 1.442695
    %v5399 = vpow.pop %v5398
    %v5400 = vadd.f32 %v5399, 1.0
    %v5401 = vrcp.pop %v5400
    %v5402 = vmul.f32 1.0, %v5401
    %v5403 = vtanh.pop %v5389
    %v5404 = vxor.u32 %v5390, 2147483648
    %v5405 = vmul.f32 %v5404, 1.442695
    %v5406 = vpow.pop %v5405
    %v5407 = vadd.f32 %v5406, 1.0
    %v5408 = vrcp.pop %v5407
    %v5409 = vmul.f32 1.0, %v5408
    %v5410 = vmul.f32 %v5402, %v5301
    %v5411 = vmul.f32 %v5396, %v5403
    %v5412 = vadd.f32 %v5410, %v5411
    %v5413 = vtanh.pop %v5412
    %v5414 = vmul.f32 %v5409, %v5413
    %v5415 = vpack.c.bf16 %v5414, %v5414
    %5416 = vmatprep.subr.bf16.mxu0 %v5020
    %5417 = vmatpush1.bf16.msra.mxu0 %v5019
    %5418 = vmatprep.subr.bf16.mxu0 %v5024
    %5419 = vmatpush1.bf16.msra.mxu0 %v5023
    %5420 = vmatprep.subr.bf16.mxu0 %v5028
    %5421 = vmatpush1.bf16.msra.mxu0 %v5027
    %5422 = vmatprep.subr.bf16.mxu0 %v5032
    %5423 = vmatpush1.bf16.msra.mxu0 %v5031
    %5424 = vmatprep.subr.bf16.mxu0 %v5036
    %5425 = vmatpush1.bf16.msra.mxu0 %v5035
    %5426 = vmatprep.subr.bf16.mxu0 %v5040
    %5427 = vmatpush1.bf16.msra.mxu0 %v5039
    %5428 = vmatprep.subr.bf16.mxu0 %v5044
    %5429 = vmatpush1.bf16.msra.mxu0 %v5043
    %5430 = vmatprep.subr.bf16.mxu0 %v5048
    %5431 = vmatpush1.bf16.msra.mxu0 %v5047
    %5432 = vmatprep.subr.bf16.mxu0 0
    %5433 = vmatpush1.bf16.msra.mxu0 0
    %5434 = vmatprep.subr.bf16.mxu0 0
    %5435 = vmatpush1.bf16.msra.mxu0 0
    %5436 = vmatprep.subr.bf16.mxu0 0
    %5437 = vmatpush1.bf16.msra.mxu0 0
    %5438 = vmatprep.subr.bf16.mxu0 0
    %5439 = vmatpush1.bf16.msra.mxu0 0
    %5440 = vmatprep.subr.bf16.mxu0 0
    %5441 = vmatpush1.bf16.msra.mxu0 0
    %5442 = vmatprep.subr.bf16.mxu0 0
    %5443 = vmatpush1.bf16.msra.mxu0 0
    %5444 = vmatprep.subr.bf16.mxu0 0
    %5445 = vmatpush1.bf16.msra.mxu0 0
    %5446 = vmatprep.subr.bf16.mxu0 0
    %5447 = vmatpush1.bf16.msra.mxu0 0
    %5448 = vmatprep.mubr.bf16.mxu0 0
    %5449 = vmatmul.mubr.bf16.gmra.mrb[0].mxu0 %v5415
    %v5450 = vpop.f32.mrb[0].mxu0
    %v5451 = vadd.f32 0.0, %v5450
    %v5452 = vpop.f32.mrb[0].mxu0
    %v5453 = vadd.f32 0.0, %v5452
    %v5454 = vpop.f32.mrb[0].mxu0
    %v5455 = vpop.f32.mrb[0].mxu0
    %5456 = vdwg.mxu0
    %5457 = vmatprep.subr.bf16.mxu0 %v5022
    %5458 = vmatpush1.bf16.msra.mxu0 %v5021
    %5459 = vmatprep.subr.bf16.mxu0 %v5026
    %5460 = vmatpush1.bf16.msra.mxu0 %v5025
    %5461 = vmatprep.subr.bf16.mxu0 %v5030
    %5462 = vmatpush1.bf16.msra.mxu0 %v5029
    %5463 = vmatprep.subr.bf16.mxu0 %v5034
    %5464 = vmatpush1.bf16.msra.mxu0 %v5033
    %5465 = vmatprep.subr.bf16.mxu0 %v5038
    %5466 = vmatpush1.bf16.msra.mxu0 %v5037
    %5467 = vmatprep.subr.bf16.mxu0 %v5042
    %5468 = vmatpush1.bf16.msra.mxu0 %v5041
    %5469 = vmatprep.subr.bf16.mxu0 %v5046
    %5470 = vmatpush1.bf16.msra.mxu0 %v5045
    %5471 = vmatprep.subr.bf16.mxu0 %v5050
    %5472 = vmatpush1.bf16.msra.mxu0 %v5049
    %5473 = vmatprep.subr.bf16.mxu0 0
    %5474 = vmatpush1.bf16.msra.mxu0 0
    %5475 = vmatprep.subr.bf16.mxu0 0
    %5476 = vmatpush1.bf16.msra.mxu0 0
    %5477 = vmatprep.subr.bf16.mxu0 0
    %5478 = vmatpush1.bf16.msra.mxu0 0
    %5479 = vmatprep.subr.bf16.mxu0 0
    %5480 = vmatpush1.bf16.msra.mxu0 0
    %5481 = vmatprep.subr.bf16.mxu0 0
    %5482 = vmatpush1.bf16.msra.mxu0 0
    %5483 = vmatprep.subr.bf16.mxu0 0
    %5484 = vmatpush1.bf16.msra.mxu0 0
    %5485 = vmatprep.subr.bf16.mxu0 0
    %5486 = vmatpush1.bf16.msra.mxu0 0
    %5487 = vmatprep.subr.bf16.mxu0 0
    %5488 = vmatpush1.bf16.msra.mxu0 0
    %5489 = vmatprep.mubr.bf16.mxu0 0
    %5490 = vmatmul.mubr.bf16.gmra.mrb[0].mxu0 %v5415
    %v5491 = vpop.f32.mrb[0].mxu0
    %v5492 = vadd.f32 0.0, %v5491
    %v5493 = vpop.f32.mrb[0].mxu0
    %v5494 = vadd.f32 0.0, %v5493
    %v5495 = vpop.f32.mrb[0].mxu0
    %v5496 = vpop.f32.mrb[0].mxu0
    %5497 = vdwg.mxu0
    %v5498 = vadd.f32 %v4826, %v5451
    %v5499 = vadd.f32 %v4828, %v5453
    %v5500 = vadd.f32 %v4899, %v5492
    %v5501 = vadd.f32 %v4901, %v5494
    %v5502 = vxor.u32 %v5498, 2147483648
    %v5503 = vmul.f32 %v5502, 1.442695
    %v5504 = vpow.pop %v5503
    %v5505 = vadd.f32 %v5504, 1.0
    %v5506 = vrcp.pop %v5505
    %v5507 = vmul.f32 1.0, %v5506
    %v5508 = vxor.u32 %v5499, 2147483648
    %v5509 = vmul.f32 %v5508, 1.442695
    %v5510 = vpow.pop %v5509
    %v5511 = vadd.f32 %v5510, 1.0
    %v5512 = vrcp.pop %v5511
    %v5513 = vmul.f32 1.0, %v5512
    %v5514 = vtanh.pop %v5500
    %v5515 = vxor.u32 %v5501, 2147483648
    %v5516 = vmul.f32 %v5515, 1.442695
    %v5517 = vpow.pop %v5516
    %v5518 = vadd.f32 %v5517, 1.0
    %v5519 = vrcp.pop %v5518
    %v5520 = vmul.f32 1.0, %v5519
    %v5521 = vmul.f32 %v5513, %v5412
    %v5522 = vmul.f32 %v5507, %v5514
    %v5523 = vadd.f32 %v5521, %v5522
    %v5524 = vtanh.pop %v5523
    %v5525 = vmul.f32 %v5520, %v5524
    %v5526 = vpack.c.bf16 %v5525, %v5525
    %5527 = vmatprep.subr.bf16.mxu0 %v5020
    %5528 = vmatpush1.bf16.msra.mxu0 %v5019
    %5529 = vmatprep.subr.bf16.mxu0 %v5024
    %5530 = vmatpush1.bf16.msra.mxu0 %v5023
    %5531 = vmatprep.subr.bf16.mxu0 %v5028
    %5532 = vmatpush1.bf16.msra.mxu0 %v5027
    %5533 = vmatprep.subr.bf16.mxu0 %v5032
    %5534 = vmatpush1.bf16.msra.mxu0 %v5031
    %5535 = vmatprep.subr.bf16.mxu0 %v5036
    %5536 = vmatpush1.bf16.msra.mxu0 %v5035
    %5537 = vmatprep.subr.bf16.mxu0 %v5040
    %5538 = vmatpush1.bf16.msra.mxu0 %v5039
    %5539 = vmatprep.subr.bf16.mxu0 %v5044
    %5540 = vmatpush1.bf16.msra.mxu0 %v5043
    %5541 = vmatprep.subr.bf16.mxu0 %v5048
    %5542 = vmatpush1.bf16.msra.mxu0 %v5047
    %5543 = vmatprep.subr.bf16.mxu0 0
    %5544 = vmatpush1.bf16.msra.mxu0 0
    %5545 = vmatprep.subr.bf16.mxu0 0
    %5546 = vmatpush1.bf16.msra.mxu0 0
    %5547 = vmatprep.subr.bf16.mxu0 0
    %5548 = vmatpush1.bf16.msra.mxu0 0
    %5549 = vmatprep.subr.bf16.mxu0 0
    %5550 = vmatpush1.bf16.msra.mxu0 0
    %5551 = vmatprep.subr.bf16.mxu0 0
    %5552 = vmatpush1.bf16.msra.mxu0 0
    %5553 = vmatprep.subr.bf16.mxu0 0
    %5554 = vmatpush1.bf16.msra.mxu0 0
    %5555 = vmatprep.subr.bf16.mxu0 0
    %5556 = vmatpush1.bf16.msra.mxu0 0
    %5557 = vmatprep.subr.bf16.mxu0 0
    %5558 = vmatpush1.bf16.msra.mxu0 0
    %5559 = vmatprep.mubr.bf16.mxu0 0
    %5560 = vmatmul.mubr.bf16.gmra.mrb[0].mxu0 %v5526
    %v5561 = vpop.f32.mrb[0].mxu0
    %v5562 = vadd.f32 0.0, %v5561
    %v5563 = vpop.f32.mrb[0].mxu0
    %v5564 = vadd.f32 0.0, %v5563
    %v5565 = vpop.f32.mrb[0].mxu0
    %v5566 = vpop.f32.mrb[0].mxu0
    %5567 = vdwg.mxu0
    %5568 = vmatprep.subr.bf16.mxu0 %v5022
    %5569 = vmatpush1.bf16.msra.mxu0 %v5021
    %5570 = vmatprep.subr.bf16.mxu0 %v5026
    %5571 = vmatpush1.bf16.msra.mxu0 %v5025
    %5572 = vmatprep.subr.bf16.mxu0 %v5030
    %5573 = vmatpush1.bf16.msra.mxu0 %v5029
    %5574 = vmatprep.subr.bf16.mxu0 %v5034
    %5575 = vmatpush1.bf16.msra.mxu0 %v5033
    %5576 = vmatprep.subr.bf16.mxu0 %v5038
    %5577 = vmatpush1.bf16.msra.mxu0 %v5037
    %5578 = vmatprep.subr.bf16.mxu0 %v5042
    %5579 = vmatpush1.bf16.msra.mxu0 %v5041
    %5580 = vmatprep.subr.bf16.mxu0 %v5046
    %5581 = vmatpush1.bf16.msra.mxu0 %v5045
    %5582 = vmatprep.subr.bf16.mxu0 %v5050
    %5583 = vmatpush1.bf16.msra.mxu0 %v5049
    %5584 = vmatprep.subr.bf16.mxu0 0
    %5585 = vmatpush1.bf16.msra.mxu0 0
    %5586 = vmatprep.subr.bf16.mxu0 0
    %5587 = vmatpush1.bf16.msra.mxu0 0
    %5588 = vmatprep.subr.bf16.mxu0 0
    %5589 = vmatpush1.bf16.msra.mxu0 0
    %5590 = vmatprep.subr.bf16.mxu0 0
    %5591 = vmatpush1.bf16.msra.mxu0 0
    %5592 = vmatprep.subr.bf16.mxu0 0
    %5593 = vmatpush1.bf16.msra.mxu0 0
    %5594 = vmatprep.subr.bf16.mxu0 0
    %5595 = vmatpush1.bf16.msra.mxu0 0
    %5596 = vmatprep.subr.bf16.mxu0 0
    %5597 = vmatpush1.bf16.msra.mxu0 0
    %5598 = vmatprep.subr.bf16.mxu0 0
    %5599 = vmatpush1.bf16.msra.mxu0 0
    %5600 = vmatprep.mubr.bf16.mxu0 0
    %5601 = vmatmul.mubr.bf16.gmra.mrb[0].mxu0 %v5526
    %v5602 = vpop.f32.mrb[0].mxu0
    %v5603 = vadd.f32 0.0, %v5602
    %v5604 = vpop.f32.mrb[0].mxu0
    %v5605 = vadd.f32 0.0, %v5604
    %v5606 = vpop.f32.mrb[0].mxu0
    %v5607 = vpop.f32.mrb[0].mxu0
    %5608 = vdwg.mxu0
    %v5609 = vadd.f32 %v4832, %v5562
    %v5610 = vadd.f32 %v4834, %v5564
    %v5611 = vadd.f32 %v4905, %v5603
    %v5612 = vadd.f32 %v4907, %v5605
    %v5613 = vxor.u32 %v5609, 2147483648
    %v5614 = vmul.f32 %v5613, 1.442695
    %v5615 = vpow.pop %v5614
    %v5616 = vadd.f32 %v5615, 1.0
    %v5617 = vrcp.pop %v5616
    %v5618 = vmul.f32 1.0, %v5617
    %v5619 = vxor.u32 %v5610, 2147483648
    %v5620 = vmul.f32 %v5619, 1.442695
    %v5621 = vpow.pop %v5620
    %v5622 = vadd.f32 %v5621, 1.0
    %v5623 = vrcp.pop %v5622
    %v5624 = vmul.f32 1.0, %v5623
    %v5625 = vtanh.pop %v5611
    %v5626 = vxor.u32 %v5612, 2147483648
    %v5627 = vmul.f32 %v5626, 1.442695
    %v5628 = vpow.pop %v5627
    %v5629 = vadd.f32 %v5628, 1.0
    %v5630 = vrcp.pop %v5629
    %v5631 = vmul.f32 1.0, %v5630
    %v5632 = vmul.f32 %v5624, %v5523
    %v5633 = vmul.f32 %v5618, %v5625
    %v5634 = vadd.f32 %v5632, %v5633
    %v5635 = vtanh.pop %v5634
    %v5636 = vmul.f32 %v5631, %v5635
    %v5637 = vpack.c.bf16 %v5636, %v5636
    %5638 = vmatprep.subr.bf16.mxu0 %v5020
    %5639 = vmatpush1.bf16.msra.mxu0 %v5019
    %5640 = vmatprep.subr.bf16.mxu0 %v5024
    %5641 = vmatpush1.bf16.msra.mxu0 %v5023
    %5642 = vmatprep.subr.bf16.mxu0 %v5028
    %5643 = vmatpush1.bf16.msra.mxu0 %v5027
    %5644 = vmatprep.subr.bf16.mxu0 %v5032
    %5645 = vmatpush1.bf16.msra.mxu0 %v5031
    %5646 = vmatprep.subr.bf16.mxu0 %v5036
    %5647 = vmatpush1.bf16.msra.mxu0 %v5035
    %5648 = vmatprep.subr.bf16.mxu0 %v5040
    %5649 = vmatpush1.bf16.msra.mxu0 %v5039
    %5650 = vmatprep.subr.bf16.mxu0 %v5044
    %5651 = vmatpush1.bf16.msra.mxu0 %v5043
    %5652 = vmatprep.subr.bf16.mxu0 %v5048
    %5653 = vmatpush1.bf16.msra.mxu0 %v5047
    %5654 = vmatprep.subr.bf16.mxu0 0
    %5655 = vmatpush1.bf16.msra.mxu0 0
    %5656 = vmatprep.subr.bf16.mxu0 0
    %5657 = vmatpush1.bf16.msra.mxu0 0
    %5658 = vmatprep.subr.bf16.mxu0 0
    %5659 = vmatpush1.bf16.msra.mxu0 0
    %5660 = vmatprep.subr.bf16.mxu0 0
    %5661 = vmatpush1.bf16.msra.mxu0 0
    %5662 = vmatprep.subr.bf16.mxu0 0
    %5663 = vmatpush1.bf16.msra.mxu0 0
    %5664 = vmatprep.subr.bf16.mxu0 0
    %5665 = vmatpush1.bf16.msra.mxu0 0
    %5666 = vmatprep.subr.bf16.mxu0 0
    %5667 = vmatpush1.bf16.msra.mxu0 0
    %5668 = vmatprep.subr.bf16.mxu0 0
    %5669 = vmatpush1.bf16.msra.mxu0 0
    %5670 = vmatprep.mubr.bf16.mxu0 0
    %5671 = vmatmul.mubr.bf16.gmra.mrb[0].mxu0 %v5637
    %v5672 = vpop.f32.mrb[0].mxu0
    %v5673 = vadd.f32 0.0, %v5672
    %v5674 = vpop.f32.mrb[0].mxu0
    %v5675 = vadd.f32 0.0, %v5674
    %v5676 = vpop.f32.mrb[0].mxu0
    %v5677 = vpop.f32.mrb[0].mxu0
    %5678 = vdwg.mxu0
    %5679 = vmatprep.subr.bf16.mxu0 %v5022
    %5680 = vmatpush1.bf16.msra.mxu0 %v5021
    %5681 = vmatprep.subr.bf16.mxu0 %v5026
    %5682 = vmatpush1.bf16.msra.mxu0 %v5025
    %5683 = vmatprep.subr.bf16.mxu0 %v5030
    %5684 = vmatpush1.bf16.msra.mxu0 %v5029
    %5685 = vmatprep.subr.bf16.mxu0 %v5034
    %5686 = vmatpush1.bf16.msra.mxu0 %v5033
    %5687 = vmatprep.subr.bf16.mxu0 %v5038
    %5688 = vmatpush1.bf16.msra.mxu0 %v5037
    %5689 = vmatprep.subr.bf16.mxu0 %v5042
    %5690 = vmatpush1.bf16.msra.mxu0 %v5041
    %5691 = vmatprep.subr.bf16.mxu0 %v5046
    %5692 = vmatpush1.bf16.msra.mxu0 %v5045
    %5693 = vmatprep.subr.bf16.mxu0 %v5050
    %5694 = vmatpush1.bf16.msra.mxu0 %v5049
    %5695 = vmatprep.subr.bf16.mxu0 0
    %5696 = vmatpush1.bf16.msra.mxu0 0
    %5697 = vmatprep.subr.bf16.mxu0 0
    %5698 = vmatpush1.bf16.msra.mxu0 0
    %5699 = vmatprep.subr.bf16.mxu0 0
    %5700 = vmatpush1.bf16.msra.mxu0 0
    %5701 = vmatprep.subr.bf16.mxu0 0
    %5702 = vmatpush1.bf16.msra.mxu0 0
    %5703 = vmatprep.subr.bf16.mxu0 0
    %5704 = vmatpush1.bf16.msra.mxu0 0
    %5705 = vmatprep.subr.bf16.mxu0 0
    %5706 = vmatpush1.bf16.msra.mxu0 0
    %5707 = vmatprep.subr.bf16.mxu0 0
    %5708 = vmatpush1.bf16.msra.mxu0 0
    %5709 = vmatprep.subr.bf16.mxu0 0
    %5710 = vmatpush1.bf16.msra.mxu0 0
    %5711 = vmatprep.mubr.bf16.mxu0 0
    %5712 = vmatmul.mubr.bf16.gmra.mrb[0].mxu0 %v5637
    %v5713 = vpop.f32.mrb[0].mxu0
    %v5714 = vadd.f32 0.0, %v5713
    %v5715 = vpop.f32.mrb[0].mxu0
    %v5716 = vadd.f32 0.0, %v5715
    %v5717 = vpop.f32.mrb[0].mxu0
    %v5718 = vpop.f32.mrb[0].mxu0
    %5719 = vdwg.mxu0
    %v5720 = vadd.f32 %v4836, %v5673
    %v5721 = vadd.f32 %v4838, %v5675
    %v5722 = vadd.f32 %v4909, %v5714
    %v5723 = vadd.f32 %v4911, %v5716
    %v5724 = vxor.u32 %v5720, 2147483648
    %v5725 = vmul.f32 %v5724, 1.442695
    %v5726 = vpow.pop %v5725
    %v5727 = vadd.f32 %v5726, 1.0
    %v5728 = vrcp.pop %v5727
    %v5729 = vmul.f32 1.0, %v5728
    %v5730 = vxor.u32 %v5721, 2147483648
    %v5731 = vmul.f32 %v5730, 1.442695
    %v5732 = vpow.pop %v5731
    %v5733 = vadd.f32 %v5732, 1.0
    %v5734 = vrcp.pop %v5733
    %v5735 = vmul.f32 1.0, %v5734
    %v5736 = vtanh.pop %v5722
    %v5737 = vxor.u32 %v5723, 2147483648
    %v5738 = vmul.f32 %v5737, 1.442695
    %v5739 = vpow.pop %v5738
    %v5740 = vadd.f32 %v5739, 1.0
    %v5741 = vrcp.pop %v5740
    %v5742 = vmul.f32 1.0, %v5741
    %v5743 = vmul.f32 %v5735, %v5634
    %v5744 = vmul.f32 %v5729, %v5736
    %v5745 = vadd.f32 %v5743, %v5744
    %v5746 = vtanh.pop %v5745
    %v5747 = vmul.f32 %v5742, %v5746
    %v5748 = vpack.c.bf16 %v5747, %v5747
    %5749 = vmatprep.subr.bf16.mxu0 %v5020
    %5750 = vmatpush1.bf16.msra.mxu0 %v5019
    %5751 = vmatprep.subr.bf16.mxu0 %v5024
    %5752 = vmatpush1.bf16.msra.mxu0 %v5023
    %5753 = vmatprep.subr.bf16.mxu0 %v5028
    %5754 = vmatpush1.bf16.msra.mxu0 %v5027
    %5755 = vmatprep.subr.bf16.mxu0 %v5032
    %5756 = vmatpush1.bf16.msra.mxu0 %v5031
    %5757 = vmatprep.subr.bf16.mxu0 %v5036
    %5758 = vmatpush1.bf16.msra.mxu0 %v5035
    %5759 = vmatprep.subr.bf16.mxu0 %v5040
    %5760 = vmatpush1.bf16.msra.mxu0 %v5039
    %5761 = vmatprep.subr.bf16.mxu0 %v5044
    %5762 = vmatpush1.bf16.msra.mxu0 %v5043
    %5763 = vmatprep.subr.bf16.mxu0 %v5048
    %5764 = vmatpush1.bf16.msra.mxu0 %v5047
    %5765 = vmatprep.subr.bf16.mxu0 0
    %5766 = vmatpush1.bf16.msra.mxu0 0
    %5767 = vmatprep.subr.bf16.mxu0 0
    %5768 = vmatpush1.bf16.msra.mxu0 0
    %5769 = vmatprep.subr.bf16.mxu0 0
    %5770 = vmatpush1.bf16.msra.mxu0 0
    %5771 = vmatprep.subr.bf16.mxu0 0
    %5772 = vmatpush1.bf16.msra.mxu0 0
    %5773 = vmatprep.subr.bf16.mxu0 0
    %5774 = vmatpush1.bf16.msra.mxu0 0
    %5775 = vmatprep.subr.bf16.mxu0 0
    %5776 = vmatpush1.bf16.msra.mxu0 0
    %5777 = vmatprep.subr.bf16.mxu0 0
    %5778 = vmatpush1.bf16.msra.mxu0 0
    %5779 = vmatprep.subr.bf16.mxu0 0
    %5780 = vmatpush1.bf16.msra.mxu0 0
    %5781 = vmatprep.mubr.bf16.mxu0 0
    %5782 = vmatmul.mubr.bf16.gmra.mrb[0].mxu0 %v5748
    %v5783 = vpop.f32.mrb[0].mxu0
    %v5784 = vadd.f32 0.0, %v5783
    %v5785 = vpop.f32.mrb[0].mxu0
    %v5786 = vadd.f32 0.0, %v5785
    %v5787 = vpop.f32.mrb[0].mxu0
    %v5788 = vpop.f32.mrb[0].mxu0
    %5789 = vdwg.mxu0
    %5790 = vmatprep.subr.bf16.mxu0 %v5022
    %5791 = vmatpush1.bf16.msra.mxu0 %v5021
    %5792 = vmatprep.subr.bf16.mxu0 %v5026
    %5793 = vmatpush1.bf16.msra.mxu0 %v5025
    %5794 = vmatprep.subr.bf16.mxu0 %v5030
    %5795 = vmatpush1.bf16.msra.mxu0 %v5029
    %5796 = vmatprep.subr.bf16.mxu0 %v5034
    %5797 = vmatpush1.bf16.msra.mxu0 %v5033
    %5798 = vmatprep.subr.bf16.mxu0 %v5038
    %5799 = vmatpush1.bf16.msra.mxu0 %v5037
    %5800 = vmatprep.subr.bf16.mxu0 %v5042
    %5801 = vmatpush1.bf16.msra.mxu0 %v5041
    %5802 = vmatprep.subr.bf16.mxu0 %v5046
    %5803 = vmatpush1.bf16.msra.mxu0 %v5045
    %5804 = vmatprep.subr.bf16.mxu0 %v5050
    %5805 = vmatpush1.bf16.msra.mxu0 %v5049
    %5806 = vmatprep.subr.bf16.mxu0 0
    %5807 = vmatpush1.bf16.msra.mxu0 0
    %5808 = vmatprep.subr.bf16.mxu0 0
    %5809 = vmatpush1.bf16.msra.mxu0 0
    %5810 = vmatprep.subr.bf16.mxu0 0
    %5811 = vmatpush1.bf16.msra.mxu0 0
    %5812 = vmatprep.subr.bf16.mxu0 0
    %5813 = vmatpush1.bf16.msra.mxu0 0
    %5814 = vmatprep.subr.bf16.mxu0 0
    %5815 = vmatpush1.bf16.msra.mxu0 0
    %5816 = vmatprep.subr.bf16.mxu0 0
    %5817 = vmatpush1.bf16.msra.mxu0 0
    %5818 = vmatprep.subr.bf16.mxu0 0
    %5819 = vmatpush1.bf16.msra.mxu0 0
    %5820 = vmatprep.subr.bf16.mxu0 0
    %5821 = vmatpush1.bf16.msra.mxu0 0
    %5822 = vmatprep.mubr.bf16.mxu0 0
    %5823 = vmatmul.mubr.bf16.gmra.mrb[0].mxu0 %v5748
    %v5824 = vpop.f32.mrb[0].mxu0
    %v5825 = vadd.f32 0.0, %v5824
    %v5826 = vpop.f32.mrb[0].mxu0
    %v5827 = vadd.f32 0.0, %v5826
    %v5828 = vpop.f32.mrb[0].mxu0
    %v5829 = vpop.f32.mrb[0].mxu0
    %5830 = vdwg.mxu0
    %v5831 = vadd.f32 %v4842, %v5784
    %v5832 = vadd.f32 %v4844, %v5786
    %v5833 = vadd.f32 %v4915, %v5825
    %v5834 = vadd.f32 %v4917, %v5827
    %v5835 = vxor.u32 %v5831, 2147483648
    %v5836 = vmul.f32 %v5835, 1.442695
    %v5837 = vpow.pop %v5836
    %v5838 = vadd.f32 %v5837, 1.0
    %v5839 = vrcp.pop %v5838
    %v5840 = vmul.f32 1.0, %v5839
    %v5841 = vxor.u32 %v5832, 2147483648
    %v5842 = vmul.f32 %v5841, 1.442695
    %v5843 = vpow.pop %v5842
    %v5844 = vadd.f32 %v5843, 1.0
    %v5845 = vrcp.pop %v5844
    %v5846 = vmul.f32 1.0, %v5845
    %v5847 = vtanh.pop %v5833
    %v5848 = vxor.u32 %v5834, 2147483648
    %v5849 = vmul.f32 %v5848, 1.442695
    %v5850 = vpow.pop %v5849
    %v5851 = vadd.f32 %v5850, 1.0
    %v5852 = vrcp.pop %v5851
    %v5853 = vmul.f32 1.0, %v5852
    %v5854 = vmul.f32 %v5846, %v5745
    %v5855 = vmul.f32 %v5840, %v5847
    %v5856 = vadd.f32 %v5854, %v5855
    %v5857 = vtanh.pop %v5856
    %v5858 = vmul.f32 %v5853, %v5857
    %v5859 = vpack.c.bf16 %v5858, %v5858
    %5860 = vmatprep.subr.bf16.mxu0 %v5020
    %5861 = vmatpush1.bf16.msra.mxu0 %v5019
    %5862 = vmatprep.subr.bf16.mxu0 %v5024
    %5863 = vmatpush1.bf16.msra.mxu0 %v5023
    %5864 = vmatprep.subr.bf16.mxu0 %v5028
    %5865 = vmatpush1.bf16.msra.mxu0 %v5027
    %5866 = vmatprep.subr.bf16.mxu0 %v5032
    %5867 = vmatpush1.bf16.msra.mxu0 %v5031
    %5868 = vmatprep.subr.bf16.mxu0 %v5036
    %5869 = vmatpush1.bf16.msra.mxu0 %v5035
    %5870 = vmatprep.subr.bf16.mxu0 %v5040
    %5871 = vmatpush1.bf16.msra.mxu0 %v5039
    %5872 = vmatprep.subr.bf16.mxu0 %v5044
    %5873 = vmatpush1.bf16.msra.mxu0 %v5043
    %5874 = vmatprep.subr.bf16.mxu0 %v5048
    %5875 = vmatpush1.bf16.msra.mxu0 %v5047
    %5876 = vmatprep.subr.bf16.mxu0 0
    %5877 = vmatpush1.bf16.msra.mxu0 0
    %5878 = vmatprep.subr.bf16.mxu0 0
    %5879 = vmatpush1.bf16.msra.mxu0 0
    %5880 = vmatprep.subr.bf16.mxu0 0
    %5881 = vmatpush1.bf16.msra.mxu0 0
    %5882 = vmatprep.subr.bf16.mxu0 0
    %5883 = vmatpush1.bf16.msra.mxu0 0
    %5884 = vmatprep.subr.bf16.mxu0 0
    %5885 = vmatpush1.bf16.msra.mxu0 0
    %5886 = vmatprep.subr.bf16.mxu0 0
    %5887 = vmatpush1.bf16.msra.mxu0 0
    %5888 = vmatprep.subr.bf16.mxu0 0
    %5889 = vmatpush1.bf16.msra.mxu0 0
    %5890 = vmatprep.subr.bf16.mxu0 0
    %5891 = vmatpush1.bf16.msra.mxu0 0
    %5892 = vmatprep.mubr.bf16.mxu0 0
    %5893 = vmatmul.mubr.bf16.gmra.mrb[0].mxu0 %v5859
    %v5894 = vpop.f32.mrb[0].mxu0
    %v5895 = vadd.f32 0.0, %v5894
    %v5896 = vpop.f32.mrb[0].mxu0
    %v5897 = vadd.f32 0.0, %v5896
    %v5898 = vpop.f32.mrb[0].mxu0
    %v5899 = vpop.f32.mrb[0].mxu0
    %5900 = vdwg.mxu0
    %5901 = vmatprep.subr.bf16.mxu0 %v5022
    %5902 = vmatpush1.bf16.msra.mxu0 %v5021
    %5903 = vmatprep.subr.bf16.mxu0 %v5026
    %5904 = vmatpush1.bf16.msra.mxu0 %v5025
    %5905 = vmatprep.subr.bf16.mxu0 %v5030
    %5906 = vmatpush1.bf16.msra.mxu0 %v5029
    %5907 = vmatprep.subr.bf16.mxu0 %v5034
    %5908 = vmatpush1.bf16.msra.mxu0 %v5033
    %5909 = vmatprep.subr.bf16.mxu0 %v5038
    %5910 = vmatpush1.bf16.msra.mxu0 %v5037
    %5911 = vmatprep.subr.bf16.mxu0 %v5042
    %5912 = vmatpush1.bf16.msra.mxu0 %v5041
    %5913 = vmatprep.subr.bf16.mxu0 %v5046
    %5914 = vmatpush1.bf16.msra.mxu0 %v5045
    %5915 = vmatprep.subr.bf16.mxu0 %v5050
    %5916 = vmatpush1.bf16.msra.mxu0 %v5049
    %5917 = vmatprep.subr.bf16.mxu0 0
    %5918 = vmatpush1.bf16.msra.mxu0 0
    %5919 = vmatprep.subr.bf16.mxu0 0
    %5920 = vmatpush1.bf16.msra.mxu0 0
    %5921 = vmatprep.subr.bf16.mxu0 0
    %5922 = vmatpush1.bf16.msra.mxu0 0
    %5923 = vmatprep.subr.bf16.mxu0 0
    %5924 = vmatpush1.bf16.msra.mxu0 0
    %5925 = vmatprep.subr.bf16.mxu0 0
    %5926 = vmatpush1.bf16.msra.mxu0 0
    %5927 = vmatprep.subr.bf16.mxu0 0
    %5928 = vmatpush1.bf16.msra.mxu0 0
    %5929 = vmatprep.subr.bf16.mxu0 0
    %5930 = vmatpush1.bf16.msra.mxu0 0
    %5931 = vmatprep.subr.bf16.mxu0 0
    %5932 = vmatpush1.bf16.msra.mxu0 0
    %5933 = vmatprep.mubr.bf16.mxu0 0
    %5934 = vmatmul.mubr.bf16.gmra.mrb[0].mxu0 %v5859
    %v5935 = vpop.f32.mrb[0].mxu0
    %v5936 = vadd.f32 0.0, %v5935
    %v5937 = vpop.f32.mrb[0].mxu0
    %v5938 = vadd.f32 0.0, %v5937
    %v5939 = vpop.f32.mrb[0].mxu0
    %v5940 = vpop.f32.mrb[0].mxu0
    %5941 = vdwg.mxu0
    %v5942 = vadd.f32 %v4846, %v5895
    %v5943 = vadd.f32 %v4848, %v5897
    %v5944 = vadd.f32 %v4919, %v5936
    %v5945 = vadd.f32 %v4921, %v5938
    %v5946 = vxor.u32 %v5942, 2147483648
    %v5947 = vmul.f32 %v5946, 1.442695
    %v5948 = vpow.pop %v5947
    %v5949 = vadd.f32 %v5948, 1.0
    %v5950 = vrcp.pop %v5949
    %v5951 = vmul.f32 1.0, %v5950
    %v5952 = vxor.u32 %v5943, 2147483648
    %v5953 = vmul.f32 %v5952, 1.442695
    %v5954 = vpow.pop %v5953
    %v5955 = vadd.f32 %v5954, 1.0
    %v5956 = vrcp.pop %v5955
    %v5957 = vmul.f32 1.0, %v5956
    %v5958 = vtanh.pop %v5944
    %v5959 = vxor.u32 %v5945, 2147483648
    %v5960 = vmul.f32 %v5959, 1.442695
    %v5961 = vpow.pop %v5960
    %v5962 = vadd.f32 %v5961, 1.0
    %v5963 = vrcp.pop %v5962
    %v5964 = vmul.f32 1.0, %v5963
    %v5965 = vmul.f32 %v5957, %v5856
    %v5966 = vmul.f32 %v5951, %v5958
    %v5967 = vadd.f32 %v5965, %v5966
    %v5968 = vtanh.pop %v5967
    %v5969 = vmul.f32 %v5964, %v5968
    %v5970 = vld [vmem:[%s7] sm:$0xff]
    %v5971 = vld [vmem:[%s7 + $0x8] sm:$0xff]
    %v5972 = vld [vmem:[%s7 + $0x10] sm:$0xff]
    %v5973 = vld [vmem:[%s7 + $0x18] sm:$0xff]
    %v5974 = vld [vmem:[%s7 + $0x20] sm:$0xff]
    %v5975 = vld [vmem:[%s7 + $0x28] sm:$0xff]
    %v5976 = vld [vmem:[%s7 + $0x30] sm:$0xff]
    %v5977 = vld [vmem:[%s7 + $0x38] sm:$0xff]
    %v5978 = vld [vmem:[%s7 + $0x40] sm:$0xff]
    %v5979 = vld [vmem:[%s7 + $0x48] sm:$0xff]
    %v5980 = vld [vmem:[%s7 + $0x50] sm:$0xff]
    %v5981 = vld [vmem:[%s7 + $0x58] sm:$0xff]
    %v5982 = vld [vmem:[%s7 + $0x60] sm:$0xff]
    %v5983 = vld [vmem:[%s7 + $0x68] sm:$0xff]
    %v5984 = vld [vmem:[%s7 + $0x70] sm:$0xff]
    %v5985 = vld [vmem:[%s7 + $0x78] sm:$0xff]
    %v5986 = vld [vmem:[#allocation2] sm:$0x1]
    %v5988 = vlaneseq
    %v5989 = vshrl.u32 %v5988, 7
    %v5990 = vsub.s32 0, %v5989
    %v5991 = vrot.slane %v5986, %v5990
    %5993 = vmatprep.subr.mxu0 0.0
    %5994 = vmatpush1.msra.mxu0 %v5970
    %5995 = vmatprep.subr.mxu0 0.0
    %5996 = vmatpush1.msra.mxu0 %v5971
    %5997 = vmatprep.subr.mxu0 0.0
    %5998 = vmatpush1.msra.mxu0 %v5972
    %5999 = vmatprep.subr.mxu0 0.0
    %6000 = vmatpush1.msra.mxu0 %v5973
    %6001 = vmatprep.subr.mxu0 0.0
    %6002 = vmatpush1.msra.mxu0 %v5974
    %6003 = vmatprep.subr.mxu0 0.0
    %6004 = vmatpush1.msra.mxu0 %v5975
    %6005 = vmatprep.subr.mxu0 0.0
    %6006 = vmatpush1.msra.mxu0 %v5976
    %6007 = vmatprep.subr.mxu0 0.0
    %6008 = vmatpush1.msra.mxu0 %v5977
    %6009 = vmatprep.subr.mxu0 0.0
    %6010 = vmatpush1.msra.mxu0 %v5978
    %6011 = vmatprep.subr.mxu0 0.0
    %6012 = vmatpush1.msra.mxu0 %v5979
    %6013 = vmatprep.subr.mxu0 0.0
    %6014 = vmatpush1.msra.mxu0 %v5980
    %6015 = vmatprep.subr.mxu0 0.0
    %6016 = vmatpush1.msra.mxu0 %v5981
    %6017 = vmatprep.subr.mxu0 0.0
    %6018 = vmatpush1.msra.mxu0 %v5982
    %6019 = vmatprep.subr.mxu0 0.0
    %6020 = vmatpush1.msra.mxu0 %v5983
    %6021 = vmatprep.subr.mxu0 0.0
    %6022 = vmatpush1.msra.mxu0 %v5984
    %6023 = vmatprep.subr.mxu0 0.0
    %6024 = vmatpush1.msra.mxu0 %v5985
    %6025 = vmatprep.subr.mxu0 0.0
    %6026 = vmatpush1.msra.mxu0 0.0
    %6027 = vmatprep.subr.mxu0 0.0
    %6028 = vmatpush1.msra.mxu0 0.0
    %6029 = vmatprep.subr.mxu0 0.0
    %6030 = vmatpush1.msra.mxu0 0.0
    %6031 = vmatprep.subr.mxu0 0.0
    %6032 = vmatpush1.msra.mxu0 0.0
    %6033 = vmatprep.subr.mxu0 0.0
    %6034 = vmatpush1.msra.mxu0 0.0
    %6035 = vmatprep.subr.mxu0 0.0
    %6036 = vmatpush1.msra.mxu0 0.0
    %6037 = vmatprep.subr.mxu0 0.0
    %6038 = vmatpush1.msra.mxu0 0.0
    %6039 = vmatprep.subr.mxu0 0.0
    %6040 = vmatpush1.msra.mxu0 0.0
    %6041 = vmatprep.subr.mxu0 0.0
    %6042 = vmatpush1.msra.mxu0 0.0
    %6043 = vmatprep.subr.mxu0 0.0
    %6044 = vmatpush1.msra.mxu0 0.0
    %6045 = vmatprep.subr.mxu0 0.0
    %6046 = vmatpush1.msra.mxu0 0.0
    %6047 = vmatprep.subr.mxu0 0.0
    %6048 = vmatpush1.msra.mxu0 0.0
    %6049 = vmatprep.subr.mxu0 0.0
    %6050 = vmatpush1.msra.mxu0 0.0
    %6051 = vmatprep.subr.mxu0 0.0
    %6052 = vmatpush1.msra.mxu0 0.0
    %6053 = vmatprep.subr.mxu0 0.0
    %6054 = vmatpush1.msra.mxu0 0.0
    %6055 = vmatprep.subr.mxu0 0.0
    %6056 = vmatpush1.msra.mxu0 0.0
    %6057 = vmatprep.mubr.f32.mxu0 0.0
    %6058 = vmatmul.mubr.f32.gmra.mrb[0].mxu0 %v5969
    %v6059 = vpop.f32.mrb[0].mxu0
    %v6060 = vadd.f32 %v5991, %v6059
    %v6061 = vpop.f32.mrb[0].mxu0
    %6062 = vdwg.mxu0
    %vm6063 = vcmask 7168
    %6064 = vst.msk [vmem:[%s9] sm:$0xff] %vm6063, %v6060
    // Predicated region
    $region54: #{tpu_custom_call.1} parent=1 // pred_check
      _
    $region55: #{tpu_custom_call.1} parent=1 // pred_check_branch
      %6066 = sbr.rel (0) target = $region57
    $region56: #{tpu_custom_call.1} parent=1 // pred_region
      _
    $region57: #{tpu_custom_call.1} parent=1 // pred_fallthru
      _
    // Predicated region
    $region58: #{tpu_custom_call.1} parent=1 // pred_check
      _
    $region59: #{tpu_custom_call.1} parent=1 // pred_check_branch
      %6068 = sbr.rel (0) target = $region61
    $region60: #{tpu_custom_call.1} parent=1 // pred_region
      _
    $region61: #{tpu_custom_call.1} parent=1 // pred_fallthru
      _
    %6069 = vsyncpa [#allocation4], 1
    %6070 = vsyncpa [#allocation6], 1
    %6071 = vsyncpa [#allocation9], 1

</llo_original>
